<compile_context>
chip_gen: v6e
topology: v6e:2x2x1
jax: 0.10.0
libtpu: 0.0.40
codegen_flags: <defaults>
</compile_context>

<pallas_src>
import jax
import jax.numpy as jnp
from jax import lax
from jax.experimental import pallas as pl
from jax.experimental.pallas import tpu as pltpu

# Make the pure-JAX reference matmuls run at full f32 precision so it is a
# faithful comparison target for the fp32-precision MXU dots in the kernel.
jax.config.update("jax_default_matmul_precision", "highest")

_EPS_SQ = 1e-24  # == (torch F.normalize eps 1e-12)^2, applied to the squared sum
_PREC = jax.lax.Precision.HIGHEST  # fp32 contract precision on the MXU


def _l2_normalize(wf, ones_s):
    # Sum-of-squares over the sphere (sublane) axis on the MXU:
    # (1,S)@(S,TILE_N) rides the otherwise idle MXU instead of the XLU.
    ss = jnp.dot(ones_s, wf * wf, preferred_element_type=jnp.float32,
                 precision=_PREC)                      # (1, TILE_N)
    return wf * lax.rsqrt(jnp.maximum(ss, _EPS_SQ))


def _eval_orbital(orb_type, px, py, pz, inv_a0, ones_s):
    """Evaluate one L2-normalized orbital on (S, TILE_N) coordinate arrays.

    r and exp(-r/(2*a0)) are computed once and shared by the four
    sub-orbitals for sp3 types; sp3 sub-orbitals are accumulated into a
    running sum (only one normalized sub-orbital live at a time).
    """
    r = jnp.sqrt(px * px + py * py + pz * pz)
    e = jnp.exp(-0.5 * inv_a0 * r)

    if orb_type == "s":
        return _l2_normalize((2.0 - r * inv_a0) * e, ones_s)
    if orb_type == "px":
        return _l2_normalize(px * inv_a0 * e, ones_s)
    if orb_type == "py":
        return _l2_normalize(py * inv_a0 * e, ones_s)
    if orb_type == "pz":
        return _l2_normalize(pz * inv_a0 * e, ones_s)

    signs = {"sp30": (1.0, 1.0, 1.0),
             "sp31": (1.0, -1.0, -1.0),
             "sp32": (-1.0, 1.0, -1.0),
             "sp33": (-1.0, -1.0, 1.0)}[orb_type]
    acc = _l2_normalize((2.0 - r * inv_a0) * e, ones_s)   # r dies after this
    for sgn, p in zip(signs, (px, py, pz)):
        term = _l2_normalize(p * inv_a0 * e, ones_s)
        acc = acc + term if sgn > 0 else acc - term
    return acc * 0.5


# ---------------------------------------------------------------------------
# Fused kernel: Rodrigues rotation build, MXU sphere rotation (+ folded
# translation), orbital evaluation, MXU L2 normalization and the fused
# 2-layer MLP, per N-tile (N on the lane axis).
# ---------------------------------------------------------------------------
def _make_kernel(type1, type2):
    def kernel(inv_a0_ref, xT_ref, sph1_ref, sph2_ref, w1t_ref, b1_ref,
               w2t_ref, b2_ref, out_ref, rx_ref, ry_ref, rz_ref, wf_ref):
        inv_a0 = inv_a0_ref[0]                   # scalar (SMEM, host 1/a0)
        s_dim = sph1_ref.shape[0]
        ones_s = jnp.ones((1, s_dim), dtype=jnp.float32)

        xT = xT_ref[...]                         # (7, TILE_N), N on lanes
        theta = xT[0:1, :]                       # (1, TILE_N) sublane rows
        vx, vy, vz = xT[1:2, :], xT[2:3, :], xT[3:4, :]
        ox, oy, oz = xT[4:5, :], xT[5:6, :], xT[6:7, :]

        c = jnp.cos(theta)
        s = jnp.sin(theta)
        oc = 1.0 - c

        # Shared sub-terms of the Rodrigues matrix, all (1, TILE_N).
        ux, uy, uz = oc * vx, oc * vy, oc * vz
        mxy, myz, mxz = ux * vy, uy * vz, ux * vz
        svx, svy, svz = s * vx, s * vy, s * vz
        r00 = c + ux * vx
        r11 = c + uy * vy
        r22 = c + uz * vz
        r01 = mxy - svz
        r10 = mxy + svz
        r02 = mxz + svy
        r20 = mxz - svy
        r12 = myz - svx
        r21 = myz + svx

        # Folded atom-2 translation: t = R @ offset, per sample (1, TILE_N).
        tx = r00 * ox + r01 * oy + r02 * oz
        ty = r10 * ox + r11 * oy + r12 * oz
        tz = r20 * ox + r21 * oy + r22 * oz

        # Pack the Rodrigues rows (+ translation as a 4th row) into VMEM
        # scratch so the sphere rotation runs as one MXU matmul per
        # coordinate; the per-sample rows die here.
        rx_ref[0:1, :] = r00; rx_ref[1:2, :] = r01
        rx_ref[2:3, :] = r02; rx_ref[3:4, :] = tx
        ry_ref[0:1, :] = r10; ry_ref[1:2, :] = r11
        ry_ref[2:3, :] = r12; ry_ref[3:4, :] = ty
        rz_ref[0:1, :] = r20; rz_ref[1:2, :] = r21
        rz_ref[2:3, :] = r22; rz_ref[3:4, :] = tz

        sph1 = sph1_ref[...]                     # (S, 4), last column = 0
        sph2 = sph2_ref[...]                     # (S, 4), last column = 1

        # ---- atom 1: p1 = R @ s on the MXU; wf1 is finished (and parked in
        # the wf scratch) before any atom-2 coordinate exists (liveness). ----
        p1x = jnp.dot(sph1, rx_ref[...], preferred_element_type=jnp.float32,
                      precision=_PREC)
        p1y = jnp.dot(sph1, ry_ref[...], preferred_element_type=jnp.float32,
                      precision=_PREC)
        p1z = jnp.dot(sph1, rz_ref[...], preferred_element_type=jnp.float32,
                      precision=_PREC)
        wf_ref[0:s_dim, :] = _eval_orbital(type1, p1x, p1y, p1z, inv_a0, ones_s)

        # ---- atom 2: p2 = R @ (s + o) = R @ s + t via the augmented
        # (S,4)@(4,TILE_N) dot (reuses the idle MXU, p1 is already dead). ----
        p2x = jnp.dot(sph2, rx_ref[...], preferred_element_type=jnp.float32,
                      precision=_PREC)
        p2y = jnp.dot(sph2, ry_ref[...], preferred_element_type=jnp.float32,
                      precision=_PREC)
        p2z = jnp.dot(sph2, rz_ref[...], preferred_element_type=jnp.float32,
                      precision=_PREC)
        wf_ref[s_dim:2 * s_dim, :] = _eval_orbital(type2, p2x, p2y, p2z,
                                                   inv_a0, ones_s)

        # wf2ene MLP, fused W1: (H,2S)@(2S,TILE_N) then (1,H)@(H,TILE_N).
        h = (jnp.dot(w1t_ref[...], wf_ref[...],
                     preferred_element_type=jnp.float32, precision=_PREC)
             + b1_ref[...])                      # (H, TILE_N)
        h = jnp.maximum(h, 0.0)
        out_ref[...] = (jnp.dot(w2t_ref[...], h,
                                preferred_element_type=jnp.float32,
                                precision=_PREC)
                        + b2_ref[...])           # (1, TILE_N), lane-dense store

    return kernel


def _round_up(v, m):
    return ((v + m - 1) // m) * m


def _pick_tile_n(n, tile_n):
    """Lane-tile width.  Never collapse to a single grid step when N spans
    more than one 128-lane tile, so v7x's two TensorCores both get work via
    the "parallel" grid axis (single-TC chips are unaffected)."""
    n128 = _round_up(n, 128)
    tile = max(128, min(_round_up(tile_n, 128), n128))
    if n128 > 128 and tile >= n128:
        tile = _round_up((n128 + 1) // 2, 128)
    return tile


def orbital_potential_forward(x, sphere, params, *, type1="s", type2="px",
                              tile_n=512):
    """x: (1, N, 7) float32 -> energy (N, 1) (torch module semantics)."""
    assert x.shape[0] == 1, "torch module semantics require batch == 1"
    n = x.shape[1]
    if n == 0:
        return jnp.zeros((x.shape[0], 0, 1), dtype=jnp.float32)

    s = sphere.shape[0]
    h = params["w1"].shape[1]

    tile = _pick_tile_n(n, tile_n)
    n_pad = _round_up(n, tile)
    num_tiles = n_pad // tile

    # x transposed to (7, N_pad): theta / axis / offset become dense sublane
    # rows; padded lanes are zeros (identity rotation -> finite math, sliced
    # off at the end).
    xT = jnp.pad(x[0].astype(jnp.float32).T, ((0, 0), (0, n_pad - n)))

    sphere = sphere.astype(jnp.float32)
    sph1 = jnp.concatenate([sphere, jnp.zeros((s, 1), jnp.float32)], axis=1)  # (S,4)
    sph2 = jnp.concatenate([sphere, jnp.ones((s, 1), jnp.float32)], axis=1)   # (S,4)

    w1t = params["w1"].astype(jnp.float32).T             # (H, 2S) (fused W1)
    b1 = params["b1"].astype(jnp.float32).reshape(h, 1)  # (H, 1)
    w2t = params["w2"].astype(jnp.float32).T             # (1, H)
    b2 = params["b2"].astype(jnp.float32).reshape(1, 1)  # (1, 1)
    inv_a0 = (1.0 / params["a0"].astype(jnp.float32)).reshape(1)  # host-side 1/a0

    kernel = _make_kernel(type1, type2)

    const = lambda i, inv_a0_ref: (0, 0)     # operands resident across the grid
    tiled = lambda i, inv_a0_ref: (0, i)     # operands tiled along lanes (N)

    out = pl.pallas_call(
        kernel,
        out_shape=jax.ShapeDtypeStruct((1, n_pad), jnp.float32),
        grid_spec=pltpu.PrefetchScalarGridSpec(
            num_scalar_prefetch=1,
            grid=(num_tiles,),
            in_specs=[
                pl.BlockSpec((7, tile), tiled),    # x, transposed
                pl.BlockSpec((s, 4), const),       # sphere (atom-1, col4=0)
                pl.BlockSpec((s, 4), const),       # sphere (atom-2, col4=1)
                pl.BlockSpec((h, 2 * s), const),   # W1.T fused (H, 2S)
                pl.BlockSpec((h, 1), const),       # b1
                pl.BlockSpec((1, h), const),       # W2.T
                pl.BlockSpec((1, 1), const),       # b2
            ],
            out_specs=pl.BlockSpec((1, tile), tiled),
            scratch_shapes=[
                pltpu.VMEM((4, tile), jnp.float32),      # R row x (+ t_x)
                pltpu.VMEM((4, tile), jnp.float32),      # R row y (+ t_y)
                pltpu.VMEM((4, tile), jnp.float32),      # R row z (+ t_z)
                pltpu.VMEM((2 * s, tile), jnp.float32),  # [wf1; wf2]
            ],
        ),
        compiler_params=pltpu.CompilerParams(
            dimension_semantics=("parallel",),
            vmem_limit_bytes=32 * 1024 * 1024,
        ),
    )(inv_a0, xT, sph1, sph2, w1t, b1, w2t, b2)

    return out[0, :n].reshape(n, 1)


# ---------------------------------------------------------------------------
# Pure-JAX reference (mirrors the torch forward, division-based normalize).
# ---------------------------------------------------------------------------
def reference_forward(x, sphere, params, *, type1="s", type2="px"):
    x = x[0]
    a0 = params["a0"][0]

    def l2norm(wf):
        nrm = jnp.sqrt(jnp.sum(wf * wf, axis=1, keepdims=True))
        return wf / jnp.maximum(nrm, 1e-12)

    def orb(name, pos):
        px, py, pz = pos[..., 0], pos[..., 1], pos[..., 2]
        r = jnp.sqrt(px ** 2 + py ** 2 + pz ** 2)
        e = jnp.exp(-r / a0 / 2.0)
        base = {
            "s": lambda: l2norm((2.0 - r / a0) * e),
            "px": lambda: l2norm(px / a0 * e),
            "py": lambda: l2norm(py / a0 * e),
            "pz": lambda: l2norm(pz / a0 * e),
        }
        if name in base:
            return base[name]()
        ws, wx, wy, wz = base["s"](), base["px"](), base["py"](), base["pz"]()
        return {
            "sp30": (ws + wx + wy + wz) / 2.0,
            "sp31": (ws + wx - wy - wz) / 2.0,
            "sp32": (ws - wx + wy - wz) / 2.0,
            "sp33": (ws - wx - wy + wz) / 2.0,
        }[name]

    theta, vx, vy, vz = x[:, 0], x[:, 1], x[:, 2], x[:, 3]
    c, s = jnp.cos(theta), jnp.sin(theta)
    oc = 1.0 - c
    R = jnp.stack([
        jnp.stack([c + oc * vx * vx, oc * vx * vy - vz * s, oc * vx * vz + vy * s], -1),
        jnp.stack([oc * vx * vy + vz * s, c + oc * vy * vy, oc * vy * vz - vx * s], -1),
        jnp.stack([oc * vx * vz - vy * s, oc * vy * vz + vx * s, c + oc * vz * vz], -1),
    ], axis=1)                                           # (N, 3, 3)

    a1 = jnp.einsum("ijk,mk->imj", R, sphere)            # (N, S, 3)
    a2_in = sphere[None, :, :] + x[:, None, 4:7]
    a2 = jnp.einsum("ijk,imk->imj", R, a2_in)            # (N, S, 3)

    wf1 = orb(type1, a1)
    wf2 = orb(type2, a2)
    g = jnp.concatenate([wf1, wf2], axis=1)              # (N, 2S)
    hid = jnp.maximum(g @ params["w1"] + params["b1"], 0.0)
    return hid @ params["w2"] + params["b2"]             # (N, 1)


if __name__ == "__main__":
    S, H = 16, 20
    key = jax.random.PRNGKey(0)
    k1, k2, k5, k6, k7 = jax.random.split(key, 5)

    # deterministic sphere points on the unit sphere
    sph = jax.random.normal(k1, (S, 3), dtype=jnp.float32)
    sph = sph / jnp.linalg.norm(sph, axis=1, keepdims=True)

    # deterministic parameters (shapes from the module __init__: Linear(2S,20), Linear(20,1))
    params = {
        "a0": jnp.array([6.7], dtype=jnp.float32),
        "w1": jax.random.normal(k5, (2 * S, H), dtype=jnp.float32) * 0.1,
        "b1": jax.random.normal(k6, (H,), dtype=jnp.float32) * 0.01,
        "w2": jax.random.normal(k7, (H, 1), dtype=jnp.float32) * 0.1,
        "b2": jnp.zeros((1,), dtype=jnp.float32),
    }

    def make_x(n, kk):
        ka, kb, kc = jax.random.split(kk, 3)
        theta = jax.random.uniform(ka, (n, 1), dtype=jnp.float32) * jnp.pi
        axis = jax.random.normal(kb, (n, 3), dtype=jnp.float32)
        axis = axis / jnp.linalg.norm(axis, axis=1, keepdims=True)
        offset = jax.random.normal(kc, (n, 3), dtype=jnp.float32) * 0.5
        return jnp.concatenate([theta, axis, offset], axis=1)[None]   # (1, N, 7)

    # N=200 cases: tile picker splits into two 128-lane tiles (v7x dual-TC);
    # N=1100 case: keeps the wide 512-lane tile and a 3-step grid.
    cases = [("s", "px", 200), ("sp30", "pz", 200), ("px", "py", 1100)]
    for i, (t1, t2, n) in enumerate(cases):
        x = make_x(n, jax.random.fold_in(k2, i))
        energy = orbital_potential_forward(x, sph, params, type1=t1, type2=t2)
        energy = jax.block_until_ready(energy)
        ref = reference_forward(x, sph, params, type1=t1, type2=t2)
        assert energy.shape == (n, 1)
        err = float(jnp.max(jnp.abs(energy - ref)))
        assert jnp.allclose(energy, ref, rtol=1e-4, atol=1e-4), (
            f"mismatch for ({t1},{t2},N={n}): max abs err {err}")

    print("KERNEL_OK")
</pallas_src>

<mosaic_0001>
module attributes {stable_mosaic.version = 11 : i64} {
  func.func @kernel(%arg0: i32, %arg1: memref<1xf32, #tpu.memory_space<smem>>, %arg2: memref<7x128xf32, #tpu.memory_space<vmem>>, %arg3: memref<16x4xf32, #tpu.memory_space<vmem>>, %arg4: memref<16x4xf32, #tpu.memory_space<vmem>>, %arg5: memref<20x32xf32, #tpu.memory_space<vmem>>, %arg6: memref<20x1xf32, #tpu.memory_space<vmem>>, %arg7: memref<1x20xf32, #tpu.memory_space<vmem>>, %arg8: memref<1x1xf32, #tpu.memory_space<vmem>>, %arg9: memref<1x128xf32, #tpu.memory_space<vmem>>, %arg10: memref<4x128xf32, #tpu.memory_space<vmem>>, %arg11: memref<4x128xf32, #tpu.memory_space<vmem>>, %arg12: memref<4x128xf32, #tpu.memory_space<vmem>>, %arg13: memref<32x128xf32, #tpu.memory_space<vmem>>) attributes {dimension_semantics = [#tpu.dimension_semantics<parallel>], iteration_bounds = array<i64: 2>, scalar_prefetch = 1 : i64, scratch_operands = 4 : i64, tpu.core_type = #tpu.core_type<tc>, window_params = [{transform_indices = @transform_0, window_bounds = array<i64: 7, 128>}, {pipeline_mode = #tpu.pipeline_mode<synchronous>, transform_indices = @transform_1, window_bounds = array<i64: 16, 4>}, {pipeline_mode = #tpu.pipeline_mode<synchronous>, transform_indices = @transform_2, window_bounds = array<i64: 16, 4>}, {pipeline_mode = #tpu.pipeline_mode<synchronous>, transform_indices = @transform_3, window_bounds = array<i64: 20, 32>}, {pipeline_mode = #tpu.pipeline_mode<synchronous>, transform_indices = @transform_4, window_bounds = array<i64: 20, 1>}, {pipeline_mode = #tpu.pipeline_mode<synchronous>, transform_indices = @transform_5, window_bounds = array<i64: 1, 20>}, {pipeline_mode = #tpu.pipeline_mode<synchronous>, transform_indices = @transform_6, window_bounds = array<i64: 1, 1>}, {transform_indices = @transform_7, window_bounds = array<i64: 1, 128>}]} {
    %c0 = arith.constant 0 : index
    %0 = memref.load %arg1[%c0] : memref<1xf32, #tpu.memory_space<smem>>
    %cst = arith.constant 1.000000e+00 : f32
    %1 = vector.broadcast %cst : f32 to vector<1x16xf32>
    %c0_0 = arith.constant 0 : index
    %c0_1 = arith.constant 0 : index
    %2 = vector.load %arg2[%c0_0, %c0_1] : memref<7x128xf32, #tpu.memory_space<vmem>>, vector<7x128xf32>
    %3 = vector.extract_strided_slice %2 {offsets = [0, 0], sizes = [1, 128], strides = [1, 1]} : vector<7x128xf32> to vector<1x128xf32>
    %4 = vector.extract_strided_slice %2 {offsets = [1, 0], sizes = [1, 128], strides = [1, 1]} : vector<7x128xf32> to vector<1x128xf32>
    %5 = vector.extract_strided_slice %2 {offsets = [2, 0], sizes = [1, 128], strides = [1, 1]} : vector<7x128xf32> to vector<1x128xf32>
    %6 = vector.extract_strided_slice %2 {offsets = [3, 0], sizes = [1, 128], strides = [1, 1]} : vector<7x128xf32> to vector<1x128xf32>
    %7 = vector.extract_strided_slice %2 {offsets = [4, 0], sizes = [1, 128], strides = [1, 1]} : vector<7x128xf32> to vector<1x128xf32>
    %8 = vector.extract_strided_slice %2 {offsets = [5, 0], sizes = [1, 128], strides = [1, 1]} : vector<7x128xf32> to vector<1x128xf32>
    %9 = vector.extract_strided_slice %2 {offsets = [6, 0], sizes = [1, 128], strides = [1, 1]} : vector<7x128xf32> to vector<1x128xf32>
    %10 = math.cos %3 : vector<1x128xf32>
    %11 = math.sin %3 : vector<1x128xf32>
    %cst_2 = arith.constant 1.000000e+00 : f32
    %12 = vector.broadcast %cst_2 : f32 to vector<1x128xf32>
    %13 = arith.subf %12, %10 : vector<1x128xf32>
    %14 = arith.mulf %13, %4 : vector<1x128xf32>
    %15 = arith.mulf %13, %5 : vector<1x128xf32>
    %16 = arith.mulf %13, %6 : vector<1x128xf32>
    %17 = arith.mulf %14, %5 : vector<1x128xf32>
    %18 = arith.mulf %15, %6 : vector<1x128xf32>
    %19 = arith.mulf %14, %6 : vector<1x128xf32>
    %20 = arith.mulf %11, %4 : vector<1x128xf32>
    %21 = arith.mulf %11, %5 : vector<1x128xf32>
    %22 = arith.mulf %11, %6 : vector<1x128xf32>
    %23 = arith.mulf %14, %4 : vector<1x128xf32>
    %24 = arith.addf %10, %23 : vector<1x128xf32>
    %25 = arith.mulf %15, %5 : vector<1x128xf32>
    %26 = arith.addf %10, %25 : vector<1x128xf32>
    %27 = arith.mulf %16, %6 : vector<1x128xf32>
    %28 = arith.addf %10, %27 : vector<1x128xf32>
    %29 = arith.subf %17, %22 : vector<1x128xf32>
    %30 = arith.addf %17, %22 : vector<1x128xf32>
    %31 = arith.addf %19, %21 : vector<1x128xf32>
    %32 = arith.subf %19, %21 : vector<1x128xf32>
    %33 = arith.subf %18, %20 : vector<1x128xf32>
    %34 = arith.addf %18, %20 : vector<1x128xf32>
    %35 = arith.mulf %24, %7 : vector<1x128xf32>
    %36 = arith.mulf %29, %8 : vector<1x128xf32>
    %37 = arith.addf %35, %36 : vector<1x128xf32>
    %38 = arith.mulf %31, %9 : vector<1x128xf32>
    %39 = arith.addf %37, %38 : vector<1x128xf32>
    %40 = arith.mulf %30, %7 : vector<1x128xf32>
    %41 = arith.mulf %26, %8 : vector<1x128xf32>
    %42 = arith.addf %40, %41 : vector<1x128xf32>
    %43 = arith.mulf %33, %9 : vector<1x128xf32>
    %44 = arith.addf %42, %43 : vector<1x128xf32>
    %45 = arith.mulf %32, %7 : vector<1x128xf32>
    %46 = arith.mulf %34, %8 : vector<1x128xf32>
    %47 = arith.addf %45, %46 : vector<1x128xf32>
    %48 = arith.mulf %28, %9 : vector<1x128xf32>
    %49 = arith.addf %47, %48 : vector<1x128xf32>
    %c0_3 = arith.constant 0 : index
    %c0_4 = arith.constant 0 : index
    %50 = vector.load %arg10[%c0_3, %c0_4] : memref<4x128xf32, #tpu.memory_space<vmem>>, vector<1x128xf32>
    tpu.vector_store %arg10[%c0_3, %c0_4], %24 {strides = array<i32>} : memref<4x128xf32, #tpu.memory_space<vmem>>, vector<1x128xf32>,
    %c1 = arith.constant 1 : index
    %c0_5 = arith.constant 0 : index
    %51 = vector.load %arg10[%c1, %c0_5] : memref<4x128xf32, #tpu.memory_space<vmem>>, vector<1x128xf32>
    tpu.vector_store %arg10[%c1, %c0_5], %29 {strides = array<i32>} : memref<4x128xf32, #tpu.memory_space<vmem>>, vector<1x128xf32>,
    %c2 = arith.constant 2 : index
    %c0_6 = arith.constant 0 : index
    %52 = vector.load %arg10[%c2, %c0_6] : memref<4x128xf32, #tpu.memory_space<vmem>>, vector<1x128xf32>
    tpu.vector_store %arg10[%c2, %c0_6], %31 {strides = array<i32>} : memref<4x128xf32, #tpu.memory_space<vmem>>, vector<1x128xf32>,
    %c3 = arith.constant 3 : index
    %c0_7 = arith.constant 0 : index
    %53 = vector.load %arg10[%c3, %c0_7] : memref<4x128xf32, #tpu.memory_space<vmem>>, vector<1x128xf32>
    tpu.vector_store %arg10[%c3, %c0_7], %39 {strides = array<i32>} : memref<4x128xf32, #tpu.memory_space<vmem>>, vector<1x128xf32>,
    %c0_8 = arith.constant 0 : index
    %c0_9 = arith.constant 0 : index
    %54 = vector.load %arg11[%c0_8, %c0_9] : memref<4x128xf32, #tpu.memory_space<vmem>>, vector<1x128xf32>
    tpu.vector_store %arg11[%c0_8, %c0_9], %30 {strides = array<i32>} : memref<4x128xf32, #tpu.memory_space<vmem>>, vector<1x128xf32>,
    %c1_10 = arith.constant 1 : index
    %c0_11 = arith.constant 0 : index
    %55 = vector.load %arg11[%c1_10, %c0_11] : memref<4x128xf32, #tpu.memory_space<vmem>>, vector<1x128xf32>
    tpu.vector_store %arg11[%c1_10, %c0_11], %26 {strides = array<i32>} : memref<4x128xf32, #tpu.memory_space<vmem>>, vector<1x128xf32>,
    %c2_12 = arith.constant 2 : index
    %c0_13 = arith.constant 0 : index
    %56 = vector.load %arg11[%c2_12, %c0_13] : memref<4x128xf32, #tpu.memory_space<vmem>>, vector<1x128xf32>
    tpu.vector_store %arg11[%c2_12, %c0_13], %33 {strides = array<i32>} : memref<4x128xf32, #tpu.memory_space<vmem>>, vector<1x128xf32>,
    %c3_14 = arith.constant 3 : index
    %c0_15 = arith.constant 0 : index
    %57 = vector.load %arg11[%c3_14, %c0_15] : memref<4x128xf32, #tpu.memory_space<vmem>>, vector<1x128xf32>
    tpu.vector_store %arg11[%c3_14, %c0_15], %44 {strides = array<i32>} : memref<4x128xf32, #tpu.memory_space<vmem>>, vector<1x128xf32>,
    %c0_16 = arith.constant 0 : index
    %c0_17 = arith.constant 0 : index
    %58 = vector.load %arg12[%c0_16, %c0_17] : memref<4x128xf32, #tpu.memory_space<vmem>>, vector<1x128xf32>
    tpu.vector_store %arg12[%c0_16, %c0_17], %32 {strides = array<i32>} : memref<4x128xf32, #tpu.memory_space<vmem>>, vector<1x128xf32>,
    %c1_18 = arith.constant 1 : index
    %c0_19 = arith.constant 0 : index
    %59 = vector.load %arg12[%c1_18, %c0_19] : memref<4x128xf32, #tpu.memory_space<vmem>>, vector<1x128xf32>
    tpu.vector_store %arg12[%c1_18, %c0_19], %34 {strides = array<i32>} : memref<4x128xf32, #tpu.memory_space<vmem>>, vector<1x128xf32>,
    %c2_20 = arith.constant 2 : index
    %c0_21 = arith.constant 0 : index
    %60 = vector.load %arg12[%c2_20, %c0_21] : memref<4x128xf32, #tpu.memory_space<vmem>>, vector<1x128xf32>
    tpu.vector_store %arg12[%c2_20, %c0_21], %28 {strides = array<i32>} : memref<4x128xf32, #tpu.memory_space<vmem>>, vector<1x128xf32>,
    %c3_22 = arith.constant 3 : index
    %c0_23 = arith.constant 0 : index
    %61 = vector.load %arg12[%c3_22, %c0_23] : memref<4x128xf32, #tpu.memory_space<vmem>>, vector<1x128xf32>
    tpu.vector_store %arg12[%c3_22, %c0_23], %49 {strides = array<i32>} : memref<4x128xf32, #tpu.memory_space<vmem>>, vector<1x128xf32>,
    %c0_24 = arith.constant 0 : index
    %c0_25 = arith.constant 0 : index
    %62 = vector.load %arg3[%c0_24, %c0_25] : memref<16x4xf32, #tpu.memory_space<vmem>>, vector<16x4xf32>
    %c0_26 = arith.constant 0 : index
    %c0_27 = arith.constant 0 : index
    %63 = vector.load %arg4[%c0_26, %c0_27] : memref<16x4xf32, #tpu.memory_space<vmem>>, vector<16x4xf32>
    %c0_28 = arith.constant 0 : index
    %c0_29 = arith.constant 0 : index
    %64 = vector.load %arg10[%c0_28, %c0_29] : memref<4x128xf32, #tpu.memory_space<vmem>>, vector<4x128xf32>
    %cst_30 = arith.constant dense<0.000000e+00> : vector<16x128xf32>
    %65 = tpu.matmul %62, %64, %cst_30 {dimension_numbers = #tpu.dot_dimension_numbers<[1], [0], [0], [1], [0, 0, 1, 1], [], []>, precision = #tpu.contract_precision<fp32>} : vector<16x4xf32>, vector<4x128xf32>, vector<16x128xf32> -> vector<16x128xf32>
    %c0_31 = arith.constant 0 : index
    %c0_32 = arith.constant 0 : index
    %66 = vector.load %arg11[%c0_31, %c0_32] : memref<4x128xf32, #tpu.memory_space<vmem>>, vector<4x128xf32>
    %cst_33 = arith.constant dense<0.000000e+00> : vector<16x128xf32>
    %67 = tpu.matmul %62, %66, %cst_33 {dimension_numbers = #tpu.dot_dimension_numbers<[1], [0], [0], [1], [0, 0, 1, 1], [], []>, precision = #tpu.contract_precision<fp32>} : vector<16x4xf32>, vector<4x128xf32>, vector<16x128xf32> -> vector<16x128xf32>
    %c0_34 = arith.constant 0 : index
    %c0_35 = arith.constant 0 : index
    %68 = vector.load %arg12[%c0_34, %c0_35] : memref<4x128xf32, #tpu.memory_space<vmem>>, vector<4x128xf32>
    %cst_36 = arith.constant dense<0.000000e+00> : vector<16x128xf32>
    %69 = tpu.matmul %62, %68, %cst_36 {dimension_numbers = #tpu.dot_dimension_numbers<[1], [0], [0], [1], [0, 0, 1, 1], [], []>, precision = #tpu.contract_precision<fp32>} : vector<16x4xf32>, vector<4x128xf32>, vector<16x128xf32> -> vector<16x128xf32>
    %70 = arith.mulf %65, %65 : vector<16x128xf32>
    %71 = arith.mulf %67, %67 : vector<16x128xf32>
    %72 = arith.addf %70, %71 : vector<16x128xf32>
    %73 = arith.mulf %69, %69 : vector<16x128xf32>
    %74 = arith.addf %72, %73 : vector<16x128xf32>
    %75 = math.sqrt %74 : vector<16x128xf32>
    %cst_37 = arith.constant -5.000000e-01 : f32
    %76 = arith.mulf %cst_37, %0 : f32
    %77 = vector.broadcast %76 : f32 to vector<16x128xf32>
    %78 = arith.mulf %77, %75 : vector<16x128xf32>
    %79 = math.exp %78 : vector<16x128xf32>
    %80 = vector.broadcast %0 : f32 to vector<16x128xf32>
    %81 = arith.mulf %75, %80 : vector<16x128xf32>
    %cst_38 = arith.constant 2.000000e+00 : f32
    %82 = vector.broadcast %cst_38 : f32 to vector<16x128xf32>
    %83 = arith.subf %82, %81 : vector<16x128xf32>
    %84 = arith.mulf %83, %79 : vector<16x128xf32>
    %85 = arith.mulf %84, %84 : vector<16x128xf32>
    %cst_39 = arith.constant dense<0.000000e+00> : vector<1x128xf32>
    %86 = tpu.matmul %1, %85, %cst_39 {dimension_numbers = #tpu.dot_dimension_numbers<[1], [0], [0], [1], [0, 0, 1, 1], [], []>, precision = #tpu.contract_precision<fp32>} : vector<1x16xf32>, vector<16x128xf32>, vector<1x128xf32> -> vector<1x128xf32>
    %cst_40 = arith.constant 1.000000e-24 : f32
    %87 = vector.broadcast %cst_40 : f32 to vector<1x128xf32>
    %88 = arith.maximumf %86, %87 : vector<1x128xf32>
    %89 = math.rsqrt %88 : vector<1x128xf32>
    %90 = vector.broadcast %89 : vector<1x128xf32> to vector<16x128xf32>
    %91 = arith.mulf %84, %90 : vector<16x128xf32>
    %c0_41 = arith.constant 0 : index
    %c0_42 = arith.constant 0 : index
    %92 = vector.load %arg13[%c0_41, %c0_42] : memref<32x128xf32, #tpu.memory_space<vmem>>, vector<16x128xf32>
    tpu.vector_store %arg13[%c0_41, %c0_42], %91 {strides = array<i32>} : memref<32x128xf32, #tpu.memory_space<vmem>>, vector<16x128xf32>,
    %c0_43 = arith.constant 0 : index
    %c0_44 = arith.constant 0 : index
    %93 = vector.load %arg10[%c0_43, %c0_44] : memref<4x128xf32, #tpu.memory_space<vmem>>, vector<4x128xf32>
    %cst_45 = arith.constant dense<0.000000e+00> : vector<16x128xf32>
    %94 = tpu.matmul %63, %93, %cst_45 {dimension_numbers = #tpu.dot_dimension_numbers<[1], [0], [0], [1], [0, 0, 1, 1], [], []>, precision = #tpu.contract_precision<fp32>} : vector<16x4xf32>, vector<4x128xf32>, vector<16x128xf32> -> vector<16x128xf32>
    %c0_46 = arith.constant 0 : index
    %c0_47 = arith.constant 0 : index
    %95 = vector.load %arg11[%c0_46, %c0_47] : memref<4x128xf32, #tpu.memory_space<vmem>>, vector<4x128xf32>
    %cst_48 = arith.constant dense<0.000000e+00> : vector<16x128xf32>
    %96 = tpu.matmul %63, %95, %cst_48 {dimension_numbers = #tpu.dot_dimension_numbers<[1], [0], [0], [1], [0, 0, 1, 1], [], []>, precision = #tpu.contract_precision<fp32>} : vector<16x4xf32>, vector<4x128xf32>, vector<16x128xf32> -> vector<16x128xf32>
    %c0_49 = arith.constant 0 : index
    %c0_50 = arith.constant 0 : index
    %97 = vector.load %arg12[%c0_49, %c0_50] : memref<4x128xf32, #tpu.memory_space<vmem>>, vector<4x128xf32>
    %cst_51 = arith.constant dense<0.000000e+00> : vector<16x128xf32>
    %98 = tpu.matmul %63, %97, %cst_51 {dimension_numbers = #tpu.dot_dimension_numbers<[1], [0], [0], [1], [0, 0, 1, 1], [], []>, precision = #tpu.contract_precision<fp32>} : vector<16x4xf32>, vector<4x128xf32>, vector<16x128xf32> -> vector<16x128xf32>
    %99 = arith.mulf %94, %94 : vector<16x128xf32>
    %100 = arith.mulf %96, %96 : vector<16x128xf32>
    %101 = arith.addf %99, %100 : vector<16x128xf32>
    %102 = arith.mulf %98, %98 : vector<16x128xf32>
    %103 = arith.addf %101, %102 : vector<16x128xf32>
    %104 = math.sqrt %103 : vector<16x128xf32>
    %cst_52 = arith.constant -5.000000e-01 : f32
    %105 = arith.mulf %cst_52, %0 : f32
    %106 = vector.broadcast %105 : f32 to vector<16x128xf32>
    %107 = arith.mulf %106, %104 : vector<16x128xf32>
    %108 = math.exp %107 : vector<16x128xf32>
    %109 = vector.broadcast %0 : f32 to vector<16x128xf32>
    %110 = arith.mulf %94, %109 : vector<16x128xf32>
    %111 = arith.mulf %110, %108 : vector<16x128xf32>
    %112 = arith.mulf %111, %111 : vector<16x128xf32>
    %cst_53 = arith.constant dense<0.000000e+00> : vector<1x128xf32>
    %113 = tpu.matmul %1, %112, %cst_53 {dimension_numbers = #tpu.dot_dimension_numbers<[1], [0], [0], [1], [0, 0, 1, 1], [], []>, precision = #tpu.contract_precision<fp32>} : vector<1x16xf32>, vector<16x128xf32>, vector<1x128xf32> -> vector<1x128xf32>
    %cst_54 = arith.constant 1.000000e-24 : f32
    %114 = vector.broadcast %cst_54 : f32 to vector<1x128xf32>
    %115 = arith.maximumf %113, %114 : vector<1x128xf32>
    %116 = math.rsqrt %115 : vector<1x128xf32>
    %117 = vector.broadcast %116 : vector<1x128xf32> to vector<16x128xf32>
    %118 = arith.mulf %111, %117 : vector<16x128xf32>
    %c16 = arith.constant 16 : index
    %c0_55 = arith.constant 0 : index
    %119 = vector.load %arg13[%c16, %c0_55] : memref<32x128xf32, #tpu.memory_space<vmem>>, vector<16x128xf32>
    tpu.vector_store %arg13[%c16, %c0_55], %118 {strides = array<i32>} : memref<32x128xf32, #tpu.memory_space<vmem>>, vector<16x128xf32>,
    %c0_56 = arith.constant 0 : index
    %c0_57 = arith.constant 0 : index
    %120 = vector.load %arg5[%c0_56, %c0_57] : memref<20x32xf32, #tpu.memory_space<vmem>>, vector<20x32xf32>
    %c0_58 = arith.constant 0 : index
    %c0_59 = arith.constant 0 : index
    %121 = vector.load %arg13[%c0_58, %c0_59] : memref<32x128xf32, #tpu.memory_space<vmem>>, vector<32x128xf32>
    %cst_60 = arith.constant dense<0.000000e+00> : vector<20x128xf32>
    %122 = tpu.matmul %120, %121, %cst_60 {dimension_numbers = #tpu.dot_dimension_numbers<[1], [0], [0], [1], [0, 0, 1, 1], [], []>, precision = #tpu.contract_precision<fp32>} : vector<20x32xf32>, vector<32x128xf32>, vector<20x128xf32> -> vector<20x128xf32>
    %c0_61 = arith.constant 0 : index
    %c0_62 = arith.constant 0 : index
    %123 = vector.load %arg6[%c0_61, %c0_62] : memref<20x1xf32, #tpu.memory_space<vmem>>, vector<20x1xf32>
    %124 = vector.broadcast %123 : vector<20x1xf32> to vector<20x128xf32>
    %125 = arith.addf %122, %124 : vector<20x128xf32>
    %cst_63 = arith.constant 0.000000e+00 : f32
    %126 = vector.broadcast %cst_63 : f32 to vector<20x128xf32>
    %127 = arith.maximumf %125, %126 : vector<20x128xf32>
    %c0_64 = arith.constant 0 : index
    %c0_65 = arith.constant 0 : index
    %128 = vector.load %arg7[%c0_64, %c0_65] : memref<1x20xf32, #tpu.memory_space<vmem>>, vector<1x20xf32>
    %cst_66 = arith.constant dense<0.000000e+00> : vector<1x128xf32>
    %129 = tpu.matmul %128, %127, %cst_66 {dimension_numbers = #tpu.dot_dimension_numbers<[1], [0], [0], [1], [0, 0, 1, 1], [], []>, precision = #tpu.contract_precision<fp32>} : vector<1x20xf32>, vector<20x128xf32>, vector<1x128xf32> -> vector<1x128xf32>
    %c0_67 = arith.constant 0 : index
    %c0_68 = arith.constant 0 : index
    %130 = vector.load %arg8[%c0_67, %c0_68] : memref<1x1xf32, #tpu.memory_space<vmem>>, vector<1x1xf32>
    %131 = vector.broadcast %130 : vector<1x1xf32> to vector<1x128xf32>
    %132 = arith.addf %129, %131 : vector<1x128xf32>
    %c0_69 = arith.constant 0 : index
    %c0_70 = arith.constant 0 : index
    %133 = vector.load %arg9[%c0_69, %c0_70] : memref<1x128xf32, #tpu.memory_space<vmem>>, vector<1x128xf32>
    tpu.vector_store %arg9[%c0_69, %c0_70], %132 {strides = array<i32>} : memref<1x128xf32, #tpu.memory_space<vmem>>, vector<1x128xf32>,
    return
  }
  func.func @transform_0(%arg0: i32, %arg1: memref<1xf32, #tpu.memory_space<smem>>) -> (i32, i32) {
    %c0_i32 = arith.constant 0 : i32
    %c0_i32_0 = arith.constant 0 : i32
    return %c0_i32, %arg0 : i32, i32
  }
  func.func @transform_1(%arg0: i32, %arg1: memref<1xf32, #tpu.memory_space<smem>>) -> (i32, i32) {
    %c0_i32 = arith.constant 0 : i32
    %c0_i32_0 = arith.constant 0 : i32
    %c0_i32_1 = arith.constant 0 : i32
    return %c0_i32, %c0_i32_0 : i32, i32
  }
  func.func @transform_2(%arg0: i32, %arg1: memref<1xf32, #tpu.memory_space<smem>>) -> (i32, i32) {
    %c0_i32 = arith.constant 0 : i32
    %c0_i32_0 = arith.constant 0 : i32
    %c0_i32_1 = arith.constant 0 : i32
    return %c0_i32, %c0_i32_0 : i32, i32
  }
  func.func @transform_3(%arg0: i32, %arg1: memref<1xf32, #tpu.memory_space<smem>>) -> (i32, i32) {
    %c0_i32 = arith.constant 0 : i32
    %c0_i32_0 = arith.constant 0 : i32
    %c0_i32_1 = arith.constant 0 : i32
    return %c0_i32, %c0_i32_0 : i32, i32
  }
  func.func @transform_4(%arg0: i32, %arg1: memref<1xf32, #tpu.memory_space<smem>>) -> (i32, i32) {
    %c0_i32 = arith.constant 0 : i32
    %c0_i32_0 = arith.constant 0 : i32
    %c0_i32_1 = arith.constant 0 : i32
    return %c0_i32, %c0_i32_0 : i32, i32
  }
  func.func @transform_5(%arg0: i32, %arg1: memref<1xf32, #tpu.memory_space<smem>>) -> (i32, i32) {
    %c0_i32 = arith.constant 0 : i32
    %c0_i32_0 = arith.constant 0 : i32
    %c0_i32_1 = arith.constant 0 : i32
    return %c0_i32, %c0_i32_0 : i32, i32
  }
  func.func @transform_6(%arg0: i32, %arg1: memref<1xf32, #tpu.memory_space<smem>>) -> (i32, i32) {
    %c0_i32 = arith.constant 0 : i32
    %c0_i32_0 = arith.constant 0 : i32
    %c0_i32_1 = arith.constant 0 : i32
    return %c0_i32, %c0_i32_0 : i32, i32
  }
  func.func @transform_7(%arg0: i32, %arg1: memref<1xf32, #tpu.memory_space<smem>>) -> (i32, i32) {
    %c0_i32 = arith.constant 0 : i32
    %c0_i32_0 = arith.constant 0 : i32
    return %c0_i32, %arg0 : i32, i32
  }
}

</mosaic_0001>

<llo_original>
// kernel: tpu_custom_call.1
$region0: #{tpu_custom_call.1}
  #allocation0 [shape = 'u32[]', space=smem, size = 0x4, offset = 0x4, fixed_abs, tag = 'smem constant byte address 0x4 - core index']
  #allocation1 [shape = 'u32[144,128]{1,0:T(1,128)}', space=vmem, size = 0x12000, scoped, tag = 'internal scratch']
  #allocation2 [shape = 'f32[4,128]{1,0:T(4,128)}', space=vmem, size = 0x800, scoped, tag = 'scratch operand']
  #allocation3 [shape = 'f32[4,128]{1,0:T(4,128)}', space=vmem, size = 0x800, scoped, tag = 'scratch operand']
  #allocation4 [shape = 'f32[4,128]{1,0:T(4,128)}', space=vmem, size = 0x800, scoped, tag = 'scratch operand']
  #allocation5 [shape = 'f32[32,128]{1,0:T(8,128)}', space=vmem, size = 0x4000, scoped, tag = 'scratch operand']
  #allocation6 [shape = 's32[1]{0}', space=sflag, size = 0x4, scoped, tag = 'scoped memory for tpu_custom_call.1']
  #allocation7 [shape = 'f32[1]{0:T(128)S(6)}', space=smem, size = 0x200, scoped, tag = 'prefetched SMEM operand 0']
  #allocation8 [shape = 'f32[1,1]{1,0:T(1,128)S(1)}', space=vmem, size = 0x200, scoped, tag = 'scoped memory for tpu_custom_call.1']
  %s0 = inlined_call_operand.<no memory space> [shape: f32[1], index: 0, kind: input, shape index: {}]
  %s1 = inlined_call_operand.vmem [shape: f32[7,256], index: 1, kind: input, shape index: {}]
  %s2 = inlined_call_operand.vmem [shape: f32[16,4], index: 2, kind: input, shape index: {}]
  %s3 = inlined_call_operand.vmem [shape: f32[16,4], index: 3, kind: input, shape index: {}]
  %s4 = inlined_call_operand.vmem [shape: f32[20,32], index: 4, kind: input, shape index: {}]
  %s5 = inlined_call_operand.vmem [shape: f32[20,1], index: 5, kind: input, shape index: {}]
  %s6 = inlined_call_operand.vmem [shape: f32[1,20], index: 6, kind: input, shape index: {}]
  %s7 = inlined_call_operand.<no memory space> [shape: f32[1,1], index: 7, kind: input, shape index: {}]
  %s8 = inlined_call_operand.hbm [shape: f32[1,256], index: 8, kind: output, shape index: {}]
  %s9 = sld [smem:[#allocation0]]
  $region61: #{tpu_custom_call.1} parent=0
    _
  %s11 = ssub.s32 1, %s9
  %s12 = scalar_select 0, %s11, %s9
  %13 = sst [smem:[#allocation7]] %s0
  %v14 = vstv %s7
  %15 = vst [vmem:[#allocation8] sm:$0x1] %v14
  $region1: #{tpu_custom_call.1} parent=0
    #allocation9 [shape = 'u8[1024]{0}', space=vmem, size = 0x400, scoped, tag = 'output window, operand 0']
    #allocation10 [shape = 's32[2]{0}', space=sflag, size = 0x8, scoped, tag = 'scoped memory for tpu_custom_call.1']
    %16 = vsyncpa [#allocation10], 0
    %s17 = scalar_lea.sflag [#allocation10], 1
    %18 = vsyncpa %s17, 0
    loop: start=0, step=1, limit=4
    $region2: #{tpu_custom_call.1} parent=1 // loop_pre_header
      _
    $region3: #{tpu_custom_call.1} parent=1 // loop_header
      %s20 = sphi 0, %s24
      %p21 = scmp.ge.s32.totalorder %s20, 4
      %s30 = sphi 0, %s32
      %s33 = sphi 0, %s30
      %s34 = sphi 0, %s33
      %s50 = sphi 0, %s34
      %s54 = sphi 0, %s54
      %s56 = sphi 0, %s54
      %s57 = sphi 0, %s56
      %s71 = sphi 0, %s57
      %s75 = sphi 0, %s75
      %s77 = sphi 0, %s75
      %s78 = sphi 0, %s77
      %s92 = sphi 0, %s78
      %s96 = sphi 0, %s96
      %s98 = sphi 0, %s96
      %s99 = sphi 0, %s98
      %s113 = sphi 0, %s99
      %s117 = sphi 0, %s117
      %s119 = sphi 0, %s117
      %s120 = sphi 0, %s119
      %s134 = sphi 0, %s120
      %s138 = sphi 0, %s138
      %s140 = sphi 0, %s138
      %s141 = sphi 0, %s140
      %s155 = sphi 0, %s141
      %s159 = sphi 0, %s159
      %s161 = sphi 0, %s159
      %s162 = sphi 0, %s161
      %s176 = sphi 0, %s162
      %s182 = sphi 0, %s184
      %s185 = sphi 0, %s182
      %s186 = sphi 0, %s185
      %s202 = sphi 0, %s186
    $region4: #{tpu_custom_call.1} parent=1 // loop_header_branch
      %23 = sbr.rel (%p21) target = $region8
    $region5: #{tpu_custom_call.1} parent=1 // loop_body
      %s25 = ssub.s32 %s20, 1
      %s26 = ssub.s32 %s20, 2
      %s27 = sadd.s32 %s20, 1
      %s28 = ssub.s32 %s20, %s27
      %p29 = scmp.eq.s32.totalorder %s28, 0
      %s31 = sadd.s32 %s30, 1
      %s32 = scalar_select %p29, %s30, %s31
      %p35 = pneg %p29
      %p36 = scmp.eq.s32.totalorder %s20, 1
      %p37 = por %p35, %p36
      %p38 = scmp.ne.s32.totalorder %s30, %s33
      %p39 = scmp.eq.s32.totalorder %s20, 0
      %p40 = por %p38, %p39
      %p41 = scmp.ne.s32.totalorder %s30, %s33
      %p42 = scmp.eq.s32.totalorder %s25, 1
      %p43 = por %p41, %p42
      %p44 = scmp.ne.s32.totalorder %s33, %s34
      %p45 = scmp.eq.s32.totalorder %s25, 0
      %p46 = por %p44, %p45
      %p47 = scmp.ne.s32.totalorder %s33, %s34
      %p48 = scmp.eq.s32.totalorder %s26, 1
      %p49 = por %p47, %p48
      %p51 = scmp.ne.s32.totalorder %s34, %s50
      %p52 = scmp.eq.s32.totalorder %s26, 0
      %p53 = por %p51, %p52
      %s55 = sadd.s32 %s54, 1
      %p58 = scmp.eq.s32.totalorder %s20, 1
      %p59 = scmp.ne.s32.totalorder %s54, %s56
      %p60 = scmp.eq.s32.totalorder %s20, 0
      %p61 = por %p59, %p60
      %p62 = scmp.ne.s32.totalorder %s54, %s56
      %p63 = scmp.eq.s32.totalorder %s25, 1
      %p64 = por %p62, %p63
      %p65 = scmp.ne.s32.totalorder %s56, %s57
      %p66 = scmp.eq.s32.totalorder %s25, 0
      %p67 = por %p65, %p66
      %p68 = scmp.ne.s32.totalorder %s56, %s57
      %p69 = scmp.eq.s32.totalorder %s26, 1
      %p70 = por %p68, %p69
      %p72 = scmp.ne.s32.totalorder %s57, %s71
      %p73 = scmp.eq.s32.totalorder %s26, 0
      %p74 = por %p72, %p73
      %s76 = sadd.s32 %s75, 1
      %p79 = scmp.eq.s32.totalorder %s20, 1
      %p80 = scmp.ne.s32.totalorder %s75, %s77
      %p81 = scmp.eq.s32.totalorder %s20, 0
      %p82 = por %p80, %p81
      %p83 = scmp.ne.s32.totalorder %s75, %s77
      %p84 = scmp.eq.s32.totalorder %s25, 1
      %p85 = por %p83, %p84
      %p86 = scmp.ne.s32.totalorder %s77, %s78
      %p87 = scmp.eq.s32.totalorder %s25, 0
      %p88 = por %p86, %p87
      %p89 = scmp.ne.s32.totalorder %s77, %s78
      %p90 = scmp.eq.s32.totalorder %s26, 1
      %p91 = por %p89, %p90
      %p93 = scmp.ne.s32.totalorder %s78, %s92
      %p94 = scmp.eq.s32.totalorder %s26, 0
      %p95 = por %p93, %p94
      %s97 = sadd.s32 %s96, 1
      %p100 = scmp.eq.s32.totalorder %s20, 1
      %p101 = scmp.ne.s32.totalorder %s96, %s98
      %p102 = scmp.eq.s32.totalorder %s20, 0
      %p103 = por %p101, %p102
      %p104 = scmp.ne.s32.totalorder %s96, %s98
      %p105 = scmp.eq.s32.totalorder %s25, 1
      %p106 = por %p104, %p105
      %p107 = scmp.ne.s32.totalorder %s98, %s99
      %p108 = scmp.eq.s32.totalorder %s25, 0
      %p109 = por %p107, %p108
      %p110 = scmp.ne.s32.totalorder %s98, %s99
      %p111 = scmp.eq.s32.totalorder %s26, 1
      %p112 = por %p110, %p111
      %p114 = scmp.ne.s32.totalorder %s99, %s113
      %p115 = scmp.eq.s32.totalorder %s26, 0
      %p116 = por %p114, %p115
      %s118 = sadd.s32 %s117, 1
      %p121 = scmp.eq.s32.totalorder %s20, 1
      %p122 = scmp.ne.s32.totalorder %s117, %s119
      %p123 = scmp.eq.s32.totalorder %s20, 0
      %p124 = por %p122, %p123
      %p125 = scmp.ne.s32.totalorder %s117, %s119
      %p126 = scmp.eq.s32.totalorder %s25, 1
      %p127 = por %p125, %p126
      %p128 = scmp.ne.s32.totalorder %s119, %s120
      %p129 = scmp.eq.s32.totalorder %s25, 0
      %p130 = por %p128, %p129
      %p131 = scmp.ne.s32.totalorder %s119, %s120
      %p132 = scmp.eq.s32.totalorder %s26, 1
      %p133 = por %p131, %p132
      %p135 = scmp.ne.s32.totalorder %s120, %s134
      %p136 = scmp.eq.s32.totalorder %s26, 0
      %p137 = por %p135, %p136
      %s139 = sadd.s32 %s138, 1
      %p142 = scmp.eq.s32.totalorder %s20, 1
      %p143 = scmp.ne.s32.totalorder %s138, %s140
      %p144 = scmp.eq.s32.totalorder %s20, 0
      %p145 = por %p143, %p144
      %p146 = scmp.ne.s32.totalorder %s138, %s140
      %p147 = scmp.eq.s32.totalorder %s25, 1
      %p148 = por %p146, %p147
      %p149 = scmp.ne.s32.totalorder %s140, %s141
      %p150 = scmp.eq.s32.totalorder %s25, 0
      %p151 = por %p149, %p150
      %p152 = scmp.ne.s32.totalorder %s140, %s141
      %p153 = scmp.eq.s32.totalorder %s26, 1
      %p154 = por %p152, %p153
      %p156 = scmp.ne.s32.totalorder %s141, %s155
      %p157 = scmp.eq.s32.totalorder %s26, 0
      %p158 = por %p156, %p157
      %s160 = sadd.s32 %s159, 1
      %p163 = scmp.eq.s32.totalorder %s20, 1
      %p164 = scmp.ne.s32.totalorder %s159, %s161
      %p165 = scmp.eq.s32.totalorder %s20, 0
      %p166 = por %p164, %p165
      %p167 = scmp.ne.s32.totalorder %s159, %s161
      %p168 = scmp.eq.s32.totalorder %s25, 1
      %p169 = por %p167, %p168
      %p170 = scmp.ne.s32.totalorder %s161, %s162
      %p171 = scmp.eq.s32.totalorder %s25, 0
      %p172 = por %p170, %p171
      %p173 = scmp.ne.s32.totalorder %s161, %s162
      %p174 = scmp.eq.s32.totalorder %s26, 1
      %p175 = por %p173, %p174
      %p177 = scmp.ne.s32.totalorder %s162, %s176
      %p178 = scmp.eq.s32.totalorder %s26, 0
      %p179 = por %p177, %p178
      %s180 = ssub.s32 %s20, %s27
      %p181 = scmp.eq.s32.totalorder %s180, 0
      %s183 = sadd.s32 %s182, 1
      %s184 = scalar_select %p181, %s182, %s183
      %p187 = pneg %p181
      %p188 = scmp.eq.s32.totalorder %s20, 1
      %p189 = por %p187, %p188
      %p190 = scmp.ne.s32.totalorder %s182, %s185
      %p191 = scmp.eq.s32.totalorder %s20, 0
      %p192 = por %p190, %p191
      %p193 = scmp.ne.s32.totalorder %s182, %s185
      %p194 = scmp.eq.s32.totalorder %s25, 1
      %p195 = por %p193, %p194
      %p196 = scmp.ne.s32.totalorder %s185, %s186
      %p197 = scmp.eq.s32.totalorder %s25, 0
      %p198 = por %p196, %p197
      %p199 = scmp.ne.s32.totalorder %s185, %s186
      %p200 = scmp.eq.s32.totalorder %s26, 1
      %p201 = por %p199, %p200
      %p203 = scmp.ne.s32.totalorder %s186, %s202
      %p204 = scmp.eq.s32.totalorder %s26, 0
      %p205 = por %p203, %p204
      %p206 = scmp.le.s32.totalorder 1, %s20
      %p207 = scmp.lt.s32.totalorder %s20, 3
      %p208 = pnand %p206, %p207
      %p209 = pneg %p208
      // Predicated region
      $region9: #{tpu_custom_call.1} parent=5 // pred_check
        _
      $region10: #{tpu_custom_call.1} parent=5 // pred_check_branch
        %211 = sbr.rel (%p208) target = $region12
      $region11: #{tpu_custom_call.1} parent=5 // pred_region
        %s212 = ssub.s32 %s20, 1
        // Predicated region
        $region13: #{tpu_custom_call.1} parent=11 // pred_check
          %p213 = pneg %p67
        $region14: #{tpu_custom_call.1} parent=11 // pred_check_branch
          %215 = sbr.rel (%p213) target = $region16
        $region15: #{tpu_custom_call.1} parent=11 // pred_region
          _
        $region16: #{tpu_custom_call.1} parent=11 // pred_fallthru
          _
        // Predicated region
        $region17: #{tpu_custom_call.1} parent=11 // pred_check
          %p216 = pneg %p88
        $region18: #{tpu_custom_call.1} parent=11 // pred_check_branch
          %218 = sbr.rel (%p216) target = $region20
        $region19: #{tpu_custom_call.1} parent=11 // pred_region
          _
        $region20: #{tpu_custom_call.1} parent=11 // pred_fallthru
          _
        // Predicated region
        $region21: #{tpu_custom_call.1} parent=11 // pred_check
          %p219 = pneg %p109
        $region22: #{tpu_custom_call.1} parent=11 // pred_check_branch
          %221 = sbr.rel (%p219) target = $region24
        $region23: #{tpu_custom_call.1} parent=11 // pred_region
          _
        $region24: #{tpu_custom_call.1} parent=11 // pred_fallthru
          _
        // Predicated region
        $region25: #{tpu_custom_call.1} parent=11 // pred_check
          %p222 = pneg %p130
        $region26: #{tpu_custom_call.1} parent=11 // pred_check_branch
          %224 = sbr.rel (%p222) target = $region28
        $region27: #{tpu_custom_call.1} parent=11 // pred_region
          _
        $region28: #{tpu_custom_call.1} parent=11 // pred_fallthru
          _
        // Predicated region
        $region29: #{tpu_custom_call.1} parent=11 // pred_check
          %p225 = pneg %p151
        $region30: #{tpu_custom_call.1} parent=11 // pred_check_branch
          %227 = sbr.rel (%p225) target = $region32
        $region31: #{tpu_custom_call.1} parent=11 // pred_region
          _
        $region32: #{tpu_custom_call.1} parent=11 // pred_fallthru
          _
        // Predicated region
        $region33: #{tpu_custom_call.1} parent=11 // pred_check
          %p228 = pneg %p172
        $region34: #{tpu_custom_call.1} parent=11 // pred_check_branch
          %230 = sbr.rel (%p228) target = $region36
        $region35: #{tpu_custom_call.1} parent=11 // pred_region
          _
        $region36: #{tpu_custom_call.1} parent=11 // pred_fallthru
          _
      $region12: #{tpu_custom_call.1} parent=5 // pred_fallthru
        _
      %p231 = scmp.lt.s32.totalorder %s20, 2
      // Predicated region
      $region37: #{tpu_custom_call.1} parent=5 // pred_check
        %p232 = pneg %p231
      $region38: #{tpu_custom_call.1} parent=5 // pred_check_branch
        %234 = sbr.rel (%p232) target = $region40
      $region39: #{tpu_custom_call.1} parent=5 // pred_region
        // Predicated region
        $region41: #{tpu_custom_call.1} parent=39 // pred_check
          %p235 = pneg %p40
        $region42: #{tpu_custom_call.1} parent=39 // pred_check_branch
          %237 = sbr.rel (%p235) target = $region44
        $region43: #{tpu_custom_call.1} parent=39 // pred_region
          %p238 = scmp.lt.s32.totalorder %s20, 1
          %s239 = scalar_select %p238, %s20, 1
          %s240 = smul.addr %s239, 8
          %s241 = scalar_lea.vmem %s1, %s240
        $region44: #{tpu_custom_call.1} parent=39 // pred_fallthru
          _
      $region40: #{tpu_custom_call.1} parent=5 // pred_fallthru
        _
      %p242 = scmp.le.s32.totalorder 1, %s20
      %p243 = scmp.lt.s32.totalorder %s20, 3
      %p244 = pnand %p242, %p243
      %p245 = pneg %p244
      // Predicated region
      $region45: #{tpu_custom_call.1} parent=5 // pred_check
        _
      $region46: #{tpu_custom_call.1} parent=5 // pred_check_branch
        %247 = sbr.rel (%p244) target = $region48
      $region47: #{tpu_custom_call.1} parent=5 // pred_region
        %s248 = ssub.s32 %s20, 1
        %p249 = scmp.lt.s32.totalorder %s25, 1
        %s250 = scalar_select %p249, %s25, 1
        %s251 = smul.addr %s250, 8
        %s252 = scalar_lea.vmem %s1, %s251
        %p253 = pneg %p46
        %p254 = pneg %p43
        %p255 = pneg %p67
        %p256 = pneg %p64
        %p257 = pneg %p88
        %p258 = pneg %p85
        %p259 = pneg %p109
        %p260 = pneg %p106
        %p261 = pneg %p130
        %p262 = pneg %p127
        %p263 = pneg %p151
        %p264 = pneg %p148
        %p265 = pneg %p172
        %p266 = pneg %p169
        %p267 = pneg %p198
        %p268 = pneg %p195
        %s269 = sand.u32 %s185, 1
        %s270 = scalar_lea.sflag [#allocation10], %s269
        %s271 = sand.u32 %s185, 1
        %s272 = scalar_lea.vmem [#allocation9], %s271
        %p273 = scmp.lt.s32.totalorder %s25, 1
        %s274 = scalar_select %p273, %s25, 1
        %s275 = smul.addr %s274, 8
        %s276 = scalar_lea.vmem %s1, %s275
        %s277 = sld [smem:[#allocation7]]
        %v278 = vld [vmem:[%s276] sm:$0x7f]
        %v279 = vand.u32 2147483647, %v278
        %vm280 = vcmp.le.f32.partialorder %v279, 0.7853982
        %vm281 = vcmp.lt.s32.totalorder %v278, 0
        %v282 = vand.u32 %v278, 2139095040
        %v283 = vshrl.u32 %v282, 23
        %v284 = vsub.s32 %v283, 127
        %v285 = vand.u32 2147483647, %v278
        %v286 = vand.u32 %v285, 8388607
        %v287 = vor.u32 %v286, 8388608
        %v288 = vsub.s32 0, %v287
        %v289 = vadd.s32 %v284, 1
        %vm290 = vcmp.gt.s32.totalorder %v289, 0
        %v291 = vsel %vm290, %v289, 0
        %v292 = vshrl.u32 %v291, 5
        %v293 = vand.u32 %v291, 31
        %v294 = vsub.s32 32, %v293
        %v295 = vshrl.u32 683565275, %v294
        %v296 = vshll.u32 683565275, %v293
        %v297 = vshrl.u32 2475754826, %v294
        %v298 = vor.u32 %v296, %v297
        %v299 = vshll.u32 2475754826, %v293
        %v300 = vshrl.u32 2131351028, %v294
        %v301 = vor.u32 %v299, %v300
        %v302 = vshll.u32 2131351028, %v293
        %v303 = vshrl.u32 2102212464, %v294
        %v304 = vor.u32 %v302, %v303
        %v305 = vshll.u32 2102212464, %v293
        %v306 = vshrl.u32 920167782, %v294
        %v307 = vor.u32 %v305, %v306
        %v308 = vshll.u32 920167782, %v293
        %v309 = vshrl.u32 1326507024, %v294
        %v310 = vor.u32 %v308, %v309
        %vm311 = vcmp.lt.s32.totalorder %v292, 1
        %vm312 = vcmp.lt.s32.totalorder %v292, 2
        %vm313 = vcmp.lt.s32.totalorder %v292, 3
        %vm314 = vcmp.lt.s32.totalorder %v292, 4
        %v315 = vsel %vm311, %v295, %v298
        %v316 = vsel %vm314, %v304, 2102212464
        %v317 = vsel %vm313, %v301, %v316
        %v318 = vsel %vm312, %v315, %v317
        %v319 = vsel %vm311, %v298, %v301
        %v320 = vsel %vm314, %v307, 920167782
        %v321 = vsel %vm313, %v304, %v320
        %v322 = vsel %vm312, %v319, %v321
        %v323 = vsel %vm311, %v301, %v304
        %v324 = vsel %vm314, %v310, 1326507024
        %v325 = vsel %vm313, %v307, %v324
        %v326 = vsel %vm312, %v323, %v325
        %v327 = vshll.u32 %v287, 8
        %v328 = vmul.u32.u64.compose %v327, %v326
        %v329 = vextract.low.u32 %v328
        %v330 = vextract.high.u32 %v328
        %v331 = vmul.u32.u64.compose %v327, %v322
        %v332 = vextract.low.u32 %v331
        %v333 = vextract.high.u32 %v331
        %v334 = vmul.u32 %v327, %v318
        %v335 = vadd.s32 %v330, %v332
        %vm336 = vc.u32 %v330, %v332
        %v337 = vadd.s32 %v333, 1
        %v338 = vsel %vm336, %v337, %v333
        %v339 = vadd.s32 %v334, %v338
        %v340 = vadd.s32 %v339, 536870912
        %v341 = vshrl.u32 %v340, 30
        %v342 = vshll.u32 %v341, 30
        %v343 = vsub.s32 %v339, %v342
        %vm344 = vcmp.lt.s32.totalorder %v343, 0
        %v345 = vsub.s32 0, %v343
        %v346 = vsel %vm344, %v345, %v343
        %v347 = vclz %v346
        %v348 = vsub.s32 %v347, 2
        %vm349 = vcmp.gt.s32.totalorder 0, %v348
        %v350 = vsel %vm349, 0, %v348
        %v351 = vsub.s32 32, %v350
        %v352 = vshll.u32 %v343, %v350
        %v353 = vshrl.u32 %v335, %v351
        %v354 = vor.u32 %v352, %v353
        %v355 = vsub.s32 4294967266, %v350
        %v356 = vadd.s32 %v355, 127
        %v357 = vshll.u32 %v356, 23
        %v358 = vor.u32 4788187, %v357
        %v359 = vand.u32 2147483647, %v358
        %v361 = vcvt.s32.f32 %v354
        %v362 = vmul.f32 %v361, %v359
        %v363 = vxor.u32 %v362, 2147483648
        %v364 = vsel %vm281, %v363, %v362
        %v365 = vsub.s32 4, %v341
        %v366 = vsel %vm281, %v365, %v341
        %v367 = vsel %vm280, %v278, %v364
        %v368 = vsel %vm280, 0, %v366
        %v369 = vcosq.f32.pop %v367
        %v370 = vsinq.f32.pop %v367
        %vm371 = vweird.f32 %v278
        %v372 = vand.u32 %v368, 3
        %vm373 = vcmp.lt.s32.totalorder %v372, 2
        %vm374 = vcmp.eq.s32.totalorder %v372, 0
        %v375 = vxor.u32 %v370, 2147483648
        %v376 = vsel %vm374, %v369, %v375
        %vm377 = vcmp.eq.s32.totalorder %v372, 2
        %v378 = vxor.u32 %v369, 2147483648
        %v379 = vsel %vm377, %v378, %v370
        %v380 = vsel %vm373, %v376, %v379
        %v381 = vsel %vm371, nan, %v380
        %v382 = vand.u32 2147483647, %v278
        %vm383 = vcmp.le.f32.partialorder %v382, 0.7853982
        %vm384 = vcmp.lt.s32.totalorder %v278, 0
        %v385 = vand.u32 %v278, 2139095040
        %v386 = vshrl.u32 %v385, 23
        %v387 = vsub.s32 %v386, 127
        %v388 = vand.u32 2147483647, %v278
        %v389 = vand.u32 %v388, 8388607
        %v390 = vor.u32 %v389, 8388608
        %v391 = vsub.s32 0, %v390
        %v392 = vadd.s32 %v387, 1
        %vm393 = vcmp.gt.s32.totalorder %v392, 0
        %v394 = vsel %vm393, %v392, 0
        %v395 = vshrl.u32 %v394, 5
        %v396 = vand.u32 %v394, 31
        %v397 = vsub.s32 32, %v396
        %v398 = vshrl.u32 683565275, %v397
        %v399 = vshll.u32 683565275, %v396
        %v400 = vshrl.u32 2475754826, %v397
        %v401 = vor.u32 %v399, %v400
        %v402 = vshll.u32 2475754826, %v396
        %v403 = vshrl.u32 2131351028, %v397
        %v404 = vor.u32 %v402, %v403
        %v405 = vshll.u32 2131351028, %v396
        %v406 = vshrl.u32 2102212464, %v397
        %v407 = vor.u32 %v405, %v406
        %v408 = vshll.u32 2102212464, %v396
        %v409 = vshrl.u32 920167782, %v397
        %v410 = vor.u32 %v408, %v409
        %v411 = vshll.u32 920167782, %v396
        %v412 = vshrl.u32 1326507024, %v397
        %v413 = vor.u32 %v411, %v412
        %vm414 = vcmp.lt.s32.totalorder %v395, 1
        %vm415 = vcmp.lt.s32.totalorder %v395, 2
        %vm416 = vcmp.lt.s32.totalorder %v395, 3
        %vm417 = vcmp.lt.s32.totalorder %v395, 4
        %v418 = vsel %vm414, %v398, %v401
        %v419 = vsel %vm417, %v407, 2102212464
        %v420 = vsel %vm416, %v404, %v419
        %v421 = vsel %vm415, %v418, %v420
        %v422 = vsel %vm414, %v401, %v404
        %v423 = vsel %vm417, %v410, 920167782
        %v424 = vsel %vm416, %v407, %v423
        %v425 = vsel %vm415, %v422, %v424
        %v426 = vsel %vm414, %v404, %v407
        %v427 = vsel %vm417, %v413, 1326507024
        %v428 = vsel %vm416, %v410, %v427
        %v429 = vsel %vm415, %v426, %v428
        %v430 = vshll.u32 %v390, 8
        %v431 = vmul.u32.u64.compose %v430, %v429
        %v432 = vextract.low.u32 %v431
        %v433 = vextract.high.u32 %v431
        %v434 = vmul.u32.u64.compose %v430, %v425
        %v435 = vextract.low.u32 %v434
        %v436 = vextract.high.u32 %v434
        %v437 = vmul.u32 %v430, %v421
        %v438 = vadd.s32 %v433, %v435
        %vm439 = vc.u32 %v433, %v435
        %v440 = vadd.s32 %v436, 1
        %v441 = vsel %vm439, %v440, %v436
        %v442 = vadd.s32 %v437, %v441
        %v443 = vadd.s32 %v442, 536870912
        %v444 = vshrl.u32 %v443, 30
        %v445 = vshll.u32 %v444, 30
        %v446 = vsub.s32 %v442, %v445
        %vm447 = vcmp.lt.s32.totalorder %v446, 0
        %v448 = vsub.s32 0, %v446
        %v449 = vsel %vm447, %v448, %v446
        %v450 = vclz %v449
        %v451 = vsub.s32 %v450, 2
        %vm452 = vcmp.gt.s32.totalorder 0, %v451
        %v453 = vsel %vm452, 0, %v451
        %v454 = vsub.s32 32, %v453
        %v455 = vshll.u32 %v446, %v453
        %v456 = vshrl.u32 %v438, %v454
        %v457 = vor.u32 %v455, %v456
        %v458 = vsub.s32 4294967266, %v453
        %v459 = vadd.s32 %v458, 127
        %v460 = vshll.u32 %v459, 23
        %v461 = vor.u32 4788187, %v460
        %v462 = vand.u32 2147483647, %v461
        %v464 = vcvt.s32.f32 %v457
        %v465 = vmul.f32 %v464, %v462
        %v466 = vxor.u32 %v465, 2147483648
        %v467 = vsel %vm384, %v466, %v465
        %v468 = vsub.s32 4, %v444
        %v469 = vsel %vm384, %v468, %v444
        %v470 = vsel %vm383, %v278, %v467
        %v471 = vsel %vm383, 0, %v469
        %v472 = vcosq.f32.pop %v470
        %v473 = vsinq.f32.pop %v470
        %vm474 = vweird.f32 %v278
        %v475 = vadd.s32 %v471, 3
        %v476 = vand.u32 %v475, 3
        %vm477 = vcmp.lt.s32.totalorder %v476, 2
        %vm478 = vcmp.eq.s32.totalorder %v476, 0
        %v479 = vxor.u32 %v473, 2147483648
        %v480 = vsel %vm478, %v472, %v479
        %vm481 = vcmp.eq.s32.totalorder %v476, 2
        %v482 = vxor.u32 %v472, 2147483648
        %v483 = vsel %vm481, %v482, %v473
        %v484 = vsel %vm477, %v480, %v483
        %v485 = vsel %vm474, nan, %v484
        %v486 = vsub.f32 1.0, %v381
        %v488 = vrot.slane %v278, 1
        %v490 = vmul.f32 %v486, %v488
        %v491 = vrot.slane %v278, 2
        %v493 = vmul.f32 %v486, %v491
        %v494 = vrot.slane %v278, 3
        %v496 = vmul.f32 %v486, %v494
        %v497 = vmul.f32 %v490, %v491
        %v498 = vmul.f32 %v493, %v494
        %v499 = vmul.f32 %v490, %v494
        %v500 = vmul.f32 %v485, %v488
        %v501 = vmul.f32 %v485, %v491
        %v502 = vmul.f32 %v485, %v494
        %v503 = vmul.f32 %v490, %v488
        %v504 = vadd.f32 %v381, %v503
        %v505 = vmul.f32 %v493, %v491
        %v506 = vadd.f32 %v381, %v505
        %v507 = vmul.f32 %v496, %v494
        %v508 = vadd.f32 %v381, %v507
        %v509 = vsub.f32 %v497, %v502
        %v510 = vadd.f32 %v497, %v502
        %v511 = vadd.f32 %v499, %v501
        %v512 = vsub.f32 %v499, %v501
        %v513 = vsub.f32 %v498, %v500
        %v514 = vadd.f32 %v498, %v500
        %v515 = vrot.slane %v278, 4
        %v517 = vmul.f32 %v504, %v515
        %v518 = vrot.slane %v278, 5
        %v520 = vmul.f32 %v509, %v518
        %v521 = vadd.f32 %v517, %v520
        %v522 = vrot.slane %v278, 6
        %v524 = vmul.f32 %v511, %v522
        %v525 = vadd.f32 %v521, %v524
        %v526 = vmul.f32 %v510, %v515
        %v527 = vmul.f32 %v506, %v518
        %v528 = vadd.f32 %v526, %v527
        %v529 = vmul.f32 %v513, %v522
        %v530 = vadd.f32 %v528, %v529
        %v531 = vmul.f32 %v512, %v515
        %v532 = vmul.f32 %v514, %v518
        %v533 = vadd.f32 %v531, %v532
        %v534 = vmul.f32 %v508, %v522
        %v535 = vadd.f32 %v533, %v534
        %536 = vst [vmem:[#allocation2] sm:$0x1] %v504
        %537 = vst [vmem:[#allocation2 + $0x1] sm:$0x1] %v509
        %538 = vst [vmem:[#allocation2 + $0x2] sm:$0x1] %v511
        %539 = vst [vmem:[#allocation2 + $0x3] sm:$0x1] %v525
        %540 = vst [vmem:[#allocation3] sm:$0x1] %v510
        %541 = vst [vmem:[#allocation3 + $0x1] sm:$0x1] %v506
        %542 = vst [vmem:[#allocation3 + $0x2] sm:$0x1] %v513
        %543 = vst [vmem:[#allocation3 + $0x3] sm:$0x1] %v530
        %544 = vst [vmem:[#allocation4] sm:$0x1] %v512
        %545 = vst [vmem:[#allocation4 + $0x1] sm:$0x1] %v514
        %546 = vst [vmem:[#allocation4 + $0x2] sm:$0x1] %v508
        %547 = vst [vmem:[#allocation4 + $0x3] sm:$0x1] %v535
        %v548 = vld [vmem:[%s2] sm:$0xff]
        %v549 = vld [vmem:[%s2 + $0x8] sm:$0xff]
        %v550 = vld [vmem:[%s3] sm:$0xff]
        %v551 = vld [vmem:[%s3 + $0x8] sm:$0xff]
        %v552 = vld [vmem:[#allocation2] sm:$0xf]
        %vm553 = vcmask 31744
        %v555 = vsel %vm553, %v548, 0
        %v558 = vsel %vm553, %v549, 0
        %vm560 = vcmask 1043456
        %v562 = vsel %vm560, %v552, 0
        %564 = vmatprep.subr.mxu0 0.0
        %565 = vmatpush1.msra.mxu0 0.0
        %566 = vmatprep.subr.mxu0 0.0
        %567 = vmatpush1.msra.mxu0 0.0
        %568 = vmatprep.subr.mxu0 0.0
        %569 = vmatpush1.msra.mxu0 0.0
        %570 = vmatprep.subr.mxu0 0.0
        %571 = vmatpush1.msra.mxu0 0.0
        %572 = vmatprep.subr.mxu0 0.0
        %573 = vmatpush1.msra.mxu0 0.0
        %574 = vmatprep.subr.mxu0 0.0
        %575 = vmatpush1.msra.mxu0 0.0
        %576 = vmatprep.subr.mxu0 0.0
        %577 = vmatpush1.msra.mxu0 0.0
        %578 = vmatprep.subr.mxu0 0.0
        %579 = vmatpush1.msra.mxu0 0.0
        %580 = vmatprep.subr.mxu0 0.0
        %581 = vmatpush1.msra.mxu0 0.0
        %582 = vmatprep.subr.mxu0 0.0
        %583 = vmatpush1.msra.mxu0 0.0
        %584 = vmatprep.subr.mxu0 0.0
        %585 = vmatpush1.msra.mxu0 0.0
        %586 = vmatprep.subr.mxu0 0.0
        %587 = vmatpush1.msra.mxu0 0.0
        %588 = vmatprep.subr.mxu0 0.0
        %589 = vmatpush1.msra.mxu0 0.0
        %590 = vmatprep.subr.mxu0 0.0
        %591 = vmatpush1.msra.mxu0 0.0
        %592 = vmatprep.subr.mxu0 0.0
        %593 = vmatpush1.msra.mxu0 0.0
        %594 = vmatprep.subr.mxu0 0.0
        %v595 = vand.u32 %v562, 4294901760
        %596 = vmatpush1.msra.mxu0 %v595
        %597 = vmatprep.subr.mxu0 0.0
        %598 = vmatpush2.msra.mxu0 0.0
        %599 = vmatprep.subr.mxu0 0.0
        %600 = vmatpush2.msra.mxu0 0.0
        %601 = vmatprep.subr.mxu0 0.0
        %602 = vmatpush2.msra.mxu0 0.0
        %603 = vmatprep.subr.mxu0 0.0
        %604 = vmatpush2.msra.mxu0 0.0
        %605 = vmatprep.subr.mxu0 0.0
        %606 = vmatpush2.msra.mxu0 0.0
        %607 = vmatprep.subr.mxu0 0.0
        %608 = vmatpush2.msra.mxu0 0.0
        %609 = vmatprep.subr.mxu0 0.0
        %610 = vmatpush2.msra.mxu0 0.0
        %611 = vmatprep.subr.mxu0 0.0
        %612 = vmatpush2.msra.mxu0 0.0
        %613 = vmatprep.subr.mxu0 0.0
        %614 = vmatpush2.msra.mxu0 0.0
        %615 = vmatprep.subr.mxu0 0.0
        %616 = vmatpush2.msra.mxu0 0.0
        %617 = vmatprep.subr.mxu0 0.0
        %618 = vmatpush2.msra.mxu0 0.0
        %619 = vmatprep.subr.mxu0 0.0
        %620 = vmatpush2.msra.mxu0 0.0
        %621 = vmatprep.subr.mxu0 0.0
        %622 = vmatpush2.msra.mxu0 0.0
        %623 = vmatprep.subr.mxu0 0.0
        %624 = vmatpush2.msra.mxu0 0.0
        %625 = vmatprep.subr.mxu0 0.0
        %626 = vmatpush2.msra.mxu0 0.0
        %627 = vmatprep.subr.mxu0 0.0
        %628 = vmatpush2.msra.mxu0 0.0
        %629 = vmatprep.mubr.f32.mxu0 0.0
        %v630 = vand.u32 %v555, 4294901760
        %v631 = vsub.f32 %v555, %v630
        %v632 = vand.u32 %v631, 4294901760
        %v633 = vsub.f32 %v631, %v632
        %v634 = vand.u32 %v633, 4294901760
        %635 = vmatmul.mubr.f32.gmra.mxu0 %v634
        %v636 = vpop.f32.mrf.mxu0
        %v637 = vadd.f32 0.0, %v636
        %v638 = vpop.f32.mrf.mxu0
        %639 = vmatprep.mubr.f32.mxu0 0.0
        %v640 = vand.u32 %v558, 4294901760
        %v641 = vsub.f32 %v558, %v640
        %v642 = vand.u32 %v641, 4294901760
        %v643 = vsub.f32 %v641, %v642
        %v644 = vand.u32 %v643, 4294901760
        %645 = vmatmul.mubr.f32.gmra.mxu0 %v644
        %v646 = vpop.f32.mrf.mxu0
        %v647 = vadd.f32 0.0, %v646
        %v648 = vpop.f32.mrf.mxu0
        %649 = vdwg.mxu0
        %650 = vmatprep.subr.mxu0 0.0
        %651 = vmatpush1.msra.mxu0 0.0
        %652 = vmatprep.subr.mxu0 0.0
        %653 = vmatpush1.msra.mxu0 0.0
        %654 = vmatprep.subr.mxu0 0.0
        %655 = vmatpush1.msra.mxu0 0.0
        %656 = vmatprep.subr.mxu0 0.0
        %657 = vmatpush1.msra.mxu0 0.0
        %658 = vmatprep.subr.mxu0 0.0
        %659 = vmatpush1.msra.mxu0 0.0
        %660 = vmatprep.subr.mxu0 0.0
        %661 = vmatpush1.msra.mxu0 0.0
        %662 = vmatprep.subr.mxu0 0.0
        %663 = vmatpush1.msra.mxu0 0.0
        %664 = vmatprep.subr.mxu0 0.0
        %665 = vmatpush1.msra.mxu0 0.0
        %666 = vmatprep.subr.mxu0 0.0
        %667 = vmatpush1.msra.mxu0 0.0
        %668 = vmatprep.subr.mxu0 0.0
        %669 = vmatpush1.msra.mxu0 0.0
        %670 = vmatprep.subr.mxu0 0.0
        %671 = vmatpush1.msra.mxu0 0.0
        %672 = vmatprep.subr.mxu0 0.0
        %673 = vmatpush1.msra.mxu0 0.0
        %674 = vmatprep.subr.mxu0 0.0
        %675 = vmatpush1.msra.mxu0 0.0
        %676 = vmatprep.subr.mxu0 0.0
        %677 = vmatpush1.msra.mxu0 0.0
        %678 = vmatprep.subr.mxu0 0.0
        %679 = vmatpush1.msra.mxu0 0.0
        %680 = vmatprep.subr.mxu0 0.0
        %v681 = vand.u32 %v562, 4294901760
        %v682 = vsub.f32 %v562, %v681
        %v683 = vand.u32 %v682, 4294901760
        %v684 = vsub.f32 %v682, %v683
        %v685 = vand.u32 %v684, 4294901760
        %686 = vmatpush1.msra.mxu0 %v685
        %687 = vmatprep.subr.mxu0 0.0
        %688 = vmatpush2.msra.mxu0 0.0
        %689 = vmatprep.subr.mxu0 0.0
        %690 = vmatpush2.msra.mxu0 0.0
        %691 = vmatprep.subr.mxu0 0.0
        %692 = vmatpush2.msra.mxu0 0.0
        %693 = vmatprep.subr.mxu0 0.0
        %694 = vmatpush2.msra.mxu0 0.0
        %695 = vmatprep.subr.mxu0 0.0
        %696 = vmatpush2.msra.mxu0 0.0
        %697 = vmatprep.subr.mxu0 0.0
        %698 = vmatpush2.msra.mxu0 0.0
        %699 = vmatprep.subr.mxu0 0.0
        %700 = vmatpush2.msra.mxu0 0.0
        %701 = vmatprep.subr.mxu0 0.0
        %702 = vmatpush2.msra.mxu0 0.0
        %703 = vmatprep.subr.mxu0 0.0
        %704 = vmatpush2.msra.mxu0 0.0
        %705 = vmatprep.subr.mxu0 0.0
        %706 = vmatpush2.msra.mxu0 0.0
        %707 = vmatprep.subr.mxu0 0.0
        %708 = vmatpush2.msra.mxu0 0.0
        %709 = vmatprep.subr.mxu0 0.0
        %710 = vmatpush2.msra.mxu0 0.0
        %711 = vmatprep.subr.mxu0 0.0
        %712 = vmatpush2.msra.mxu0 0.0
        %713 = vmatprep.subr.mxu0 0.0
        %714 = vmatpush2.msra.mxu0 0.0
        %715 = vmatprep.subr.mxu0 0.0
        %716 = vmatpush2.msra.mxu0 0.0
        %717 = vmatprep.subr.mxu0 0.0
        %718 = vmatpush2.msra.mxu0 0.0
        %719 = vmatprep.mubr.f32.mxu0 0.0
        %v720 = vand.u32 %v555, 4294901760
        %721 = vmatmul.mubr.f32.gmra.mxu0 %v720
        %v722 = vpop.f32.mrf.mxu0
        %v723 = vadd.f32 %v637, %v722
        %v724 = vpop.f32.mrf.mxu0
        %725 = vmatprep.mubr.f32.mxu0 0.0
        %v726 = vand.u32 %v558, 4294901760
        %727 = vmatmul.mubr.f32.gmra.mxu0 %v726
        %v728 = vpop.f32.mrf.mxu0
        %v729 = vadd.f32 %v647, %v728
        %v730 = vpop.f32.mrf.mxu0
        %731 = vdwg.mxu0
        %732 = vmatprep.subr.mxu0 0.0
        %733 = vmatpush1.msra.mxu0 0.0
        %734 = vmatprep.subr.mxu0 0.0
        %735 = vmatpush1.msra.mxu0 0.0
        %736 = vmatprep.subr.mxu0 0.0
        %737 = vmatpush1.msra.mxu0 0.0
        %738 = vmatprep.subr.mxu0 0.0
        %739 = vmatpush1.msra.mxu0 0.0
        %740 = vmatprep.subr.mxu0 0.0
        %741 = vmatpush1.msra.mxu0 0.0
        %742 = vmatprep.subr.mxu0 0.0
        %743 = vmatpush1.msra.mxu0 0.0
        %744 = vmatprep.subr.mxu0 0.0
        %745 = vmatpush1.msra.mxu0 0.0
        %746 = vmatprep.subr.mxu0 0.0
        %747 = vmatpush1.msra.mxu0 0.0
        %748 = vmatprep.subr.mxu0 0.0
        %749 = vmatpush1.msra.mxu0 0.0
        %750 = vmatprep.subr.mxu0 0.0
        %751 = vmatpush1.msra.mxu0 0.0
        %752 = vmatprep.subr.mxu0 0.0
        %753 = vmatpush1.msra.mxu0 0.0
        %754 = vmatprep.subr.mxu0 0.0
        %755 = vmatpush1.msra.mxu0 0.0
        %756 = vmatprep.subr.mxu0 0.0
        %757 = vmatpush1.msra.mxu0 0.0
        %758 = vmatprep.subr.mxu0 0.0
        %759 = vmatpush1.msra.mxu0 0.0
        %760 = vmatprep.subr.mxu0 0.0
        %761 = vmatpush1.msra.mxu0 0.0
        %762 = vmatprep.subr.mxu0 0.0
        %v763 = vand.u32 %v562, 4294901760
        %v764 = vsub.f32 %v562, %v763
        %765 = vmatpush1.msra.mxu0 %v764
        %766 = vmatprep.subr.mxu0 0.0
        %767 = vmatpush2.msra.mxu0 0.0
        %768 = vmatprep.subr.mxu0 0.0
        %769 = vmatpush2.msra.mxu0 0.0
        %770 = vmatprep.subr.mxu0 0.0
        %771 = vmatpush2.msra.mxu0 0.0
        %772 = vmatprep.subr.mxu0 0.0
        %773 = vmatpush2.msra.mxu0 0.0
        %774 = vmatprep.subr.mxu0 0.0
        %775 = vmatpush2.msra.mxu0 0.0
        %776 = vmatprep.subr.mxu0 0.0
        %777 = vmatpush2.msra.mxu0 0.0
        %778 = vmatprep.subr.mxu0 0.0
        %779 = vmatpush2.msra.mxu0 0.0
        %780 = vmatprep.subr.mxu0 0.0
        %781 = vmatpush2.msra.mxu0 0.0
        %782 = vmatprep.subr.mxu0 0.0
        %783 = vmatpush2.msra.mxu0 0.0
        %784 = vmatprep.subr.mxu0 0.0
        %785 = vmatpush2.msra.mxu0 0.0
        %786 = vmatprep.subr.mxu0 0.0
        %787 = vmatpush2.msra.mxu0 0.0
        %788 = vmatprep.subr.mxu0 0.0
        %789 = vmatpush2.msra.mxu0 0.0
        %790 = vmatprep.subr.mxu0 0.0
        %791 = vmatpush2.msra.mxu0 0.0
        %792 = vmatprep.subr.mxu0 0.0
        %793 = vmatpush2.msra.mxu0 0.0
        %794 = vmatprep.subr.mxu0 0.0
        %795 = vmatpush2.msra.mxu0 0.0
        %796 = vmatprep.subr.mxu0 0.0
        %797 = vmatpush2.msra.mxu0 0.0
        %798 = vmatprep.mubr.f32.mxu0 0.0
        %v799 = vand.u32 %v555, 4294901760
        %v800 = vsub.f32 %v555, %v799
        %801 = vmatmul.mubr.f32.gmra.mxu0 %v800
        %v802 = vpop.f32.mrf.mxu0
        %v803 = vadd.f32 %v723, %v802
        %v804 = vpop.f32.mrf.mxu0
        %805 = vmatprep.mubr.f32.mxu0 0.0
        %v806 = vand.u32 %v558, 4294901760
        %v807 = vsub.f32 %v558, %v806
        %808 = vmatmul.mubr.f32.gmra.mxu0 %v807
        %v809 = vpop.f32.mrf.mxu0
        %v810 = vadd.f32 %v729, %v809
        %v811 = vpop.f32.mrf.mxu0
        %812 = vdwg.mxu0
        %813 = vmatprep.subr.mxu0 0.0
        %814 = vmatpush1.msra.mxu0 0.0
        %815 = vmatprep.subr.mxu0 0.0
        %816 = vmatpush1.msra.mxu0 0.0
        %817 = vmatprep.subr.mxu0 0.0
        %818 = vmatpush1.msra.mxu0 0.0
        %819 = vmatprep.subr.mxu0 0.0
        %820 = vmatpush1.msra.mxu0 0.0
        %821 = vmatprep.subr.mxu0 0.0
        %822 = vmatpush1.msra.mxu0 0.0
        %823 = vmatprep.subr.mxu0 0.0
        %824 = vmatpush1.msra.mxu0 0.0
        %825 = vmatprep.subr.mxu0 0.0
        %826 = vmatpush1.msra.mxu0 0.0
        %827 = vmatprep.subr.mxu0 0.0
        %828 = vmatpush1.msra.mxu0 0.0
        %829 = vmatprep.subr.mxu0 0.0
        %830 = vmatpush1.msra.mxu0 0.0
        %831 = vmatprep.subr.mxu0 0.0
        %832 = vmatpush1.msra.mxu0 0.0
        %833 = vmatprep.subr.mxu0 0.0
        %834 = vmatpush1.msra.mxu0 0.0
        %835 = vmatprep.subr.mxu0 0.0
        %836 = vmatpush1.msra.mxu0 0.0
        %837 = vmatprep.subr.mxu0 0.0
        %838 = vmatpush1.msra.mxu0 0.0
        %839 = vmatprep.subr.mxu0 0.0
        %840 = vmatpush1.msra.mxu0 0.0
        %841 = vmatprep.subr.mxu0 0.0
        %842 = vmatpush1.msra.mxu0 0.0
        %843 = vmatprep.subr.mxu0 0.0
        %v844 = vand.u32 %v562, 4294901760
        %845 = vmatpush1.msra.mxu0 %v844
        %846 = vmatprep.subr.mxu0 0.0
        %847 = vmatpush2.msra.mxu0 0.0
        %848 = vmatprep.subr.mxu0 0.0
        %849 = vmatpush2.msra.mxu0 0.0
        %850 = vmatprep.subr.mxu0 0.0
        %851 = vmatpush2.msra.mxu0 0.0
        %852 = vmatprep.subr.mxu0 0.0
        %853 = vmatpush2.msra.mxu0 0.0
        %854 = vmatprep.subr.mxu0 0.0
        %855 = vmatpush2.msra.mxu0 0.0
        %856 = vmatprep.subr.mxu0 0.0
        %857 = vmatpush2.msra.mxu0 0.0
        %858 = vmatprep.subr.mxu0 0.0
        %859 = vmatpush2.msra.mxu0 0.0
        %860 = vmatprep.subr.mxu0 0.0
        %861 = vmatpush2.msra.mxu0 0.0
        %862 = vmatprep.subr.mxu0 0.0
        %863 = vmatpush2.msra.mxu0 0.0
        %864 = vmatprep.subr.mxu0 0.0
        %865 = vmatpush2.msra.mxu0 0.0
        %866 = vmatprep.subr.mxu0 0.0
        %867 = vmatpush2.msra.mxu0 0.0
        %868 = vmatprep.subr.mxu0 0.0
        %869 = vmatpush2.msra.mxu0 0.0
        %870 = vmatprep.subr.mxu0 0.0
        %871 = vmatpush2.msra.mxu0 0.0
        %872 = vmatprep.subr.mxu0 0.0
        %873 = vmatpush2.msra.mxu0 0.0
        %874 = vmatprep.subr.mxu0 0.0
        %875 = vmatpush2.msra.mxu0 0.0
        %876 = vmatprep.subr.mxu0 0.0
        %877 = vmatpush2.msra.mxu0 0.0
        %878 = vmatprep.mubr.f32.mxu0 0.0
        %v879 = vand.u32 %v555, 4294901760
        %v880 = vsub.f32 %v555, %v879
        %v881 = vand.u32 %v880, 4294901760
        %882 = vmatmul.mubr.f32.gmra.mxu0 %v881
        %v883 = vpop.f32.mrf.mxu0
        %v884 = vadd.f32 %v803, %v883
        %v885 = vpop.f32.mrf.mxu0
        %886 = vmatprep.mubr.f32.mxu0 0.0
        %v887 = vand.u32 %v558, 4294901760
        %v888 = vsub.f32 %v558, %v887
        %v889 = vand.u32 %v888, 4294901760
        %890 = vmatmul.mubr.f32.gmra.mxu0 %v889
        %v891 = vpop.f32.mrf.mxu0
        %v892 = vadd.f32 %v810, %v891
        %v893 = vpop.f32.mrf.mxu0
        %894 = vdwg.mxu0
        %895 = vmatprep.subr.mxu0 0.0
        %896 = vmatpush1.msra.mxu0 0.0
        %897 = vmatprep.subr.mxu0 0.0
        %898 = vmatpush1.msra.mxu0 0.0
        %899 = vmatprep.subr.mxu0 0.0
        %900 = vmatpush1.msra.mxu0 0.0
        %901 = vmatprep.subr.mxu0 0.0
        %902 = vmatpush1.msra.mxu0 0.0
        %903 = vmatprep.subr.mxu0 0.0
        %904 = vmatpush1.msra.mxu0 0.0
        %905 = vmatprep.subr.mxu0 0.0
        %906 = vmatpush1.msra.mxu0 0.0
        %907 = vmatprep.subr.mxu0 0.0
        %908 = vmatpush1.msra.mxu0 0.0
        %909 = vmatprep.subr.mxu0 0.0
        %910 = vmatpush1.msra.mxu0 0.0
        %911 = vmatprep.subr.mxu0 0.0
        %912 = vmatpush1.msra.mxu0 0.0
        %913 = vmatprep.subr.mxu0 0.0
        %914 = vmatpush1.msra.mxu0 0.0
        %915 = vmatprep.subr.mxu0 0.0
        %916 = vmatpush1.msra.mxu0 0.0
        %917 = vmatprep.subr.mxu0 0.0
        %918 = vmatpush1.msra.mxu0 0.0
        %919 = vmatprep.subr.mxu0 0.0
        %920 = vmatpush1.msra.mxu0 0.0
        %921 = vmatprep.subr.mxu0 0.0
        %922 = vmatpush1.msra.mxu0 0.0
        %923 = vmatprep.subr.mxu0 0.0
        %924 = vmatpush1.msra.mxu0 0.0
        %925 = vmatprep.subr.mxu0 0.0
        %v926 = vand.u32 %v562, 4294901760
        %v927 = vsub.f32 %v562, %v926
        %v928 = vand.u32 %v927, 4294901760
        %929 = vmatpush1.msra.mxu0 %v928
        %930 = vmatprep.subr.mxu0 0.0
        %931 = vmatpush2.msra.mxu0 0.0
        %932 = vmatprep.subr.mxu0 0.0
        %933 = vmatpush2.msra.mxu0 0.0
        %934 = vmatprep.subr.mxu0 0.0
        %935 = vmatpush2.msra.mxu0 0.0
        %936 = vmatprep.subr.mxu0 0.0
        %937 = vmatpush2.msra.mxu0 0.0
        %938 = vmatprep.subr.mxu0 0.0
        %939 = vmatpush2.msra.mxu0 0.0
        %940 = vmatprep.subr.mxu0 0.0
        %941 = vmatpush2.msra.mxu0 0.0
        %942 = vmatprep.subr.mxu0 0.0
        %943 = vmatpush2.msra.mxu0 0.0
        %944 = vmatprep.subr.mxu0 0.0
        %945 = vmatpush2.msra.mxu0 0.0
        %946 = vmatprep.subr.mxu0 0.0
        %947 = vmatpush2.msra.mxu0 0.0
        %948 = vmatprep.subr.mxu0 0.0
        %949 = vmatpush2.msra.mxu0 0.0
        %950 = vmatprep.subr.mxu0 0.0
        %951 = vmatpush2.msra.mxu0 0.0
        %952 = vmatprep.subr.mxu0 0.0
        %953 = vmatpush2.msra.mxu0 0.0
        %954 = vmatprep.subr.mxu0 0.0
        %955 = vmatpush2.msra.mxu0 0.0
        %956 = vmatprep.subr.mxu0 0.0
        %957 = vmatpush2.msra.mxu0 0.0
        %958 = vmatprep.subr.mxu0 0.0
        %959 = vmatpush2.msra.mxu0 0.0
        %960 = vmatprep.subr.mxu0 0.0
        %961 = vmatpush2.msra.mxu0 0.0
        %962 = vmatprep.mubr.f32.mxu0 0.0
        %v963 = vand.u32 %v555, 4294901760
        %964 = vmatmul.mubr.f32.gmra.mxu0 %v963
        %v965 = vpop.f32.mrf.mxu0
        %v966 = vadd.f32 %v884, %v965
        %v967 = vpop.f32.mrf.mxu0
        %968 = vmatprep.mubr.f32.mxu0 0.0
        %v969 = vand.u32 %v558, 4294901760
        %970 = vmatmul.mubr.f32.gmra.mxu0 %v969
        %v971 = vpop.f32.mrf.mxu0
        %v972 = vadd.f32 %v892, %v971
        %v973 = vpop.f32.mrf.mxu0
        %974 = vdwg.mxu0
        %975 = vmatprep.subr.mxu0 0.0
        %976 = vmatpush1.msra.mxu0 0.0
        %977 = vmatprep.subr.mxu0 0.0
        %978 = vmatpush1.msra.mxu0 0.0
        %979 = vmatprep.subr.mxu0 0.0
        %980 = vmatpush1.msra.mxu0 0.0
        %981 = vmatprep.subr.mxu0 0.0
        %982 = vmatpush1.msra.mxu0 0.0
        %983 = vmatprep.subr.mxu0 0.0
        %984 = vmatpush1.msra.mxu0 0.0
        %985 = vmatprep.subr.mxu0 0.0
        %986 = vmatpush1.msra.mxu0 0.0
        %987 = vmatprep.subr.mxu0 0.0
        %988 = vmatpush1.msra.mxu0 0.0
        %989 = vmatprep.subr.mxu0 0.0
        %990 = vmatpush1.msra.mxu0 0.0
        %991 = vmatprep.subr.mxu0 0.0
        %992 = vmatpush1.msra.mxu0 0.0
        %993 = vmatprep.subr.mxu0 0.0
        %994 = vmatpush1.msra.mxu0 0.0
        %995 = vmatprep.subr.mxu0 0.0
        %996 = vmatpush1.msra.mxu0 0.0
        %997 = vmatprep.subr.mxu0 0.0
        %998 = vmatpush1.msra.mxu0 0.0
        %999 = vmatprep.subr.mxu0 0.0
        %1000 = vmatpush1.msra.mxu0 0.0
        %1001 = vmatprep.subr.mxu0 0.0
        %1002 = vmatpush1.msra.mxu0 0.0
        %1003 = vmatprep.subr.mxu0 0.0
        %1004 = vmatpush1.msra.mxu0 0.0
        %1005 = vmatprep.subr.mxu0 0.0
        %v1006 = vand.u32 %v562, 4294901760
        %1007 = vmatpush1.msra.mxu0 %v1006
        %1008 = vmatprep.subr.mxu0 0.0
        %1009 = vmatpush2.msra.mxu0 0.0
        %1010 = vmatprep.subr.mxu0 0.0
        %1011 = vmatpush2.msra.mxu0 0.0
        %1012 = vmatprep.subr.mxu0 0.0
        %1013 = vmatpush2.msra.mxu0 0.0
        %1014 = vmatprep.subr.mxu0 0.0
        %1015 = vmatpush2.msra.mxu0 0.0
        %1016 = vmatprep.subr.mxu0 0.0
        %1017 = vmatpush2.msra.mxu0 0.0
        %1018 = vmatprep.subr.mxu0 0.0
        %1019 = vmatpush2.msra.mxu0 0.0
        %1020 = vmatprep.subr.mxu0 0.0
        %1021 = vmatpush2.msra.mxu0 0.0
        %1022 = vmatprep.subr.mxu0 0.0
        %1023 = vmatpush2.msra.mxu0 0.0
        %1024 = vmatprep.subr.mxu0 0.0
        %1025 = vmatpush2.msra.mxu0 0.0
        %1026 = vmatprep.subr.mxu0 0.0
        %1027 = vmatpush2.msra.mxu0 0.0
        %1028 = vmatprep.subr.mxu0 0.0
        %1029 = vmatpush2.msra.mxu0 0.0
        %1030 = vmatprep.subr.mxu0 0.0
        %1031 = vmatpush2.msra.mxu0 0.0
        %1032 = vmatprep.subr.mxu0 0.0
        %1033 = vmatpush2.msra.mxu0 0.0
        %1034 = vmatprep.subr.mxu0 0.0
        %1035 = vmatpush2.msra.mxu0 0.0
        %1036 = vmatprep.subr.mxu0 0.0
        %1037 = vmatpush2.msra.mxu0 0.0
        %1038 = vmatprep.subr.mxu0 0.0
        %1039 = vmatpush2.msra.mxu0 0.0
        %1040 = vmatprep.mubr.f32.mxu0 0.0
        %v1041 = vand.u32 %v555, 4294901760
        %1042 = vmatmul.mubr.f32.gmra.mxu0 %v1041
        %v1043 = vpop.f32.mrf.mxu0
        %v1044 = vadd.f32 %v966, %v1043
        %v1045 = vpop.f32.mrf.mxu0
        %1046 = vmatprep.mubr.f32.mxu0 0.0
        %v1047 = vand.u32 %v558, 4294901760
        %1048 = vmatmul.mubr.f32.gmra.mxu0 %v1047
        %v1049 = vpop.f32.mrf.mxu0
        %v1050 = vadd.f32 %v972, %v1049
        %v1051 = vpop.f32.mrf.mxu0
        %1052 = vdwg.mxu0
        %v1053 = vld [vmem:[#allocation3] sm:$0xf]
        %v1055 = vsel %vm560, %v1053, 0
        %1057 = vmatprep.subr.mxu0 0.0
        %1058 = vmatpush1.msra.mxu0 0.0
        %1059 = vmatprep.subr.mxu0 0.0
        %1060 = vmatpush1.msra.mxu0 0.0
        %1061 = vmatprep.subr.mxu0 0.0
        %1062 = vmatpush1.msra.mxu0 0.0
        %1063 = vmatprep.subr.mxu0 0.0
        %1064 = vmatpush1.msra.mxu0 0.0
        %1065 = vmatprep.subr.mxu0 0.0
        %1066 = vmatpush1.msra.mxu0 0.0
        %1067 = vmatprep.subr.mxu0 0.0
        %1068 = vmatpush1.msra.mxu0 0.0
        %1069 = vmatprep.subr.mxu0 0.0
        %1070 = vmatpush1.msra.mxu0 0.0
        %1071 = vmatprep.subr.mxu0 0.0
        %1072 = vmatpush1.msra.mxu0 0.0
        %1073 = vmatprep.subr.mxu0 0.0
        %1074 = vmatpush1.msra.mxu0 0.0
        %1075 = vmatprep.subr.mxu0 0.0
        %1076 = vmatpush1.msra.mxu0 0.0
        %1077 = vmatprep.subr.mxu0 0.0
        %1078 = vmatpush1.msra.mxu0 0.0
        %1079 = vmatprep.subr.mxu0 0.0
        %1080 = vmatpush1.msra.mxu0 0.0
        %1081 = vmatprep.subr.mxu0 0.0
        %1082 = vmatpush1.msra.mxu0 0.0
        %1083 = vmatprep.subr.mxu0 0.0
        %1084 = vmatpush1.msra.mxu0 0.0
        %1085 = vmatprep.subr.mxu0 0.0
        %1086 = vmatpush1.msra.mxu0 0.0
        %1087 = vmatprep.subr.mxu0 0.0
        %v1088 = vand.u32 %v1055, 4294901760
        %1089 = vmatpush1.msra.mxu0 %v1088
        %1090 = vmatprep.subr.mxu0 0.0
        %1091 = vmatpush2.msra.mxu0 0.0
        %1092 = vmatprep.subr.mxu0 0.0
        %1093 = vmatpush2.msra.mxu0 0.0
        %1094 = vmatprep.subr.mxu0 0.0
        %1095 = vmatpush2.msra.mxu0 0.0
        %1096 = vmatprep.subr.mxu0 0.0
        %1097 = vmatpush2.msra.mxu0 0.0
        %1098 = vmatprep.subr.mxu0 0.0
        %1099 = vmatpush2.msra.mxu0 0.0
        %1100 = vmatprep.subr.mxu0 0.0
        %1101 = vmatpush2.msra.mxu0 0.0
        %1102 = vmatprep.subr.mxu0 0.0
        %1103 = vmatpush2.msra.mxu0 0.0
        %1104 = vmatprep.subr.mxu0 0.0
        %1105 = vmatpush2.msra.mxu0 0.0
        %1106 = vmatprep.subr.mxu0 0.0
        %1107 = vmatpush2.msra.mxu0 0.0
        %1108 = vmatprep.subr.mxu0 0.0
        %1109 = vmatpush2.msra.mxu0 0.0
        %1110 = vmatprep.subr.mxu0 0.0
        %1111 = vmatpush2.msra.mxu0 0.0
        %1112 = vmatprep.subr.mxu0 0.0
        %1113 = vmatpush2.msra.mxu0 0.0
        %1114 = vmatprep.subr.mxu0 0.0
        %1115 = vmatpush2.msra.mxu0 0.0
        %1116 = vmatprep.subr.mxu0 0.0
        %1117 = vmatpush2.msra.mxu0 0.0
        %1118 = vmatprep.subr.mxu0 0.0
        %1119 = vmatpush2.msra.mxu0 0.0
        %1120 = vmatprep.subr.mxu0 0.0
        %1121 = vmatpush2.msra.mxu0 0.0
        %1122 = vmatprep.mubr.f32.mxu0 0.0
        %v1123 = vand.u32 %v555, 4294901760
        %v1124 = vsub.f32 %v555, %v1123
        %v1125 = vand.u32 %v1124, 4294901760
        %v1126 = vsub.f32 %v1124, %v1125
        %v1127 = vand.u32 %v1126, 4294901760
        %1128 = vmatmul.mubr.f32.gmra.mxu0 %v1127
        %v1129 = vpop.f32.mrf.mxu0
        %v1130 = vadd.f32 0.0, %v1129
        %v1131 = vpop.f32.mrf.mxu0
        %1132 = vmatprep.mubr.f32.mxu0 0.0
        %v1133 = vand.u32 %v558, 4294901760
        %v1134 = vsub.f32 %v558, %v1133
        %v1135 = vand.u32 %v1134, 4294901760
        %v1136 = vsub.f32 %v1134, %v1135
        %v1137 = vand.u32 %v1136, 4294901760
        %1138 = vmatmul.mubr.f32.gmra.mxu0 %v1137
        %v1139 = vpop.f32.mrf.mxu0
        %v1140 = vadd.f32 0.0, %v1139
        %v1141 = vpop.f32.mrf.mxu0
        %1142 = vdwg.mxu0
        %1143 = vmatprep.subr.mxu0 0.0
        %1144 = vmatpush1.msra.mxu0 0.0
        %1145 = vmatprep.subr.mxu0 0.0
        %1146 = vmatpush1.msra.mxu0 0.0
        %1147 = vmatprep.subr.mxu0 0.0
        %1148 = vmatpush1.msra.mxu0 0.0
        %1149 = vmatprep.subr.mxu0 0.0
        %1150 = vmatpush1.msra.mxu0 0.0
        %1151 = vmatprep.subr.mxu0 0.0
        %1152 = vmatpush1.msra.mxu0 0.0
        %1153 = vmatprep.subr.mxu0 0.0
        %1154 = vmatpush1.msra.mxu0 0.0
        %1155 = vmatprep.subr.mxu0 0.0
        %1156 = vmatpush1.msra.mxu0 0.0
        %1157 = vmatprep.subr.mxu0 0.0
        %1158 = vmatpush1.msra.mxu0 0.0
        %1159 = vmatprep.subr.mxu0 0.0
        %1160 = vmatpush1.msra.mxu0 0.0
        %1161 = vmatprep.subr.mxu0 0.0
        %1162 = vmatpush1.msra.mxu0 0.0
        %1163 = vmatprep.subr.mxu0 0.0
        %1164 = vmatpush1.msra.mxu0 0.0
        %1165 = vmatprep.subr.mxu0 0.0
        %1166 = vmatpush1.msra.mxu0 0.0
        %1167 = vmatprep.subr.mxu0 0.0
        %1168 = vmatpush1.msra.mxu0 0.0
        %1169 = vmatprep.subr.mxu0 0.0
        %1170 = vmatpush1.msra.mxu0 0.0
        %1171 = vmatprep.subr.mxu0 0.0
        %1172 = vmatpush1.msra.mxu0 0.0
        %1173 = vmatprep.subr.mxu0 0.0
        %v1174 = vand.u32 %v1055, 4294901760
        %v1175 = vsub.f32 %v1055, %v1174
        %v1176 = vand.u32 %v1175, 4294901760
        %v1177 = vsub.f32 %v1175, %v1176
        %v1178 = vand.u32 %v1177, 4294901760
        %1179 = vmatpush1.msra.mxu0 %v1178
        %1180 = vmatprep.subr.mxu0 0.0
        %1181 = vmatpush2.msra.mxu0 0.0
        %1182 = vmatprep.subr.mxu0 0.0
        %1183 = vmatpush2.msra.mxu0 0.0
        %1184 = vmatprep.subr.mxu0 0.0
        %1185 = vmatpush2.msra.mxu0 0.0
        %1186 = vmatprep.subr.mxu0 0.0
        %1187 = vmatpush2.msra.mxu0 0.0
        %1188 = vmatprep.subr.mxu0 0.0
        %1189 = vmatpush2.msra.mxu0 0.0
        %1190 = vmatprep.subr.mxu0 0.0
        %1191 = vmatpush2.msra.mxu0 0.0
        %1192 = vmatprep.subr.mxu0 0.0
        %1193 = vmatpush2.msra.mxu0 0.0
        %1194 = vmatprep.subr.mxu0 0.0
        %1195 = vmatpush2.msra.mxu0 0.0
        %1196 = vmatprep.subr.mxu0 0.0
        %1197 = vmatpush2.msra.mxu0 0.0
        %1198 = vmatprep.subr.mxu0 0.0
        %1199 = vmatpush2.msra.mxu0 0.0
        %1200 = vmatprep.subr.mxu0 0.0
        %1201 = vmatpush2.msra.mxu0 0.0
        %1202 = vmatprep.subr.mxu0 0.0
        %1203 = vmatpush2.msra.mxu0 0.0
        %1204 = vmatprep.subr.mxu0 0.0
        %1205 = vmatpush2.msra.mxu0 0.0
        %1206 = vmatprep.subr.mxu0 0.0
        %1207 = vmatpush2.msra.mxu0 0.0
        %1208 = vmatprep.subr.mxu0 0.0
        %1209 = vmatpush2.msra.mxu0 0.0
        %1210 = vmatprep.subr.mxu0 0.0
        %1211 = vmatpush2.msra.mxu0 0.0
        %1212 = vmatprep.mubr.f32.mxu0 0.0
        %v1213 = vand.u32 %v555, 4294901760
        %1214 = vmatmul.mubr.f32.gmra.mxu0 %v1213
        %v1215 = vpop.f32.mrf.mxu0
        %v1216 = vadd.f32 %v1130, %v1215
        %v1217 = vpop.f32.mrf.mxu0
        %1218 = vmatprep.mubr.f32.mxu0 0.0
        %v1219 = vand.u32 %v558, 4294901760
        %1220 = vmatmul.mubr.f32.gmra.mxu0 %v1219
        %v1221 = vpop.f32.mrf.mxu0
        %v1222 = vadd.f32 %v1140, %v1221
        %v1223 = vpop.f32.mrf.mxu0
        %1224 = vdwg.mxu0
        %1225 = vmatprep.subr.mxu0 0.0
        %1226 = vmatpush1.msra.mxu0 0.0
        %1227 = vmatprep.subr.mxu0 0.0
        %1228 = vmatpush1.msra.mxu0 0.0
        %1229 = vmatprep.subr.mxu0 0.0
        %1230 = vmatpush1.msra.mxu0 0.0
        %1231 = vmatprep.subr.mxu0 0.0
        %1232 = vmatpush1.msra.mxu0 0.0
        %1233 = vmatprep.subr.mxu0 0.0
        %1234 = vmatpush1.msra.mxu0 0.0
        %1235 = vmatprep.subr.mxu0 0.0
        %1236 = vmatpush1.msra.mxu0 0.0
        %1237 = vmatprep.subr.mxu0 0.0
        %1238 = vmatpush1.msra.mxu0 0.0
        %1239 = vmatprep.subr.mxu0 0.0
        %1240 = vmatpush1.msra.mxu0 0.0
        %1241 = vmatprep.subr.mxu0 0.0
        %1242 = vmatpush1.msra.mxu0 0.0
        %1243 = vmatprep.subr.mxu0 0.0
        %1244 = vmatpush1.msra.mxu0 0.0
        %1245 = vmatprep.subr.mxu0 0.0
        %1246 = vmatpush1.msra.mxu0 0.0
        %1247 = vmatprep.subr.mxu0 0.0
        %1248 = vmatpush1.msra.mxu0 0.0
        %1249 = vmatprep.subr.mxu0 0.0
        %1250 = vmatpush1.msra.mxu0 0.0
        %1251 = vmatprep.subr.mxu0 0.0
        %1252 = vmatpush1.msra.mxu0 0.0
        %1253 = vmatprep.subr.mxu0 0.0
        %1254 = vmatpush1.msra.mxu0 0.0
        %1255 = vmatprep.subr.mxu0 0.0
        %v1256 = vand.u32 %v1055, 4294901760
        %v1257 = vsub.f32 %v1055, %v1256
        %1258 = vmatpush1.msra.mxu0 %v1257
        %1259 = vmatprep.subr.mxu0 0.0
        %1260 = vmatpush2.msra.mxu0 0.0
        %1261 = vmatprep.subr.mxu0 0.0
        %1262 = vmatpush2.msra.mxu0 0.0
        %1263 = vmatprep.subr.mxu0 0.0
        %1264 = vmatpush2.msra.mxu0 0.0
        %1265 = vmatprep.subr.mxu0 0.0
        %1266 = vmatpush2.msra.mxu0 0.0
        %1267 = vmatprep.subr.mxu0 0.0
        %1268 = vmatpush2.msra.mxu0 0.0
        %1269 = vmatprep.subr.mxu0 0.0
        %1270 = vmatpush2.msra.mxu0 0.0
        %1271 = vmatprep.subr.mxu0 0.0
        %1272 = vmatpush2.msra.mxu0 0.0
        %1273 = vmatprep.subr.mxu0 0.0
        %1274 = vmatpush2.msra.mxu0 0.0
        %1275 = vmatprep.subr.mxu0 0.0
        %1276 = vmatpush2.msra.mxu0 0.0
        %1277 = vmatprep.subr.mxu0 0.0
        %1278 = vmatpush2.msra.mxu0 0.0
        %1279 = vmatprep.subr.mxu0 0.0
        %1280 = vmatpush2.msra.mxu0 0.0
        %1281 = vmatprep.subr.mxu0 0.0
        %1282 = vmatpush2.msra.mxu0 0.0
        %1283 = vmatprep.subr.mxu0 0.0
        %1284 = vmatpush2.msra.mxu0 0.0
        %1285 = vmatprep.subr.mxu0 0.0
        %1286 = vmatpush2.msra.mxu0 0.0
        %1287 = vmatprep.subr.mxu0 0.0
        %1288 = vmatpush2.msra.mxu0 0.0
        %1289 = vmatprep.subr.mxu0 0.0
        %1290 = vmatpush2.msra.mxu0 0.0
        %1291 = vmatprep.mubr.f32.mxu0 0.0
        %v1292 = vand.u32 %v555, 4294901760
        %v1293 = vsub.f32 %v555, %v1292
        %1294 = vmatmul.mubr.f32.gmra.mxu0 %v1293
        %v1295 = vpop.f32.mrf.mxu0
        %v1296 = vadd.f32 %v1216, %v1295
        %v1297 = vpop.f32.mrf.mxu0
        %1298 = vmatprep.mubr.f32.mxu0 0.0
        %v1299 = vand.u32 %v558, 4294901760
        %v1300 = vsub.f32 %v558, %v1299
        %1301 = vmatmul.mubr.f32.gmra.mxu0 %v1300
        %v1302 = vpop.f32.mrf.mxu0
        %v1303 = vadd.f32 %v1222, %v1302
        %v1304 = vpop.f32.mrf.mxu0
        %1305 = vdwg.mxu0
        %1306 = vmatprep.subr.mxu0 0.0
        %1307 = vmatpush1.msra.mxu0 0.0
        %1308 = vmatprep.subr.mxu0 0.0
        %1309 = vmatpush1.msra.mxu0 0.0
        %1310 = vmatprep.subr.mxu0 0.0
        %1311 = vmatpush1.msra.mxu0 0.0
        %1312 = vmatprep.subr.mxu0 0.0
        %1313 = vmatpush1.msra.mxu0 0.0
        %1314 = vmatprep.subr.mxu0 0.0
        %1315 = vmatpush1.msra.mxu0 0.0
        %1316 = vmatprep.subr.mxu0 0.0
        %1317 = vmatpush1.msra.mxu0 0.0
        %1318 = vmatprep.subr.mxu0 0.0
        %1319 = vmatpush1.msra.mxu0 0.0
        %1320 = vmatprep.subr.mxu0 0.0
        %1321 = vmatpush1.msra.mxu0 0.0
        %1322 = vmatprep.subr.mxu0 0.0
        %1323 = vmatpush1.msra.mxu0 0.0
        %1324 = vmatprep.subr.mxu0 0.0
        %1325 = vmatpush1.msra.mxu0 0.0
        %1326 = vmatprep.subr.mxu0 0.0
        %1327 = vmatpush1.msra.mxu0 0.0
        %1328 = vmatprep.subr.mxu0 0.0
        %1329 = vmatpush1.msra.mxu0 0.0
        %1330 = vmatprep.subr.mxu0 0.0
        %1331 = vmatpush1.msra.mxu0 0.0
        %1332 = vmatprep.subr.mxu0 0.0
        %1333 = vmatpush1.msra.mxu0 0.0
        %1334 = vmatprep.subr.mxu0 0.0
        %1335 = vmatpush1.msra.mxu0 0.0
        %1336 = vmatprep.subr.mxu0 0.0
        %v1337 = vand.u32 %v1055, 4294901760
        %1338 = vmatpush1.msra.mxu0 %v1337
        %1339 = vmatprep.subr.mxu0 0.0
        %1340 = vmatpush2.msra.mxu0 0.0
        %1341 = vmatprep.subr.mxu0 0.0
        %1342 = vmatpush2.msra.mxu0 0.0
        %1343 = vmatprep.subr.mxu0 0.0
        %1344 = vmatpush2.msra.mxu0 0.0
        %1345 = vmatprep.subr.mxu0 0.0
        %1346 = vmatpush2.msra.mxu0 0.0
        %1347 = vmatprep.subr.mxu0 0.0
        %1348 = vmatpush2.msra.mxu0 0.0
        %1349 = vmatprep.subr.mxu0 0.0
        %1350 = vmatpush2.msra.mxu0 0.0
        %1351 = vmatprep.subr.mxu0 0.0
        %1352 = vmatpush2.msra.mxu0 0.0
        %1353 = vmatprep.subr.mxu0 0.0
        %1354 = vmatpush2.msra.mxu0 0.0
        %1355 = vmatprep.subr.mxu0 0.0
        %1356 = vmatpush2.msra.mxu0 0.0
        %1357 = vmatprep.subr.mxu0 0.0
        %1358 = vmatpush2.msra.mxu0 0.0
        %1359 = vmatprep.subr.mxu0 0.0
        %1360 = vmatpush2.msra.mxu0 0.0
        %1361 = vmatprep.subr.mxu0 0.0
        %1362 = vmatpush2.msra.mxu0 0.0
        %1363 = vmatprep.subr.mxu0 0.0
        %1364 = vmatpush2.msra.mxu0 0.0
        %1365 = vmatprep.subr.mxu0 0.0
        %1366 = vmatpush2.msra.mxu0 0.0
        %1367 = vmatprep.subr.mxu0 0.0
        %1368 = vmatpush2.msra.mxu0 0.0
        %1369 = vmatprep.subr.mxu0 0.0
        %1370 = vmatpush2.msra.mxu0 0.0
        %1371 = vmatprep.mubr.f32.mxu0 0.0
        %v1372 = vand.u32 %v555, 4294901760
        %v1373 = vsub.f32 %v555, %v1372
        %v1374 = vand.u32 %v1373, 4294901760
        %1375 = vmatmul.mubr.f32.gmra.mxu0 %v1374
        %v1376 = vpop.f32.mrf.mxu0
        %v1377 = vadd.f32 %v1296, %v1376
        %v1378 = vpop.f32.mrf.mxu0
        %1379 = vmatprep.mubr.f32.mxu0 0.0
        %v1380 = vand.u32 %v558, 4294901760
        %v1381 = vsub.f32 %v558, %v1380
        %v1382 = vand.u32 %v1381, 4294901760
        %1383 = vmatmul.mubr.f32.gmra.mxu0 %v1382
        %v1384 = vpop.f32.mrf.mxu0
        %v1385 = vadd.f32 %v1303, %v1384
        %v1386 = vpop.f32.mrf.mxu0
        %1387 = vdwg.mxu0
        %1388 = vmatprep.subr.mxu0 0.0
        %1389 = vmatpush1.msra.mxu0 0.0
        %1390 = vmatprep.subr.mxu0 0.0
        %1391 = vmatpush1.msra.mxu0 0.0
        %1392 = vmatprep.subr.mxu0 0.0
        %1393 = vmatpush1.msra.mxu0 0.0
        %1394 = vmatprep.subr.mxu0 0.0
        %1395 = vmatpush1.msra.mxu0 0.0
        %1396 = vmatprep.subr.mxu0 0.0
        %1397 = vmatpush1.msra.mxu0 0.0
        %1398 = vmatprep.subr.mxu0 0.0
        %1399 = vmatpush1.msra.mxu0 0.0
        %1400 = vmatprep.subr.mxu0 0.0
        %1401 = vmatpush1.msra.mxu0 0.0
        %1402 = vmatprep.subr.mxu0 0.0
        %1403 = vmatpush1.msra.mxu0 0.0
        %1404 = vmatprep.subr.mxu0 0.0
        %1405 = vmatpush1.msra.mxu0 0.0
        %1406 = vmatprep.subr.mxu0 0.0
        %1407 = vmatpush1.msra.mxu0 0.0
        %1408 = vmatprep.subr.mxu0 0.0
        %1409 = vmatpush1.msra.mxu0 0.0
        %1410 = vmatprep.subr.mxu0 0.0
        %1411 = vmatpush1.msra.mxu0 0.0
        %1412 = vmatprep.subr.mxu0 0.0
        %1413 = vmatpush1.msra.mxu0 0.0
        %1414 = vmatprep.subr.mxu0 0.0
        %1415 = vmatpush1.msra.mxu0 0.0
        %1416 = vmatprep.subr.mxu0 0.0
        %1417 = vmatpush1.msra.mxu0 0.0
        %1418 = vmatprep.subr.mxu0 0.0
        %v1419 = vand.u32 %v1055, 4294901760
        %v1420 = vsub.f32 %v1055, %v1419
        %v1421 = vand.u32 %v1420, 4294901760
        %1422 = vmatpush1.msra.mxu0 %v1421
        %1423 = vmatprep.subr.mxu0 0.0
        %1424 = vmatpush2.msra.mxu0 0.0
        %1425 = vmatprep.subr.mxu0 0.0
        %1426 = vmatpush2.msra.mxu0 0.0
        %1427 = vmatprep.subr.mxu0 0.0
        %1428 = vmatpush2.msra.mxu0 0.0
        %1429 = vmatprep.subr.mxu0 0.0
        %1430 = vmatpush2.msra.mxu0 0.0
        %1431 = vmatprep.subr.mxu0 0.0
        %1432 = vmatpush2.msra.mxu0 0.0
        %1433 = vmatprep.subr.mxu0 0.0
        %1434 = vmatpush2.msra.mxu0 0.0
        %1435 = vmatprep.subr.mxu0 0.0
        %1436 = vmatpush2.msra.mxu0 0.0
        %1437 = vmatprep.subr.mxu0 0.0
        %1438 = vmatpush2.msra.mxu0 0.0
        %1439 = vmatprep.subr.mxu0 0.0
        %1440 = vmatpush2.msra.mxu0 0.0
        %1441 = vmatprep.subr.mxu0 0.0
        %1442 = vmatpush2.msra.mxu0 0.0
        %1443 = vmatprep.subr.mxu0 0.0
        %1444 = vmatpush2.msra.mxu0 0.0
        %1445 = vmatprep.subr.mxu0 0.0
        %1446 = vmatpush2.msra.mxu0 0.0
        %1447 = vmatprep.subr.mxu0 0.0
        %1448 = vmatpush2.msra.mxu0 0.0
        %1449 = vmatprep.subr.mxu0 0.0
        %1450 = vmatpush2.msra.mxu0 0.0
        %1451 = vmatprep.subr.mxu0 0.0
        %1452 = vmatpush2.msra.mxu0 0.0
        %1453 = vmatprep.subr.mxu0 0.0
        %1454 = vmatpush2.msra.mxu0 0.0
        %1455 = vmatprep.mubr.f32.mxu0 0.0
        %v1456 = vand.u32 %v555, 4294901760
        %1457 = vmatmul.mubr.f32.gmra.mxu0 %v1456
        %v1458 = vpop.f32.mrf.mxu0
        %v1459 = vadd.f32 %v1377, %v1458
        %v1460 = vpop.f32.mrf.mxu0
        %1461 = vmatprep.mubr.f32.mxu0 0.0
        %v1462 = vand.u32 %v558, 4294901760
        %1463 = vmatmul.mubr.f32.gmra.mxu0 %v1462
        %v1464 = vpop.f32.mrf.mxu0
        %v1465 = vadd.f32 %v1385, %v1464
        %v1466 = vpop.f32.mrf.mxu0
        %1467 = vdwg.mxu0
        %1468 = vmatprep.subr.mxu0 0.0
        %1469 = vmatpush1.msra.mxu0 0.0
        %1470 = vmatprep.subr.mxu0 0.0
        %1471 = vmatpush1.msra.mxu0 0.0
        %1472 = vmatprep.subr.mxu0 0.0
        %1473 = vmatpush1.msra.mxu0 0.0
        %1474 = vmatprep.subr.mxu0 0.0
        %1475 = vmatpush1.msra.mxu0 0.0
        %1476 = vmatprep.subr.mxu0 0.0
        %1477 = vmatpush1.msra.mxu0 0.0
        %1478 = vmatprep.subr.mxu0 0.0
        %1479 = vmatpush1.msra.mxu0 0.0
        %1480 = vmatprep.subr.mxu0 0.0
        %1481 = vmatpush1.msra.mxu0 0.0
        %1482 = vmatprep.subr.mxu0 0.0
        %1483 = vmatpush1.msra.mxu0 0.0
        %1484 = vmatprep.subr.mxu0 0.0
        %1485 = vmatpush1.msra.mxu0 0.0
        %1486 = vmatprep.subr.mxu0 0.0
        %1487 = vmatpush1.msra.mxu0 0.0
        %1488 = vmatprep.subr.mxu0 0.0
        %1489 = vmatpush1.msra.mxu0 0.0
        %1490 = vmatprep.subr.mxu0 0.0
        %1491 = vmatpush1.msra.mxu0 0.0
        %1492 = vmatprep.subr.mxu0 0.0
        %1493 = vmatpush1.msra.mxu0 0.0
        %1494 = vmatprep.subr.mxu0 0.0
        %1495 = vmatpush1.msra.mxu0 0.0
        %1496 = vmatprep.subr.mxu0 0.0
        %1497 = vmatpush1.msra.mxu0 0.0
        %1498 = vmatprep.subr.mxu0 0.0
        %v1499 = vand.u32 %v1055, 4294901760
        %1500 = vmatpush1.msra.mxu0 %v1499
        %1501 = vmatprep.subr.mxu0 0.0
        %1502 = vmatpush2.msra.mxu0 0.0
        %1503 = vmatprep.subr.mxu0 0.0
        %1504 = vmatpush2.msra.mxu0 0.0
        %1505 = vmatprep.subr.mxu0 0.0
        %1506 = vmatpush2.msra.mxu0 0.0
        %1507 = vmatprep.subr.mxu0 0.0
        %1508 = vmatpush2.msra.mxu0 0.0
        %1509 = vmatprep.subr.mxu0 0.0
        %1510 = vmatpush2.msra.mxu0 0.0
        %1511 = vmatprep.subr.mxu0 0.0
        %1512 = vmatpush2.msra.mxu0 0.0
        %1513 = vmatprep.subr.mxu0 0.0
        %1514 = vmatpush2.msra.mxu0 0.0
        %1515 = vmatprep.subr.mxu0 0.0
        %1516 = vmatpush2.msra.mxu0 0.0
        %1517 = vmatprep.subr.mxu0 0.0
        %1518 = vmatpush2.msra.mxu0 0.0
        %1519 = vmatprep.subr.mxu0 0.0
        %1520 = vmatpush2.msra.mxu0 0.0
        %1521 = vmatprep.subr.mxu0 0.0
        %1522 = vmatpush2.msra.mxu0 0.0
        %1523 = vmatprep.subr.mxu0 0.0
        %1524 = vmatpush2.msra.mxu0 0.0
        %1525 = vmatprep.subr.mxu0 0.0
        %1526 = vmatpush2.msra.mxu0 0.0
        %1527 = vmatprep.subr.mxu0 0.0
        %1528 = vmatpush2.msra.mxu0 0.0
        %1529 = vmatprep.subr.mxu0 0.0
        %1530 = vmatpush2.msra.mxu0 0.0
        %1531 = vmatprep.subr.mxu0 0.0
        %1532 = vmatpush2.msra.mxu0 0.0
        %1533 = vmatprep.mubr.f32.mxu0 0.0
        %v1534 = vand.u32 %v555, 4294901760
        %1535 = vmatmul.mubr.f32.gmra.mxu0 %v1534
        %v1536 = vpop.f32.mrf.mxu0
        %v1537 = vadd.f32 %v1459, %v1536
        %v1538 = vpop.f32.mrf.mxu0
        %1539 = vmatprep.mubr.f32.mxu0 0.0
        %v1540 = vand.u32 %v558, 4294901760
        %1541 = vmatmul.mubr.f32.gmra.mxu0 %v1540
        %v1542 = vpop.f32.mrf.mxu0
        %v1543 = vadd.f32 %v1465, %v1542
        %v1544 = vpop.f32.mrf.mxu0
        %1545 = vdwg.mxu0
        %v1546 = vld [vmem:[#allocation4] sm:$0xf]
        %v1548 = vsel %vm560, %v1546, 0
        %1550 = vmatprep.subr.mxu0 0.0
        %1551 = vmatpush1.msra.mxu0 0.0
        %1552 = vmatprep.subr.mxu0 0.0
        %1553 = vmatpush1.msra.mxu0 0.0
        %1554 = vmatprep.subr.mxu0 0.0
        %1555 = vmatpush1.msra.mxu0 0.0
        %1556 = vmatprep.subr.mxu0 0.0
        %1557 = vmatpush1.msra.mxu0 0.0
        %1558 = vmatprep.subr.mxu0 0.0
        %1559 = vmatpush1.msra.mxu0 0.0
        %1560 = vmatprep.subr.mxu0 0.0
        %1561 = vmatpush1.msra.mxu0 0.0
        %1562 = vmatprep.subr.mxu0 0.0
        %1563 = vmatpush1.msra.mxu0 0.0
        %1564 = vmatprep.subr.mxu0 0.0
        %1565 = vmatpush1.msra.mxu0 0.0
        %1566 = vmatprep.subr.mxu0 0.0
        %1567 = vmatpush1.msra.mxu0 0.0
        %1568 = vmatprep.subr.mxu0 0.0
        %1569 = vmatpush1.msra.mxu0 0.0
        %1570 = vmatprep.subr.mxu0 0.0
        %1571 = vmatpush1.msra.mxu0 0.0
        %1572 = vmatprep.subr.mxu0 0.0
        %1573 = vmatpush1.msra.mxu0 0.0
        %1574 = vmatprep.subr.mxu0 0.0
        %1575 = vmatpush1.msra.mxu0 0.0
        %1576 = vmatprep.subr.mxu0 0.0
        %1577 = vmatpush1.msra.mxu0 0.0
        %1578 = vmatprep.subr.mxu0 0.0
        %1579 = vmatpush1.msra.mxu0 0.0
        %1580 = vmatprep.subr.mxu0 0.0
        %v1581 = vand.u32 %v1548, 4294901760
        %1582 = vmatpush1.msra.mxu0 %v1581
        %1583 = vmatprep.subr.mxu0 0.0
        %1584 = vmatpush2.msra.mxu0 0.0
        %1585 = vmatprep.subr.mxu0 0.0
        %1586 = vmatpush2.msra.mxu0 0.0
        %1587 = vmatprep.subr.mxu0 0.0
        %1588 = vmatpush2.msra.mxu0 0.0
        %1589 = vmatprep.subr.mxu0 0.0
        %1590 = vmatpush2.msra.mxu0 0.0
        %1591 = vmatprep.subr.mxu0 0.0
        %1592 = vmatpush2.msra.mxu0 0.0
        %1593 = vmatprep.subr.mxu0 0.0
        %1594 = vmatpush2.msra.mxu0 0.0
        %1595 = vmatprep.subr.mxu0 0.0
        %1596 = vmatpush2.msra.mxu0 0.0
        %1597 = vmatprep.subr.mxu0 0.0
        %1598 = vmatpush2.msra.mxu0 0.0
        %1599 = vmatprep.subr.mxu0 0.0
        %1600 = vmatpush2.msra.mxu0 0.0
        %1601 = vmatprep.subr.mxu0 0.0
        %1602 = vmatpush2.msra.mxu0 0.0
        %1603 = vmatprep.subr.mxu0 0.0
        %1604 = vmatpush2.msra.mxu0 0.0
        %1605 = vmatprep.subr.mxu0 0.0
        %1606 = vmatpush2.msra.mxu0 0.0
        %1607 = vmatprep.subr.mxu0 0.0
        %1608 = vmatpush2.msra.mxu0 0.0
        %1609 = vmatprep.subr.mxu0 0.0
        %1610 = vmatpush2.msra.mxu0 0.0
        %1611 = vmatprep.subr.mxu0 0.0
        %1612 = vmatpush2.msra.mxu0 0.0
        %1613 = vmatprep.subr.mxu0 0.0
        %1614 = vmatpush2.msra.mxu0 0.0
        %1615 = vmatprep.mubr.f32.mxu0 0.0
        %v1616 = vand.u32 %v555, 4294901760
        %v1617 = vsub.f32 %v555, %v1616
        %v1618 = vand.u32 %v1617, 4294901760
        %v1619 = vsub.f32 %v1617, %v1618
        %v1620 = vand.u32 %v1619, 4294901760
        %1621 = vmatmul.mubr.f32.gmra.mxu0 %v1620
        %v1622 = vpop.f32.mrf.mxu0
        %v1623 = vadd.f32 0.0, %v1622
        %v1624 = vpop.f32.mrf.mxu0
        %1625 = vmatprep.mubr.f32.mxu0 0.0
        %v1626 = vand.u32 %v558, 4294901760
        %v1627 = vsub.f32 %v558, %v1626
        %v1628 = vand.u32 %v1627, 4294901760
        %v1629 = vsub.f32 %v1627, %v1628
        %v1630 = vand.u32 %v1629, 4294901760
        %1631 = vmatmul.mubr.f32.gmra.mxu0 %v1630
        %v1632 = vpop.f32.mrf.mxu0
        %v1633 = vadd.f32 0.0, %v1632
        %v1634 = vpop.f32.mrf.mxu0
        %1635 = vdwg.mxu0
        %1636 = vmatprep.subr.mxu0 0.0
        %1637 = vmatpush1.msra.mxu0 0.0
        %1638 = vmatprep.subr.mxu0 0.0
        %1639 = vmatpush1.msra.mxu0 0.0
        %1640 = vmatprep.subr.mxu0 0.0
        %1641 = vmatpush1.msra.mxu0 0.0
        %1642 = vmatprep.subr.mxu0 0.0
        %1643 = vmatpush1.msra.mxu0 0.0
        %1644 = vmatprep.subr.mxu0 0.0
        %1645 = vmatpush1.msra.mxu0 0.0
        %1646 = vmatprep.subr.mxu0 0.0
        %1647 = vmatpush1.msra.mxu0 0.0
        %1648 = vmatprep.subr.mxu0 0.0
        %1649 = vmatpush1.msra.mxu0 0.0
        %1650 = vmatprep.subr.mxu0 0.0
        %1651 = vmatpush1.msra.mxu0 0.0
        %1652 = vmatprep.subr.mxu0 0.0
        %1653 = vmatpush1.msra.mxu0 0.0
        %1654 = vmatprep.subr.mxu0 0.0
        %1655 = vmatpush1.msra.mxu0 0.0
        %1656 = vmatprep.subr.mxu0 0.0
        %1657 = vmatpush1.msra.mxu0 0.0
        %1658 = vmatprep.subr.mxu0 0.0
        %1659 = vmatpush1.msra.mxu0 0.0
        %1660 = vmatprep.subr.mxu0 0.0
        %1661 = vmatpush1.msra.mxu0 0.0
        %1662 = vmatprep.subr.mxu0 0.0
        %1663 = vmatpush1.msra.mxu0 0.0
        %1664 = vmatprep.subr.mxu0 0.0
        %1665 = vmatpush1.msra.mxu0 0.0
        %1666 = vmatprep.subr.mxu0 0.0
        %v1667 = vand.u32 %v1548, 4294901760
        %v1668 = vsub.f32 %v1548, %v1667
        %v1669 = vand.u32 %v1668, 4294901760
        %v1670 = vsub.f32 %v1668, %v1669
        %v1671 = vand.u32 %v1670, 4294901760
        %1672 = vmatpush1.msra.mxu0 %v1671
        %1673 = vmatprep.subr.mxu0 0.0
        %1674 = vmatpush2.msra.mxu0 0.0
        %1675 = vmatprep.subr.mxu0 0.0
        %1676 = vmatpush2.msra.mxu0 0.0
        %1677 = vmatprep.subr.mxu0 0.0
        %1678 = vmatpush2.msra.mxu0 0.0
        %1679 = vmatprep.subr.mxu0 0.0
        %1680 = vmatpush2.msra.mxu0 0.0
        %1681 = vmatprep.subr.mxu0 0.0
        %1682 = vmatpush2.msra.mxu0 0.0
        %1683 = vmatprep.subr.mxu0 0.0
        %1684 = vmatpush2.msra.mxu0 0.0
        %1685 = vmatprep.subr.mxu0 0.0
        %1686 = vmatpush2.msra.mxu0 0.0
        %1687 = vmatprep.subr.mxu0 0.0
        %1688 = vmatpush2.msra.mxu0 0.0
        %1689 = vmatprep.subr.mxu0 0.0
        %1690 = vmatpush2.msra.mxu0 0.0
        %1691 = vmatprep.subr.mxu0 0.0
        %1692 = vmatpush2.msra.mxu0 0.0
        %1693 = vmatprep.subr.mxu0 0.0
        %1694 = vmatpush2.msra.mxu0 0.0
        %1695 = vmatprep.subr.mxu0 0.0
        %1696 = vmatpush2.msra.mxu0 0.0
        %1697 = vmatprep.subr.mxu0 0.0
        %1698 = vmatpush2.msra.mxu0 0.0
        %1699 = vmatprep.subr.mxu0 0.0
        %1700 = vmatpush2.msra.mxu0 0.0
        %1701 = vmatprep.subr.mxu0 0.0
        %1702 = vmatpush2.msra.mxu0 0.0
        %1703 = vmatprep.subr.mxu0 0.0
        %1704 = vmatpush2.msra.mxu0 0.0
        %1705 = vmatprep.mubr.f32.mxu0 0.0
        %v1706 = vand.u32 %v555, 4294901760
        %1707 = vmatmul.mubr.f32.gmra.mxu0 %v1706
        %v1708 = vpop.f32.mrf.mxu0
        %v1709 = vadd.f32 %v1623, %v1708
        %v1710 = vpop.f32.mrf.mxu0
        %1711 = vmatprep.mubr.f32.mxu0 0.0
        %v1712 = vand.u32 %v558, 4294901760
        %1713 = vmatmul.mubr.f32.gmra.mxu0 %v1712
        %v1714 = vpop.f32.mrf.mxu0
        %v1715 = vadd.f32 %v1633, %v1714
        %v1716 = vpop.f32.mrf.mxu0
        %1717 = vdwg.mxu0
        %1718 = vmatprep.subr.mxu0 0.0
        %1719 = vmatpush1.msra.mxu0 0.0
        %1720 = vmatprep.subr.mxu0 0.0
        %1721 = vmatpush1.msra.mxu0 0.0
        %1722 = vmatprep.subr.mxu0 0.0
        %1723 = vmatpush1.msra.mxu0 0.0
        %1724 = vmatprep.subr.mxu0 0.0
        %1725 = vmatpush1.msra.mxu0 0.0
        %1726 = vmatprep.subr.mxu0 0.0
        %1727 = vmatpush1.msra.mxu0 0.0
        %1728 = vmatprep.subr.mxu0 0.0
        %1729 = vmatpush1.msra.mxu0 0.0
        %1730 = vmatprep.subr.mxu0 0.0
        %1731 = vmatpush1.msra.mxu0 0.0
        %1732 = vmatprep.subr.mxu0 0.0
        %1733 = vmatpush1.msra.mxu0 0.0
        %1734 = vmatprep.subr.mxu0 0.0
        %1735 = vmatpush1.msra.mxu0 0.0
        %1736 = vmatprep.subr.mxu0 0.0
        %1737 = vmatpush1.msra.mxu0 0.0
        %1738 = vmatprep.subr.mxu0 0.0
        %1739 = vmatpush1.msra.mxu0 0.0
        %1740 = vmatprep.subr.mxu0 0.0
        %1741 = vmatpush1.msra.mxu0 0.0
        %1742 = vmatprep.subr.mxu0 0.0
        %1743 = vmatpush1.msra.mxu0 0.0
        %1744 = vmatprep.subr.mxu0 0.0
        %1745 = vmatpush1.msra.mxu0 0.0
        %1746 = vmatprep.subr.mxu0 0.0
        %1747 = vmatpush1.msra.mxu0 0.0
        %1748 = vmatprep.subr.mxu0 0.0
        %v1749 = vand.u32 %v1548, 4294901760
        %v1750 = vsub.f32 %v1548, %v1749
        %1751 = vmatpush1.msra.mxu0 %v1750
        %1752 = vmatprep.subr.mxu0 0.0
        %1753 = vmatpush2.msra.mxu0 0.0
        %1754 = vmatprep.subr.mxu0 0.0
        %1755 = vmatpush2.msra.mxu0 0.0
        %1756 = vmatprep.subr.mxu0 0.0
        %1757 = vmatpush2.msra.mxu0 0.0
        %1758 = vmatprep.subr.mxu0 0.0
        %1759 = vmatpush2.msra.mxu0 0.0
        %1760 = vmatprep.subr.mxu0 0.0
        %1761 = vmatpush2.msra.mxu0 0.0
        %1762 = vmatprep.subr.mxu0 0.0
        %1763 = vmatpush2.msra.mxu0 0.0
        %1764 = vmatprep.subr.mxu0 0.0
        %1765 = vmatpush2.msra.mxu0 0.0
        %1766 = vmatprep.subr.mxu0 0.0
        %1767 = vmatpush2.msra.mxu0 0.0
        %1768 = vmatprep.subr.mxu0 0.0
        %1769 = vmatpush2.msra.mxu0 0.0
        %1770 = vmatprep.subr.mxu0 0.0
        %1771 = vmatpush2.msra.mxu0 0.0
        %1772 = vmatprep.subr.mxu0 0.0
        %1773 = vmatpush2.msra.mxu0 0.0
        %1774 = vmatprep.subr.mxu0 0.0
        %1775 = vmatpush2.msra.mxu0 0.0
        %1776 = vmatprep.subr.mxu0 0.0
        %1777 = vmatpush2.msra.mxu0 0.0
        %1778 = vmatprep.subr.mxu0 0.0
        %1779 = vmatpush2.msra.mxu0 0.0
        %1780 = vmatprep.subr.mxu0 0.0
        %1781 = vmatpush2.msra.mxu0 0.0
        %1782 = vmatprep.subr.mxu0 0.0
        %1783 = vmatpush2.msra.mxu0 0.0
        %1784 = vmatprep.mubr.f32.mxu0 0.0
        %v1785 = vand.u32 %v555, 4294901760
        %v1786 = vsub.f32 %v555, %v1785
        %1787 = vmatmul.mubr.f32.gmra.mxu0 %v1786
        %v1788 = vpop.f32.mrf.mxu0
        %v1789 = vadd.f32 %v1709, %v1788
        %v1790 = vpop.f32.mrf.mxu0
        %1791 = vmatprep.mubr.f32.mxu0 0.0
        %v1792 = vand.u32 %v558, 4294901760
        %v1793 = vsub.f32 %v558, %v1792
        %1794 = vmatmul.mubr.f32.gmra.mxu0 %v1793
        %v1795 = vpop.f32.mrf.mxu0
        %v1796 = vadd.f32 %v1715, %v1795
        %v1797 = vpop.f32.mrf.mxu0
        %1798 = vdwg.mxu0
        %1799 = vmatprep.subr.mxu0 0.0
        %1800 = vmatpush1.msra.mxu0 0.0
        %1801 = vmatprep.subr.mxu0 0.0
        %1802 = vmatpush1.msra.mxu0 0.0
        %1803 = vmatprep.subr.mxu0 0.0
        %1804 = vmatpush1.msra.mxu0 0.0
        %1805 = vmatprep.subr.mxu0 0.0
        %1806 = vmatpush1.msra.mxu0 0.0
        %1807 = vmatprep.subr.mxu0 0.0
        %1808 = vmatpush1.msra.mxu0 0.0
        %1809 = vmatprep.subr.mxu0 0.0
        %1810 = vmatpush1.msra.mxu0 0.0
        %1811 = vmatprep.subr.mxu0 0.0
        %1812 = vmatpush1.msra.mxu0 0.0
        %1813 = vmatprep.subr.mxu0 0.0
        %1814 = vmatpush1.msra.mxu0 0.0
        %1815 = vmatprep.subr.mxu0 0.0
        %1816 = vmatpush1.msra.mxu0 0.0
        %1817 = vmatprep.subr.mxu0 0.0
        %1818 = vmatpush1.msra.mxu0 0.0
        %1819 = vmatprep.subr.mxu0 0.0
        %1820 = vmatpush1.msra.mxu0 0.0
        %1821 = vmatprep.subr.mxu0 0.0
        %1822 = vmatpush1.msra.mxu0 0.0
        %1823 = vmatprep.subr.mxu0 0.0
        %1824 = vmatpush1.msra.mxu0 0.0
        %1825 = vmatprep.subr.mxu0 0.0
        %1826 = vmatpush1.msra.mxu0 0.0
        %1827 = vmatprep.subr.mxu0 0.0
        %1828 = vmatpush1.msra.mxu0 0.0
        %1829 = vmatprep.subr.mxu0 0.0
        %v1830 = vand.u32 %v1548, 4294901760
        %1831 = vmatpush1.msra.mxu0 %v1830
        %1832 = vmatprep.subr.mxu0 0.0
        %1833 = vmatpush2.msra.mxu0 0.0
        %1834 = vmatprep.subr.mxu0 0.0
        %1835 = vmatpush2.msra.mxu0 0.0
        %1836 = vmatprep.subr.mxu0 0.0
        %1837 = vmatpush2.msra.mxu0 0.0
        %1838 = vmatprep.subr.mxu0 0.0
        %1839 = vmatpush2.msra.mxu0 0.0
        %1840 = vmatprep.subr.mxu0 0.0
        %1841 = vmatpush2.msra.mxu0 0.0
        %1842 = vmatprep.subr.mxu0 0.0
        %1843 = vmatpush2.msra.mxu0 0.0
        %1844 = vmatprep.subr.mxu0 0.0
        %1845 = vmatpush2.msra.mxu0 0.0
        %1846 = vmatprep.subr.mxu0 0.0
        %1847 = vmatpush2.msra.mxu0 0.0
        %1848 = vmatprep.subr.mxu0 0.0
        %1849 = vmatpush2.msra.mxu0 0.0
        %1850 = vmatprep.subr.mxu0 0.0
        %1851 = vmatpush2.msra.mxu0 0.0
        %1852 = vmatprep.subr.mxu0 0.0
        %1853 = vmatpush2.msra.mxu0 0.0
        %1854 = vmatprep.subr.mxu0 0.0
        %1855 = vmatpush2.msra.mxu0 0.0
        %1856 = vmatprep.subr.mxu0 0.0
        %1857 = vmatpush2.msra.mxu0 0.0
        %1858 = vmatprep.subr.mxu0 0.0
        %1859 = vmatpush2.msra.mxu0 0.0
        %1860 = vmatprep.subr.mxu0 0.0
        %1861 = vmatpush2.msra.mxu0 0.0
        %1862 = vmatprep.subr.mxu0 0.0
        %1863 = vmatpush2.msra.mxu0 0.0
        %1864 = vmatprep.mubr.f32.mxu0 0.0
        %v1865 = vand.u32 %v555, 4294901760
        %v1866 = vsub.f32 %v555, %v1865
        %v1867 = vand.u32 %v1866, 4294901760
        %1868 = vmatmul.mubr.f32.gmra.mxu0 %v1867
        %v1869 = vpop.f32.mrf.mxu0
        %v1870 = vadd.f32 %v1789, %v1869
        %v1871 = vpop.f32.mrf.mxu0
        %1872 = vmatprep.mubr.f32.mxu0 0.0
        %v1873 = vand.u32 %v558, 4294901760
        %v1874 = vsub.f32 %v558, %v1873
        %v1875 = vand.u32 %v1874, 4294901760
        %1876 = vmatmul.mubr.f32.gmra.mxu0 %v1875
        %v1877 = vpop.f32.mrf.mxu0
        %v1878 = vadd.f32 %v1796, %v1877
        %v1879 = vpop.f32.mrf.mxu0
        %1880 = vdwg.mxu0
        %1881 = vmatprep.subr.mxu0 0.0
        %1882 = vmatpush1.msra.mxu0 0.0
        %1883 = vmatprep.subr.mxu0 0.0
        %1884 = vmatpush1.msra.mxu0 0.0
        %1885 = vmatprep.subr.mxu0 0.0
        %1886 = vmatpush1.msra.mxu0 0.0
        %1887 = vmatprep.subr.mxu0 0.0
        %1888 = vmatpush1.msra.mxu0 0.0
        %1889 = vmatprep.subr.mxu0 0.0
        %1890 = vmatpush1.msra.mxu0 0.0
        %1891 = vmatprep.subr.mxu0 0.0
        %1892 = vmatpush1.msra.mxu0 0.0
        %1893 = vmatprep.subr.mxu0 0.0
        %1894 = vmatpush1.msra.mxu0 0.0
        %1895 = vmatprep.subr.mxu0 0.0
        %1896 = vmatpush1.msra.mxu0 0.0
        %1897 = vmatprep.subr.mxu0 0.0
        %1898 = vmatpush1.msra.mxu0 0.0
        %1899 = vmatprep.subr.mxu0 0.0
        %1900 = vmatpush1.msra.mxu0 0.0
        %1901 = vmatprep.subr.mxu0 0.0
        %1902 = vmatpush1.msra.mxu0 0.0
        %1903 = vmatprep.subr.mxu0 0.0
        %1904 = vmatpush1.msra.mxu0 0.0
        %1905 = vmatprep.subr.mxu0 0.0
        %1906 = vmatpush1.msra.mxu0 0.0
        %1907 = vmatprep.subr.mxu0 0.0
        %1908 = vmatpush1.msra.mxu0 0.0
        %1909 = vmatprep.subr.mxu0 0.0
        %1910 = vmatpush1.msra.mxu0 0.0
        %1911 = vmatprep.subr.mxu0 0.0
        %v1912 = vand.u32 %v1548, 4294901760
        %v1913 = vsub.f32 %v1548, %v1912
        %v1914 = vand.u32 %v1913, 4294901760
        %1915 = vmatpush1.msra.mxu0 %v1914
        %1916 = vmatprep.subr.mxu0 0.0
        %1917 = vmatpush2.msra.mxu0 0.0
        %1918 = vmatprep.subr.mxu0 0.0
        %1919 = vmatpush2.msra.mxu0 0.0
        %1920 = vmatprep.subr.mxu0 0.0
        %1921 = vmatpush2.msra.mxu0 0.0
        %1922 = vmatprep.subr.mxu0 0.0
        %1923 = vmatpush2.msra.mxu0 0.0
        %1924 = vmatprep.subr.mxu0 0.0
        %1925 = vmatpush2.msra.mxu0 0.0
        %1926 = vmatprep.subr.mxu0 0.0
        %1927 = vmatpush2.msra.mxu0 0.0
        %1928 = vmatprep.subr.mxu0 0.0
        %1929 = vmatpush2.msra.mxu0 0.0
        %1930 = vmatprep.subr.mxu0 0.0
        %1931 = vmatpush2.msra.mxu0 0.0
        %1932 = vmatprep.subr.mxu0 0.0
        %1933 = vmatpush2.msra.mxu0 0.0
        %1934 = vmatprep.subr.mxu0 0.0
        %1935 = vmatpush2.msra.mxu0 0.0
        %1936 = vmatprep.subr.mxu0 0.0
        %1937 = vmatpush2.msra.mxu0 0.0
        %1938 = vmatprep.subr.mxu0 0.0
        %1939 = vmatpush2.msra.mxu0 0.0
        %1940 = vmatprep.subr.mxu0 0.0
        %1941 = vmatpush2.msra.mxu0 0.0
        %1942 = vmatprep.subr.mxu0 0.0
        %1943 = vmatpush2.msra.mxu0 0.0
        %1944 = vmatprep.subr.mxu0 0.0
        %1945 = vmatpush2.msra.mxu0 0.0
        %1946 = vmatprep.subr.mxu0 0.0
        %1947 = vmatpush2.msra.mxu0 0.0
        %1948 = vmatprep.mubr.f32.mxu0 0.0
        %v1949 = vand.u32 %v555, 4294901760
        %1950 = vmatmul.mubr.f32.gmra.mxu0 %v1949
        %v1951 = vpop.f32.mrf.mxu0
        %v1952 = vadd.f32 %v1870, %v1951
        %v1953 = vpop.f32.mrf.mxu0
        %1954 = vmatprep.mubr.f32.mxu0 0.0
        %v1955 = vand.u32 %v558, 4294901760
        %1956 = vmatmul.mubr.f32.gmra.mxu0 %v1955
        %v1957 = vpop.f32.mrf.mxu0
        %v1958 = vadd.f32 %v1878, %v1957
        %v1959 = vpop.f32.mrf.mxu0
        %1960 = vdwg.mxu0
        %1961 = vmatprep.subr.mxu0 0.0
        %1962 = vmatpush1.msra.mxu0 0.0
        %1963 = vmatprep.subr.mxu0 0.0
        %1964 = vmatpush1.msra.mxu0 0.0
        %1965 = vmatprep.subr.mxu0 0.0
        %1966 = vmatpush1.msra.mxu0 0.0
        %1967 = vmatprep.subr.mxu0 0.0
        %1968 = vmatpush1.msra.mxu0 0.0
        %1969 = vmatprep.subr.mxu0 0.0
        %1970 = vmatpush1.msra.mxu0 0.0
        %1971 = vmatprep.subr.mxu0 0.0
        %1972 = vmatpush1.msra.mxu0 0.0
        %1973 = vmatprep.subr.mxu0 0.0
        %1974 = vmatpush1.msra.mxu0 0.0
        %1975 = vmatprep.subr.mxu0 0.0
        %1976 = vmatpush1.msra.mxu0 0.0
        %1977 = vmatprep.subr.mxu0 0.0
        %1978 = vmatpush1.msra.mxu0 0.0
        %1979 = vmatprep.subr.mxu0 0.0
        %1980 = vmatpush1.msra.mxu0 0.0
        %1981 = vmatprep.subr.mxu0 0.0
        %1982 = vmatpush1.msra.mxu0 0.0
        %1983 = vmatprep.subr.mxu0 0.0
        %1984 = vmatpush1.msra.mxu0 0.0
        %1985 = vmatprep.subr.mxu0 0.0
        %1986 = vmatpush1.msra.mxu0 0.0
        %1987 = vmatprep.subr.mxu0 0.0
        %1988 = vmatpush1.msra.mxu0 0.0
        %1989 = vmatprep.subr.mxu0 0.0
        %1990 = vmatpush1.msra.mxu0 0.0
        %1991 = vmatprep.subr.mxu0 0.0
        %v1992 = vand.u32 %v1548, 4294901760
        %1993 = vmatpush1.msra.mxu0 %v1992
        %1994 = vmatprep.subr.mxu0 0.0
        %1995 = vmatpush2.msra.mxu0 0.0
        %1996 = vmatprep.subr.mxu0 0.0
        %1997 = vmatpush2.msra.mxu0 0.0
        %1998 = vmatprep.subr.mxu0 0.0
        %1999 = vmatpush2.msra.mxu0 0.0
        %2000 = vmatprep.subr.mxu0 0.0
        %2001 = vmatpush2.msra.mxu0 0.0
        %2002 = vmatprep.subr.mxu0 0.0
        %2003 = vmatpush2.msra.mxu0 0.0
        %2004 = vmatprep.subr.mxu0 0.0
        %2005 = vmatpush2.msra.mxu0 0.0
        %2006 = vmatprep.subr.mxu0 0.0
        %2007 = vmatpush2.msra.mxu0 0.0
        %2008 = vmatprep.subr.mxu0 0.0
        %2009 = vmatpush2.msra.mxu0 0.0
        %2010 = vmatprep.subr.mxu0 0.0
        %2011 = vmatpush2.msra.mxu0 0.0
        %2012 = vmatprep.subr.mxu0 0.0
        %2013 = vmatpush2.msra.mxu0 0.0
        %2014 = vmatprep.subr.mxu0 0.0
        %2015 = vmatpush2.msra.mxu0 0.0
        %2016 = vmatprep.subr.mxu0 0.0
        %2017 = vmatpush2.msra.mxu0 0.0
        %2018 = vmatprep.subr.mxu0 0.0
        %2019 = vmatpush2.msra.mxu0 0.0
        %2020 = vmatprep.subr.mxu0 0.0
        %2021 = vmatpush2.msra.mxu0 0.0
        %2022 = vmatprep.subr.mxu0 0.0
        %2023 = vmatpush2.msra.mxu0 0.0
        %2024 = vmatprep.subr.mxu0 0.0
        %2025 = vmatpush2.msra.mxu0 0.0
        %2026 = vmatprep.mubr.f32.mxu0 0.0
        %v2027 = vand.u32 %v555, 4294901760
        %2028 = vmatmul.mubr.f32.gmra.mxu0 %v2027
        %v2029 = vpop.f32.mrf.mxu0
        %v2030 = vadd.f32 %v1952, %v2029
        %v2031 = vpop.f32.mrf.mxu0
        %2032 = vmatprep.mubr.f32.mxu0 0.0
        %v2033 = vand.u32 %v558, 4294901760
        %2034 = vmatmul.mubr.f32.gmra.mxu0 %v2033
        %v2035 = vpop.f32.mrf.mxu0
        %v2036 = vadd.f32 %v1958, %v2035
        %v2037 = vpop.f32.mrf.mxu0
        %2038 = vdwg.mxu0
        %v2039 = vmul.f32 %v1044, %v1044
        %v2040 = vmul.f32 %v1050, %v1050
        %v2041 = vmul.f32 %v1537, %v1537
        %v2042 = vmul.f32 %v1543, %v1543
        %v2043 = vadd.f32 %v2039, %v2041
        %v2044 = vadd.f32 %v2040, %v2042
        %v2045 = vmul.f32 %v2030, %v2030
        %v2046 = vmul.f32 %v2036, %v2036
        %v2047 = vadd.f32 %v2043, %v2045
        %v2048 = vadd.f32 %v2044, %v2046
        %v2049 = vrsqrt.pop %v2047
        %v2050 = vmul.f32 %v2047, %v2049
        %vm2051 = vcmp.eq.f32.partialorder %v2047, inf
        %v2052 = vsel %vm2051, %v2047, %v2050
        %vm2053 = vcmp.eq.f32.partialorder %v2047, 0.0
        %v2054 = vand.u32 %v2047, 2147483648
        %v2055 = vsel %vm2053, %v2054, %v2052
        %v2056 = vrsqrt.pop %v2048
        %v2057 = vmul.f32 %v2048, %v2056
        %vm2058 = vcmp.eq.f32.partialorder %v2048, inf
        %v2059 = vsel %vm2058, %v2048, %v2057
        %vm2060 = vcmp.eq.f32.partialorder %v2048, 0.0
        %v2061 = vand.u32 %v2048, 2147483648
        %v2062 = vsel %vm2060, %v2061, %v2059
        %s2063 = smul.f32 %s277, -0.5
        %v2064 = vstv %s2063
        %v2065 = vmul.f32 %v2064, %v2055
        %v2066 = vmul.f32 %v2064, %v2062
        %v2067 = vmul.f32 %v2065, 1.442695
        %v2068 = vpow.pop %v2067
        %v2069 = vmul.f32 %v2066, 1.442695
        %v2070 = vpow.pop %v2069
        %v2071 = vstv %s277
        %v2072 = vmul.f32 %v2055, %v2071
        %v2073 = vmul.f32 %v2062, %v2071
        %v2074 = vsub.f32 2.0, %v2072
        %v2075 = vsub.f32 2.0, %v2073
        %v2076 = vmul.f32 %v2074, %v2068
        %v2077 = vmul.f32 %v2075, %v2070
        %v2078 = vmul.f32 %v2076, %v2076
        %v2079 = vmul.f32 %v2077, %v2077
        %vm2080 = vcmask 130048
        %v2082 = vsel %vm2080, 1.0, 0
        %2084 = vmatprep.subr.mxu0 0.0
        %2085 = vmatpush1.msra.mxu0 0.0
        %2086 = vmatprep.subr.mxu0 0.0
        %2087 = vmatpush1.msra.mxu0 0.0
        %2088 = vmatprep.subr.mxu0 0.0
        %2089 = vmatpush1.msra.mxu0 0.0
        %2090 = vmatprep.subr.mxu0 0.0
        %2091 = vmatpush1.msra.mxu0 0.0
        %2092 = vmatprep.subr.mxu0 0.0
        %2093 = vmatpush1.msra.mxu0 0.0
        %2094 = vmatprep.subr.mxu0 0.0
        %2095 = vmatpush1.msra.mxu0 0.0
        %2096 = vmatprep.subr.mxu0 0.0
        %2097 = vmatpush1.msra.mxu0 0.0
        %2098 = vmatprep.subr.mxu0 0.0
        %2099 = vmatpush1.msra.mxu0 0.0
        %2100 = vmatprep.subr.mxu0 0.0
        %2101 = vmatpush1.msra.mxu0 0.0
        %2102 = vmatprep.subr.mxu0 0.0
        %2103 = vmatpush1.msra.mxu0 0.0
        %2104 = vmatprep.subr.mxu0 0.0
        %2105 = vmatpush1.msra.mxu0 0.0
        %2106 = vmatprep.subr.mxu0 0.0
        %2107 = vmatpush1.msra.mxu0 0.0
        %2108 = vmatprep.subr.mxu0 0.0
        %2109 = vmatpush1.msra.mxu0 0.0
        %2110 = vmatprep.subr.mxu0 0.0
        %2111 = vmatpush1.msra.mxu0 0.0
        %2112 = vmatprep.subr.mxu0 0.0
        %v2113 = vand.u32 %v2079, 4294901760
        %2114 = vmatpush1.msra.mxu0 %v2113
        %2115 = vmatprep.subr.mxu0 0.0
        %v2116 = vand.u32 %v2078, 4294901760
        %2117 = vmatpush1.msra.mxu0 %v2116
        %2118 = vmatprep.subr.mxu0 0.0
        %2119 = vmatpush2.msra.mxu0 0.0
        %2120 = vmatprep.subr.mxu0 0.0
        %2121 = vmatpush2.msra.mxu0 0.0
        %2122 = vmatprep.subr.mxu0 0.0
        %2123 = vmatpush2.msra.mxu0 0.0
        %2124 = vmatprep.subr.mxu0 0.0
        %2125 = vmatpush2.msra.mxu0 0.0
        %2126 = vmatprep.subr.mxu0 0.0
        %2127 = vmatpush2.msra.mxu0 0.0
        %2128 = vmatprep.subr.mxu0 0.0
        %2129 = vmatpush2.msra.mxu0 0.0
        %2130 = vmatprep.subr.mxu0 0.0
        %2131 = vmatpush2.msra.mxu0 0.0
        %2132 = vmatprep.subr.mxu0 0.0
        %2133 = vmatpush2.msra.mxu0 0.0
        %2134 = vmatprep.subr.mxu0 0.0
        %2135 = vmatpush2.msra.mxu0 0.0
        %2136 = vmatprep.subr.mxu0 0.0
        %2137 = vmatpush2.msra.mxu0 0.0
        %2138 = vmatprep.subr.mxu0 0.0
        %2139 = vmatpush2.msra.mxu0 0.0
        %2140 = vmatprep.subr.mxu0 0.0
        %2141 = vmatpush2.msra.mxu0 0.0
        %2142 = vmatprep.subr.mxu0 0.0
        %2143 = vmatpush2.msra.mxu0 0.0
        %2144 = vmatprep.subr.mxu0 0.0
        %2145 = vmatpush2.msra.mxu0 0.0
        %2146 = vmatprep.subr.mxu0 0.0
        %2147 = vmatpush2.msra.mxu0 0.0
        %2148 = vmatprep.subr.mxu0 0.0
        %2149 = vmatpush2.msra.mxu0 0.0
        %2150 = vmatprep.mubr.f32.mxu0 0.0
        %v2151 = vand.u32 %v2082, 4294901760
        %v2152 = vsub.f32 %v2082, %v2151
        %v2153 = vand.u32 %v2152, 4294901760
        %v2154 = vsub.f32 %v2152, %v2153
        %v2155 = vand.u32 %v2154, 4294901760
        %2156 = vmatmul.mubr.f32.gmra.mxu0 %v2155
        %v2157 = vpop.f32.mrf.mxu0
        %v2158 = vadd.f32 0.0, %v2157
        %v2159 = vpop.f32.mrf.mxu0
        %2160 = vdwg.mxu0
        %2161 = vmatprep.subr.mxu0 0.0
        %2162 = vmatpush1.msra.mxu0 0.0
        %2163 = vmatprep.subr.mxu0 0.0
        %2164 = vmatpush1.msra.mxu0 0.0
        %2165 = vmatprep.subr.mxu0 0.0
        %2166 = vmatpush1.msra.mxu0 0.0
        %2167 = vmatprep.subr.mxu0 0.0
        %2168 = vmatpush1.msra.mxu0 0.0
        %2169 = vmatprep.subr.mxu0 0.0
        %2170 = vmatpush1.msra.mxu0 0.0
        %2171 = vmatprep.subr.mxu0 0.0
        %2172 = vmatpush1.msra.mxu0 0.0
        %2173 = vmatprep.subr.mxu0 0.0
        %2174 = vmatpush1.msra.mxu0 0.0
        %2175 = vmatprep.subr.mxu0 0.0
        %2176 = vmatpush1.msra.mxu0 0.0
        %2177 = vmatprep.subr.mxu0 0.0
        %2178 = vmatpush1.msra.mxu0 0.0
        %2179 = vmatprep.subr.mxu0 0.0
        %2180 = vmatpush1.msra.mxu0 0.0
        %2181 = vmatprep.subr.mxu0 0.0
        %2182 = vmatpush1.msra.mxu0 0.0
        %2183 = vmatprep.subr.mxu0 0.0
        %2184 = vmatpush1.msra.mxu0 0.0
        %2185 = vmatprep.subr.mxu0 0.0
        %2186 = vmatpush1.msra.mxu0 0.0
        %2187 = vmatprep.subr.mxu0 0.0
        %2188 = vmatpush1.msra.mxu0 0.0
        %2189 = vmatprep.subr.mxu0 0.0
        %v2190 = vand.u32 %v2079, 4294901760
        %v2191 = vsub.f32 %v2079, %v2190
        %v2192 = vand.u32 %v2191, 4294901760
        %v2193 = vsub.f32 %v2191, %v2192
        %v2194 = vand.u32 %v2193, 4294901760
        %2195 = vmatpush1.msra.mxu0 %v2194
        %2196 = vmatprep.subr.mxu0 0.0
        %v2197 = vand.u32 %v2078, 4294901760
        %v2198 = vsub.f32 %v2078, %v2197
        %v2199 = vand.u32 %v2198, 4294901760
        %v2200 = vsub.f32 %v2198, %v2199
        %v2201 = vand.u32 %v2200, 4294901760
        %2202 = vmatpush1.msra.mxu0 %v2201
        %2203 = vmatprep.subr.mxu0 0.0
        %2204 = vmatpush2.msra.mxu0 0.0
        %2205 = vmatprep.subr.mxu0 0.0
        %2206 = vmatpush2.msra.mxu0 0.0
        %2207 = vmatprep.subr.mxu0 0.0
        %2208 = vmatpush2.msra.mxu0 0.0
        %2209 = vmatprep.subr.mxu0 0.0
        %2210 = vmatpush2.msra.mxu0 0.0
        %2211 = vmatprep.subr.mxu0 0.0
        %2212 = vmatpush2.msra.mxu0 0.0
        %2213 = vmatprep.subr.mxu0 0.0
        %2214 = vmatpush2.msra.mxu0 0.0
        %2215 = vmatprep.subr.mxu0 0.0
        %2216 = vmatpush2.msra.mxu0 0.0
        %2217 = vmatprep.subr.mxu0 0.0
        %2218 = vmatpush2.msra.mxu0 0.0
        %2219 = vmatprep.subr.mxu0 0.0
        %2220 = vmatpush2.msra.mxu0 0.0
        %2221 = vmatprep.subr.mxu0 0.0
        %2222 = vmatpush2.msra.mxu0 0.0
        %2223 = vmatprep.subr.mxu0 0.0
        %2224 = vmatpush2.msra.mxu0 0.0
        %2225 = vmatprep.subr.mxu0 0.0
        %2226 = vmatpush2.msra.mxu0 0.0
        %2227 = vmatprep.subr.mxu0 0.0
        %2228 = vmatpush2.msra.mxu0 0.0
        %2229 = vmatprep.subr.mxu0 0.0
        %2230 = vmatpush2.msra.mxu0 0.0
        %2231 = vmatprep.subr.mxu0 0.0
        %2232 = vmatpush2.msra.mxu0 0.0
        %2233 = vmatprep.subr.mxu0 0.0
        %2234 = vmatpush2.msra.mxu0 0.0
        %2235 = vmatprep.mubr.f32.mxu0 0.0
        %v2236 = vand.u32 %v2082, 4294901760
        %2237 = vmatmul.mubr.f32.gmra.mxu0 %v2236
        %v2238 = vpop.f32.mrf.mxu0
        %v2239 = vadd.f32 %v2158, %v2238
        %v2240 = vpop.f32.mrf.mxu0
        %2241 = vdwg.mxu0
        %2242 = vmatprep.subr.mxu0 0.0
        %2243 = vmatpush1.msra.mxu0 0.0
        %2244 = vmatprep.subr.mxu0 0.0
        %2245 = vmatpush1.msra.mxu0 0.0
        %2246 = vmatprep.subr.mxu0 0.0
        %2247 = vmatpush1.msra.mxu0 0.0
        %2248 = vmatprep.subr.mxu0 0.0
        %2249 = vmatpush1.msra.mxu0 0.0
        %2250 = vmatprep.subr.mxu0 0.0
        %2251 = vmatpush1.msra.mxu0 0.0
        %2252 = vmatprep.subr.mxu0 0.0
        %2253 = vmatpush1.msra.mxu0 0.0
        %2254 = vmatprep.subr.mxu0 0.0
        %2255 = vmatpush1.msra.mxu0 0.0
        %2256 = vmatprep.subr.mxu0 0.0
        %2257 = vmatpush1.msra.mxu0 0.0
        %2258 = vmatprep.subr.mxu0 0.0
        %2259 = vmatpush1.msra.mxu0 0.0
        %2260 = vmatprep.subr.mxu0 0.0
        %2261 = vmatpush1.msra.mxu0 0.0
        %2262 = vmatprep.subr.mxu0 0.0
        %2263 = vmatpush1.msra.mxu0 0.0
        %2264 = vmatprep.subr.mxu0 0.0
        %2265 = vmatpush1.msra.mxu0 0.0
        %2266 = vmatprep.subr.mxu0 0.0
        %2267 = vmatpush1.msra.mxu0 0.0
        %2268 = vmatprep.subr.mxu0 0.0
        %2269 = vmatpush1.msra.mxu0 0.0
        %2270 = vmatprep.subr.mxu0 0.0
        %v2271 = vand.u32 %v2079, 4294901760
        %v2272 = vsub.f32 %v2079, %v2271
        %2273 = vmatpush1.msra.mxu0 %v2272
        %2274 = vmatprep.subr.mxu0 0.0
        %v2275 = vand.u32 %v2078, 4294901760
        %v2276 = vsub.f32 %v2078, %v2275
        %2277 = vmatpush1.msra.mxu0 %v2276
        %2278 = vmatprep.subr.mxu0 0.0
        %2279 = vmatpush2.msra.mxu0 0.0
        %2280 = vmatprep.subr.mxu0 0.0
        %2281 = vmatpush2.msra.mxu0 0.0
        %2282 = vmatprep.subr.mxu0 0.0
        %2283 = vmatpush2.msra.mxu0 0.0
        %2284 = vmatprep.subr.mxu0 0.0
        %2285 = vmatpush2.msra.mxu0 0.0
        %2286 = vmatprep.subr.mxu0 0.0
        %2287 = vmatpush2.msra.mxu0 0.0
        %2288 = vmatprep.subr.mxu0 0.0
        %2289 = vmatpush2.msra.mxu0 0.0
        %2290 = vmatprep.subr.mxu0 0.0
        %2291 = vmatpush2.msra.mxu0 0.0
        %2292 = vmatprep.subr.mxu0 0.0
        %2293 = vmatpush2.msra.mxu0 0.0
        %2294 = vmatprep.subr.mxu0 0.0
        %2295 = vmatpush2.msra.mxu0 0.0
        %2296 = vmatprep.subr.mxu0 0.0
        %2297 = vmatpush2.msra.mxu0 0.0
        %2298 = vmatprep.subr.mxu0 0.0
        %2299 = vmatpush2.msra.mxu0 0.0
        %2300 = vmatprep.subr.mxu0 0.0
        %2301 = vmatpush2.msra.mxu0 0.0
        %2302 = vmatprep.subr.mxu0 0.0
        %2303 = vmatpush2.msra.mxu0 0.0
        %2304 = vmatprep.subr.mxu0 0.0
        %2305 = vmatpush2.msra.mxu0 0.0
        %2306 = vmatprep.subr.mxu0 0.0
        %2307 = vmatpush2.msra.mxu0 0.0
        %2308 = vmatprep.subr.mxu0 0.0
        %2309 = vmatpush2.msra.mxu0 0.0
        %2310 = vmatprep.mubr.f32.mxu0 0.0
        %v2311 = vand.u32 %v2082, 4294901760
        %v2312 = vsub.f32 %v2082, %v2311
        %2313 = vmatmul.mubr.f32.gmra.mxu0 %v2312
        %v2314 = vpop.f32.mrf.mxu0
        %v2315 = vadd.f32 %v2239, %v2314
        %v2316 = vpop.f32.mrf.mxu0
        %2317 = vdwg.mxu0
        %2318 = vmatprep.subr.mxu0 0.0
        %2319 = vmatpush1.msra.mxu0 0.0
        %2320 = vmatprep.subr.mxu0 0.0
        %2321 = vmatpush1.msra.mxu0 0.0
        %2322 = vmatprep.subr.mxu0 0.0
        %2323 = vmatpush1.msra.mxu0 0.0
        %2324 = vmatprep.subr.mxu0 0.0
        %2325 = vmatpush1.msra.mxu0 0.0
        %2326 = vmatprep.subr.mxu0 0.0
        %2327 = vmatpush1.msra.mxu0 0.0
        %2328 = vmatprep.subr.mxu0 0.0
        %2329 = vmatpush1.msra.mxu0 0.0
        %2330 = vmatprep.subr.mxu0 0.0
        %2331 = vmatpush1.msra.mxu0 0.0
        %2332 = vmatprep.subr.mxu0 0.0
        %2333 = vmatpush1.msra.mxu0 0.0
        %2334 = vmatprep.subr.mxu0 0.0
        %2335 = vmatpush1.msra.mxu0 0.0
        %2336 = vmatprep.subr.mxu0 0.0
        %2337 = vmatpush1.msra.mxu0 0.0
        %2338 = vmatprep.subr.mxu0 0.0
        %2339 = vmatpush1.msra.mxu0 0.0
        %2340 = vmatprep.subr.mxu0 0.0
        %2341 = vmatpush1.msra.mxu0 0.0
        %2342 = vmatprep.subr.mxu0 0.0
        %2343 = vmatpush1.msra.mxu0 0.0
        %2344 = vmatprep.subr.mxu0 0.0
        %2345 = vmatpush1.msra.mxu0 0.0
        %2346 = vmatprep.subr.mxu0 0.0
        %v2347 = vand.u32 %v2079, 4294901760
        %2348 = vmatpush1.msra.mxu0 %v2347
        %2349 = vmatprep.subr.mxu0 0.0
        %v2350 = vand.u32 %v2078, 4294901760
        %2351 = vmatpush1.msra.mxu0 %v2350
        %2352 = vmatprep.subr.mxu0 0.0
        %2353 = vmatpush2.msra.mxu0 0.0
        %2354 = vmatprep.subr.mxu0 0.0
        %2355 = vmatpush2.msra.mxu0 0.0
        %2356 = vmatprep.subr.mxu0 0.0
        %2357 = vmatpush2.msra.mxu0 0.0
        %2358 = vmatprep.subr.mxu0 0.0
        %2359 = vmatpush2.msra.mxu0 0.0
        %2360 = vmatprep.subr.mxu0 0.0
        %2361 = vmatpush2.msra.mxu0 0.0
        %2362 = vmatprep.subr.mxu0 0.0
        %2363 = vmatpush2.msra.mxu0 0.0
        %2364 = vmatprep.subr.mxu0 0.0
        %2365 = vmatpush2.msra.mxu0 0.0
        %2366 = vmatprep.subr.mxu0 0.0
        %2367 = vmatpush2.msra.mxu0 0.0
        %2368 = vmatprep.subr.mxu0 0.0
        %2369 = vmatpush2.msra.mxu0 0.0
        %2370 = vmatprep.subr.mxu0 0.0
        %2371 = vmatpush2.msra.mxu0 0.0
        %2372 = vmatprep.subr.mxu0 0.0
        %2373 = vmatpush2.msra.mxu0 0.0
        %2374 = vmatprep.subr.mxu0 0.0
        %2375 = vmatpush2.msra.mxu0 0.0
        %2376 = vmatprep.subr.mxu0 0.0
        %2377 = vmatpush2.msra.mxu0 0.0
        %2378 = vmatprep.subr.mxu0 0.0
        %2379 = vmatpush2.msra.mxu0 0.0
        %2380 = vmatprep.subr.mxu0 0.0
        %2381 = vmatpush2.msra.mxu0 0.0
        %2382 = vmatprep.subr.mxu0 0.0
        %2383 = vmatpush2.msra.mxu0 0.0
        %2384 = vmatprep.mubr.f32.mxu0 0.0
        %v2385 = vand.u32 %v2082, 4294901760
        %v2386 = vsub.f32 %v2082, %v2385
        %v2387 = vand.u32 %v2386, 4294901760
        %2388 = vmatmul.mubr.f32.gmra.mxu0 %v2387
        %v2389 = vpop.f32.mrf.mxu0
        %v2390 = vadd.f32 %v2315, %v2389
        %v2391 = vpop.f32.mrf.mxu0
        %2392 = vdwg.mxu0
        %2393 = vmatprep.subr.mxu0 0.0
        %2394 = vmatpush1.msra.mxu0 0.0
        %2395 = vmatprep.subr.mxu0 0.0
        %2396 = vmatpush1.msra.mxu0 0.0
        %2397 = vmatprep.subr.mxu0 0.0
        %2398 = vmatpush1.msra.mxu0 0.0
        %2399 = vmatprep.subr.mxu0 0.0
        %2400 = vmatpush1.msra.mxu0 0.0
        %2401 = vmatprep.subr.mxu0 0.0
        %2402 = vmatpush1.msra.mxu0 0.0
        %2403 = vmatprep.subr.mxu0 0.0
        %2404 = vmatpush1.msra.mxu0 0.0
        %2405 = vmatprep.subr.mxu0 0.0
        %2406 = vmatpush1.msra.mxu0 0.0
        %2407 = vmatprep.subr.mxu0 0.0
        %2408 = vmatpush1.msra.mxu0 0.0
        %2409 = vmatprep.subr.mxu0 0.0
        %2410 = vmatpush1.msra.mxu0 0.0
        %2411 = vmatprep.subr.mxu0 0.0
        %2412 = vmatpush1.msra.mxu0 0.0
        %2413 = vmatprep.subr.mxu0 0.0
        %2414 = vmatpush1.msra.mxu0 0.0
        %2415 = vmatprep.subr.mxu0 0.0
        %2416 = vmatpush1.msra.mxu0 0.0
        %2417 = vmatprep.subr.mxu0 0.0
        %2418 = vmatpush1.msra.mxu0 0.0
        %2419 = vmatprep.subr.mxu0 0.0
        %2420 = vmatpush1.msra.mxu0 0.0
        %2421 = vmatprep.subr.mxu0 0.0
        %v2422 = vand.u32 %v2079, 4294901760
        %v2423 = vsub.f32 %v2079, %v2422
        %v2424 = vand.u32 %v2423, 4294901760
        %2425 = vmatpush1.msra.mxu0 %v2424
        %2426 = vmatprep.subr.mxu0 0.0
        %v2427 = vand.u32 %v2078, 4294901760
        %v2428 = vsub.f32 %v2078, %v2427
        %v2429 = vand.u32 %v2428, 4294901760
        %2430 = vmatpush1.msra.mxu0 %v2429
        %2431 = vmatprep.subr.mxu0 0.0
        %2432 = vmatpush2.msra.mxu0 0.0
        %2433 = vmatprep.subr.mxu0 0.0
        %2434 = vmatpush2.msra.mxu0 0.0
        %2435 = vmatprep.subr.mxu0 0.0
        %2436 = vmatpush2.msra.mxu0 0.0
        %2437 = vmatprep.subr.mxu0 0.0
        %2438 = vmatpush2.msra.mxu0 0.0
        %2439 = vmatprep.subr.mxu0 0.0
        %2440 = vmatpush2.msra.mxu0 0.0
        %2441 = vmatprep.subr.mxu0 0.0
        %2442 = vmatpush2.msra.mxu0 0.0
        %2443 = vmatprep.subr.mxu0 0.0
        %2444 = vmatpush2.msra.mxu0 0.0
        %2445 = vmatprep.subr.mxu0 0.0
        %2446 = vmatpush2.msra.mxu0 0.0
        %2447 = vmatprep.subr.mxu0 0.0
        %2448 = vmatpush2.msra.mxu0 0.0
        %2449 = vmatprep.subr.mxu0 0.0
        %2450 = vmatpush2.msra.mxu0 0.0
        %2451 = vmatprep.subr.mxu0 0.0
        %2452 = vmatpush2.msra.mxu0 0.0
        %2453 = vmatprep.subr.mxu0 0.0
        %2454 = vmatpush2.msra.mxu0 0.0
        %2455 = vmatprep.subr.mxu0 0.0
        %2456 = vmatpush2.msra.mxu0 0.0
        %2457 = vmatprep.subr.mxu0 0.0
        %2458 = vmatpush2.msra.mxu0 0.0
        %2459 = vmatprep.subr.mxu0 0.0
        %2460 = vmatpush2.msra.mxu0 0.0
        %2461 = vmatprep.subr.mxu0 0.0
        %2462 = vmatpush2.msra.mxu0 0.0
        %2463 = vmatprep.mubr.f32.mxu0 0.0
        %v2464 = vand.u32 %v2082, 4294901760
        %2465 = vmatmul.mubr.f32.gmra.mxu0 %v2464
        %v2466 = vpop.f32.mrf.mxu0
        %v2467 = vadd.f32 %v2390, %v2466
        %v2468 = vpop.f32.mrf.mxu0
        %2469 = vdwg.mxu0
        %2470 = vmatprep.subr.mxu0 0.0
        %2471 = vmatpush1.msra.mxu0 0.0
        %2472 = vmatprep.subr.mxu0 0.0
        %2473 = vmatpush1.msra.mxu0 0.0
        %2474 = vmatprep.subr.mxu0 0.0
        %2475 = vmatpush1.msra.mxu0 0.0
        %2476 = vmatprep.subr.mxu0 0.0
        %2477 = vmatpush1.msra.mxu0 0.0
        %2478 = vmatprep.subr.mxu0 0.0
        %2479 = vmatpush1.msra.mxu0 0.0
        %2480 = vmatprep.subr.mxu0 0.0
        %2481 = vmatpush1.msra.mxu0 0.0
        %2482 = vmatprep.subr.mxu0 0.0
        %2483 = vmatpush1.msra.mxu0 0.0
        %2484 = vmatprep.subr.mxu0 0.0
        %2485 = vmatpush1.msra.mxu0 0.0
        %2486 = vmatprep.subr.mxu0 0.0
        %2487 = vmatpush1.msra.mxu0 0.0
        %2488 = vmatprep.subr.mxu0 0.0
        %2489 = vmatpush1.msra.mxu0 0.0
        %2490 = vmatprep.subr.mxu0 0.0
        %2491 = vmatpush1.msra.mxu0 0.0
        %2492 = vmatprep.subr.mxu0 0.0
        %2493 = vmatpush1.msra.mxu0 0.0
        %2494 = vmatprep.subr.mxu0 0.0
        %2495 = vmatpush1.msra.mxu0 0.0
        %2496 = vmatprep.subr.mxu0 0.0
        %2497 = vmatpush1.msra.mxu0 0.0
        %2498 = vmatprep.subr.mxu0 0.0
        %v2499 = vand.u32 %v2079, 4294901760
        %2500 = vmatpush1.msra.mxu0 %v2499
        %2501 = vmatprep.subr.mxu0 0.0
        %v2502 = vand.u32 %v2078, 4294901760
        %2503 = vmatpush1.msra.mxu0 %v2502
        %2504 = vmatprep.subr.mxu0 0.0
        %2505 = vmatpush2.msra.mxu0 0.0
        %2506 = vmatprep.subr.mxu0 0.0
        %2507 = vmatpush2.msra.mxu0 0.0
        %2508 = vmatprep.subr.mxu0 0.0
        %2509 = vmatpush2.msra.mxu0 0.0
        %2510 = vmatprep.subr.mxu0 0.0
        %2511 = vmatpush2.msra.mxu0 0.0
        %2512 = vmatprep.subr.mxu0 0.0
        %2513 = vmatpush2.msra.mxu0 0.0
        %2514 = vmatprep.subr.mxu0 0.0
        %2515 = vmatpush2.msra.mxu0 0.0
        %2516 = vmatprep.subr.mxu0 0.0
        %2517 = vmatpush2.msra.mxu0 0.0
        %2518 = vmatprep.subr.mxu0 0.0
        %2519 = vmatpush2.msra.mxu0 0.0
        %2520 = vmatprep.subr.mxu0 0.0
        %2521 = vmatpush2.msra.mxu0 0.0
        %2522 = vmatprep.subr.mxu0 0.0
        %2523 = vmatpush2.msra.mxu0 0.0
        %2524 = vmatprep.subr.mxu0 0.0
        %2525 = vmatpush2.msra.mxu0 0.0
        %2526 = vmatprep.subr.mxu0 0.0
        %2527 = vmatpush2.msra.mxu0 0.0
        %2528 = vmatprep.subr.mxu0 0.0
        %2529 = vmatpush2.msra.mxu0 0.0
        %2530 = vmatprep.subr.mxu0 0.0
        %2531 = vmatpush2.msra.mxu0 0.0
        %2532 = vmatprep.subr.mxu0 0.0
        %2533 = vmatpush2.msra.mxu0 0.0
        %2534 = vmatprep.subr.mxu0 0.0
        %2535 = vmatpush2.msra.mxu0 0.0
        %2536 = vmatprep.mubr.f32.mxu0 0.0
        %v2537 = vand.u32 %v2082, 4294901760
        %2538 = vmatmul.mubr.f32.gmra.mxu0 %v2537
        %v2539 = vpop.f32.mrf.mxu0
        %v2540 = vadd.f32 %v2467, %v2539
        %v2541 = vpop.f32.mrf.mxu0
        %2542 = vdwg.mxu0
        %v2543 = vmax.f32 %v2540, 1e-24
        %v2544 = vrsqrt.pop %v2543
        %v2545 = vlaneseq
        %v2546 = vshrl.u32 %v2545, 7
        %v2547 = vsub.s32 0, %v2546
        %v2548 = vrot.slane %v2544, %v2547
        %v2549 = vmul.f32 %v2076, %v2548
        %v2550 = vmul.f32 %v2077, %v2548
        %2551 = vst [vmem:[#allocation5] sm:$0xff] %v2549
        %2552 = vst [vmem:[#allocation5 + $0x8] sm:$0xff] %v2550
        %v2553 = vld [vmem:[#allocation2] sm:$0xf]
        %v2555 = vsel %vm553, %v550, 0
        %v2558 = vsel %vm553, %v551, 0
        %v2561 = vsel %vm560, %v2553, 0
        %2563 = vmatprep.subr.mxu0 0.0
        %2564 = vmatpush1.msra.mxu0 0.0
        %2565 = vmatprep.subr.mxu0 0.0
        %2566 = vmatpush1.msra.mxu0 0.0
        %2567 = vmatprep.subr.mxu0 0.0
        %2568 = vmatpush1.msra.mxu0 0.0
        %2569 = vmatprep.subr.mxu0 0.0
        %2570 = vmatpush1.msra.mxu0 0.0
        %2571 = vmatprep.subr.mxu0 0.0
        %2572 = vmatpush1.msra.mxu0 0.0
        %2573 = vmatprep.subr.mxu0 0.0
        %2574 = vmatpush1.msra.mxu0 0.0
        %2575 = vmatprep.subr.mxu0 0.0
        %2576 = vmatpush1.msra.mxu0 0.0
        %2577 = vmatprep.subr.mxu0 0.0
        %2578 = vmatpush1.msra.mxu0 0.0
        %2579 = vmatprep.subr.mxu0 0.0
        %2580 = vmatpush1.msra.mxu0 0.0
        %2581 = vmatprep.subr.mxu0 0.0
        %2582 = vmatpush1.msra.mxu0 0.0
        %2583 = vmatprep.subr.mxu0 0.0
        %2584 = vmatpush1.msra.mxu0 0.0
        %2585 = vmatprep.subr.mxu0 0.0
        %2586 = vmatpush1.msra.mxu0 0.0
        %2587 = vmatprep.subr.mxu0 0.0
        %2588 = vmatpush1.msra.mxu0 0.0
        %2589 = vmatprep.subr.mxu0 0.0
        %2590 = vmatpush1.msra.mxu0 0.0
        %2591 = vmatprep.subr.mxu0 0.0
        %2592 = vmatpush1.msra.mxu0 0.0
        %2593 = vmatprep.subr.mxu0 0.0
        %v2594 = vand.u32 %v2561, 4294901760
        %2595 = vmatpush1.msra.mxu0 %v2594
        %2596 = vmatprep.subr.mxu0 0.0
        %2597 = vmatpush2.msra.mxu0 0.0
        %2598 = vmatprep.subr.mxu0 0.0
        %2599 = vmatpush2.msra.mxu0 0.0
        %2600 = vmatprep.subr.mxu0 0.0
        %2601 = vmatpush2.msra.mxu0 0.0
        %2602 = vmatprep.subr.mxu0 0.0
        %2603 = vmatpush2.msra.mxu0 0.0
        %2604 = vmatprep.subr.mxu0 0.0
        %2605 = vmatpush2.msra.mxu0 0.0
        %2606 = vmatprep.subr.mxu0 0.0
        %2607 = vmatpush2.msra.mxu0 0.0
        %2608 = vmatprep.subr.mxu0 0.0
        %2609 = vmatpush2.msra.mxu0 0.0
        %2610 = vmatprep.subr.mxu0 0.0
        %2611 = vmatpush2.msra.mxu0 0.0
        %2612 = vmatprep.subr.mxu0 0.0
        %2613 = vmatpush2.msra.mxu0 0.0
        %2614 = vmatprep.subr.mxu0 0.0
        %2615 = vmatpush2.msra.mxu0 0.0
        %2616 = vmatprep.subr.mxu0 0.0
        %2617 = vmatpush2.msra.mxu0 0.0
        %2618 = vmatprep.subr.mxu0 0.0
        %2619 = vmatpush2.msra.mxu0 0.0
        %2620 = vmatprep.subr.mxu0 0.0
        %2621 = vmatpush2.msra.mxu0 0.0
        %2622 = vmatprep.subr.mxu0 0.0
        %2623 = vmatpush2.msra.mxu0 0.0
        %2624 = vmatprep.subr.mxu0 0.0
        %2625 = vmatpush2.msra.mxu0 0.0
        %2626 = vmatprep.subr.mxu0 0.0
        %2627 = vmatpush2.msra.mxu0 0.0
        %2628 = vmatprep.mubr.f32.mxu0 0.0
        %v2629 = vand.u32 %v2555, 4294901760
        %v2630 = vsub.f32 %v2555, %v2629
        %v2631 = vand.u32 %v2630, 4294901760
        %v2632 = vsub.f32 %v2630, %v2631
        %v2633 = vand.u32 %v2632, 4294901760
        %2634 = vmatmul.mubr.f32.gmra.mxu0 %v2633
        %v2635 = vpop.f32.mrf.mxu0
        %v2636 = vadd.f32 0.0, %v2635
        %v2637 = vpop.f32.mrf.mxu0
        %2638 = vmatprep.mubr.f32.mxu0 0.0
        %v2639 = vand.u32 %v2558, 4294901760
        %v2640 = vsub.f32 %v2558, %v2639
        %v2641 = vand.u32 %v2640, 4294901760
        %v2642 = vsub.f32 %v2640, %v2641
        %v2643 = vand.u32 %v2642, 4294901760
        %2644 = vmatmul.mubr.f32.gmra.mxu0 %v2643
        %v2645 = vpop.f32.mrf.mxu0
        %v2646 = vadd.f32 0.0, %v2645
        %v2647 = vpop.f32.mrf.mxu0
        %2648 = vdwg.mxu0
        %2649 = vmatprep.subr.mxu0 0.0
        %2650 = vmatpush1.msra.mxu0 0.0
        %2651 = vmatprep.subr.mxu0 0.0
        %2652 = vmatpush1.msra.mxu0 0.0
        %2653 = vmatprep.subr.mxu0 0.0
        %2654 = vmatpush1.msra.mxu0 0.0
        %2655 = vmatprep.subr.mxu0 0.0
        %2656 = vmatpush1.msra.mxu0 0.0
        %2657 = vmatprep.subr.mxu0 0.0
        %2658 = vmatpush1.msra.mxu0 0.0
        %2659 = vmatprep.subr.mxu0 0.0
        %2660 = vmatpush1.msra.mxu0 0.0
        %2661 = vmatprep.subr.mxu0 0.0
        %2662 = vmatpush1.msra.mxu0 0.0
        %2663 = vmatprep.subr.mxu0 0.0
        %2664 = vmatpush1.msra.mxu0 0.0
        %2665 = vmatprep.subr.mxu0 0.0
        %2666 = vmatpush1.msra.mxu0 0.0
        %2667 = vmatprep.subr.mxu0 0.0
        %2668 = vmatpush1.msra.mxu0 0.0
        %2669 = vmatprep.subr.mxu0 0.0
        %2670 = vmatpush1.msra.mxu0 0.0
        %2671 = vmatprep.subr.mxu0 0.0
        %2672 = vmatpush1.msra.mxu0 0.0
        %2673 = vmatprep.subr.mxu0 0.0
        %2674 = vmatpush1.msra.mxu0 0.0
        %2675 = vmatprep.subr.mxu0 0.0
        %2676 = vmatpush1.msra.mxu0 0.0
        %2677 = vmatprep.subr.mxu0 0.0
        %2678 = vmatpush1.msra.mxu0 0.0
        %2679 = vmatprep.subr.mxu0 0.0
        %v2680 = vand.u32 %v2561, 4294901760
        %v2681 = vsub.f32 %v2561, %v2680
        %v2682 = vand.u32 %v2681, 4294901760
        %v2683 = vsub.f32 %v2681, %v2682
        %v2684 = vand.u32 %v2683, 4294901760
        %2685 = vmatpush1.msra.mxu0 %v2684
        %2686 = vmatprep.subr.mxu0 0.0
        %2687 = vmatpush2.msra.mxu0 0.0
        %2688 = vmatprep.subr.mxu0 0.0
        %2689 = vmatpush2.msra.mxu0 0.0
        %2690 = vmatprep.subr.mxu0 0.0
        %2691 = vmatpush2.msra.mxu0 0.0
        %2692 = vmatprep.subr.mxu0 0.0
        %2693 = vmatpush2.msra.mxu0 0.0
        %2694 = vmatprep.subr.mxu0 0.0
        %2695 = vmatpush2.msra.mxu0 0.0
        %2696 = vmatprep.subr.mxu0 0.0
        %2697 = vmatpush2.msra.mxu0 0.0
        %2698 = vmatprep.subr.mxu0 0.0
        %2699 = vmatpush2.msra.mxu0 0.0
        %2700 = vmatprep.subr.mxu0 0.0
        %2701 = vmatpush2.msra.mxu0 0.0
        %2702 = vmatprep.subr.mxu0 0.0
        %2703 = vmatpush2.msra.mxu0 0.0
        %2704 = vmatprep.subr.mxu0 0.0
        %2705 = vmatpush2.msra.mxu0 0.0
        %2706 = vmatprep.subr.mxu0 0.0
        %2707 = vmatpush2.msra.mxu0 0.0
        %2708 = vmatprep.subr.mxu0 0.0
        %2709 = vmatpush2.msra.mxu0 0.0
        %2710 = vmatprep.subr.mxu0 0.0
        %2711 = vmatpush2.msra.mxu0 0.0
        %2712 = vmatprep.subr.mxu0 0.0
        %2713 = vmatpush2.msra.mxu0 0.0
        %2714 = vmatprep.subr.mxu0 0.0
        %2715 = vmatpush2.msra.mxu0 0.0
        %2716 = vmatprep.subr.mxu0 0.0
        %2717 = vmatpush2.msra.mxu0 0.0
        %2718 = vmatprep.mubr.f32.mxu0 0.0
        %v2719 = vand.u32 %v2555, 4294901760
        %2720 = vmatmul.mubr.f32.gmra.mxu0 %v2719
        %v2721 = vpop.f32.mrf.mxu0
        %v2722 = vadd.f32 %v2636, %v2721
        %v2723 = vpop.f32.mrf.mxu0
        %2724 = vmatprep.mubr.f32.mxu0 0.0
        %v2725 = vand.u32 %v2558, 4294901760
        %2726 = vmatmul.mubr.f32.gmra.mxu0 %v2725
        %v2727 = vpop.f32.mrf.mxu0
        %v2728 = vadd.f32 %v2646, %v2727
        %v2729 = vpop.f32.mrf.mxu0
        %2730 = vdwg.mxu0
        %2731 = vmatprep.subr.mxu0 0.0
        %2732 = vmatpush1.msra.mxu0 0.0
        %2733 = vmatprep.subr.mxu0 0.0
        %2734 = vmatpush1.msra.mxu0 0.0
        %2735 = vmatprep.subr.mxu0 0.0
        %2736 = vmatpush1.msra.mxu0 0.0
        %2737 = vmatprep.subr.mxu0 0.0
        %2738 = vmatpush1.msra.mxu0 0.0
        %2739 = vmatprep.subr.mxu0 0.0
        %2740 = vmatpush1.msra.mxu0 0.0
        %2741 = vmatprep.subr.mxu0 0.0
        %2742 = vmatpush1.msra.mxu0 0.0
        %2743 = vmatprep.subr.mxu0 0.0
        %2744 = vmatpush1.msra.mxu0 0.0
        %2745 = vmatprep.subr.mxu0 0.0
        %2746 = vmatpush1.msra.mxu0 0.0
        %2747 = vmatprep.subr.mxu0 0.0
        %2748 = vmatpush1.msra.mxu0 0.0
        %2749 = vmatprep.subr.mxu0 0.0
        %2750 = vmatpush1.msra.mxu0 0.0
        %2751 = vmatprep.subr.mxu0 0.0
        %2752 = vmatpush1.msra.mxu0 0.0
        %2753 = vmatprep.subr.mxu0 0.0
        %2754 = vmatpush1.msra.mxu0 0.0
        %2755 = vmatprep.subr.mxu0 0.0
        %2756 = vmatpush1.msra.mxu0 0.0
        %2757 = vmatprep.subr.mxu0 0.0
        %2758 = vmatpush1.msra.mxu0 0.0
        %2759 = vmatprep.subr.mxu0 0.0
        %2760 = vmatpush1.msra.mxu0 0.0
        %2761 = vmatprep.subr.mxu0 0.0
        %v2762 = vand.u32 %v2561, 4294901760
        %v2763 = vsub.f32 %v2561, %v2762
        %2764 = vmatpush1.msra.mxu0 %v2763
        %2765 = vmatprep.subr.mxu0 0.0
        %2766 = vmatpush2.msra.mxu0 0.0
        %2767 = vmatprep.subr.mxu0 0.0
        %2768 = vmatpush2.msra.mxu0 0.0
        %2769 = vmatprep.subr.mxu0 0.0
        %2770 = vmatpush2.msra.mxu0 0.0
        %2771 = vmatprep.subr.mxu0 0.0
        %2772 = vmatpush2.msra.mxu0 0.0
        %2773 = vmatprep.subr.mxu0 0.0
        %2774 = vmatpush2.msra.mxu0 0.0
        %2775 = vmatprep.subr.mxu0 0.0
        %2776 = vmatpush2.msra.mxu0 0.0
        %2777 = vmatprep.subr.mxu0 0.0
        %2778 = vmatpush2.msra.mxu0 0.0
        %2779 = vmatprep.subr.mxu0 0.0
        %2780 = vmatpush2.msra.mxu0 0.0
        %2781 = vmatprep.subr.mxu0 0.0
        %2782 = vmatpush2.msra.mxu0 0.0
        %2783 = vmatprep.subr.mxu0 0.0
        %2784 = vmatpush2.msra.mxu0 0.0
        %2785 = vmatprep.subr.mxu0 0.0
        %2786 = vmatpush2.msra.mxu0 0.0
        %2787 = vmatprep.subr.mxu0 0.0
        %2788 = vmatpush2.msra.mxu0 0.0
        %2789 = vmatprep.subr.mxu0 0.0
        %2790 = vmatpush2.msra.mxu0 0.0
        %2791 = vmatprep.subr.mxu0 0.0
        %2792 = vmatpush2.msra.mxu0 0.0
        %2793 = vmatprep.subr.mxu0 0.0
        %2794 = vmatpush2.msra.mxu0 0.0
        %2795 = vmatprep.subr.mxu0 0.0
        %2796 = vmatpush2.msra.mxu0 0.0
        %2797 = vmatprep.mubr.f32.mxu0 0.0
        %v2798 = vand.u32 %v2555, 4294901760
        %v2799 = vsub.f32 %v2555, %v2798
        %2800 = vmatmul.mubr.f32.gmra.mxu0 %v2799
        %v2801 = vpop.f32.mrf.mxu0
        %v2802 = vadd.f32 %v2722, %v2801
        %v2803 = vpop.f32.mrf.mxu0
        %2804 = vmatprep.mubr.f32.mxu0 0.0
        %v2805 = vand.u32 %v2558, 4294901760
        %v2806 = vsub.f32 %v2558, %v2805
        %2807 = vmatmul.mubr.f32.gmra.mxu0 %v2806
        %v2808 = vpop.f32.mrf.mxu0
        %v2809 = vadd.f32 %v2728, %v2808
        %v2810 = vpop.f32.mrf.mxu0
        %2811 = vdwg.mxu0
        %2812 = vmatprep.subr.mxu0 0.0
        %2813 = vmatpush1.msra.mxu0 0.0
        %2814 = vmatprep.subr.mxu0 0.0
        %2815 = vmatpush1.msra.mxu0 0.0
        %2816 = vmatprep.subr.mxu0 0.0
        %2817 = vmatpush1.msra.mxu0 0.0
        %2818 = vmatprep.subr.mxu0 0.0
        %2819 = vmatpush1.msra.mxu0 0.0
        %2820 = vmatprep.subr.mxu0 0.0
        %2821 = vmatpush1.msra.mxu0 0.0
        %2822 = vmatprep.subr.mxu0 0.0
        %2823 = vmatpush1.msra.mxu0 0.0
        %2824 = vmatprep.subr.mxu0 0.0
        %2825 = vmatpush1.msra.mxu0 0.0
        %2826 = vmatprep.subr.mxu0 0.0
        %2827 = vmatpush1.msra.mxu0 0.0
        %2828 = vmatprep.subr.mxu0 0.0
        %2829 = vmatpush1.msra.mxu0 0.0
        %2830 = vmatprep.subr.mxu0 0.0
        %2831 = vmatpush1.msra.mxu0 0.0
        %2832 = vmatprep.subr.mxu0 0.0
        %2833 = vmatpush1.msra.mxu0 0.0
        %2834 = vmatprep.subr.mxu0 0.0
        %2835 = vmatpush1.msra.mxu0 0.0
        %2836 = vmatprep.subr.mxu0 0.0
        %2837 = vmatpush1.msra.mxu0 0.0
        %2838 = vmatprep.subr.mxu0 0.0
        %2839 = vmatpush1.msra.mxu0 0.0
        %2840 = vmatprep.subr.mxu0 0.0
        %2841 = vmatpush1.msra.mxu0 0.0
        %2842 = vmatprep.subr.mxu0 0.0
        %v2843 = vand.u32 %v2561, 4294901760
        %2844 = vmatpush1.msra.mxu0 %v2843
        %2845 = vmatprep.subr.mxu0 0.0
        %2846 = vmatpush2.msra.mxu0 0.0
        %2847 = vmatprep.subr.mxu0 0.0
        %2848 = vmatpush2.msra.mxu0 0.0
        %2849 = vmatprep.subr.mxu0 0.0
        %2850 = vmatpush2.msra.mxu0 0.0
        %2851 = vmatprep.subr.mxu0 0.0
        %2852 = vmatpush2.msra.mxu0 0.0
        %2853 = vmatprep.subr.mxu0 0.0
        %2854 = vmatpush2.msra.mxu0 0.0
        %2855 = vmatprep.subr.mxu0 0.0
        %2856 = vmatpush2.msra.mxu0 0.0
        %2857 = vmatprep.subr.mxu0 0.0
        %2858 = vmatpush2.msra.mxu0 0.0
        %2859 = vmatprep.subr.mxu0 0.0
        %2860 = vmatpush2.msra.mxu0 0.0
        %2861 = vmatprep.subr.mxu0 0.0
        %2862 = vmatpush2.msra.mxu0 0.0
        %2863 = vmatprep.subr.mxu0 0.0
        %2864 = vmatpush2.msra.mxu0 0.0
        %2865 = vmatprep.subr.mxu0 0.0
        %2866 = vmatpush2.msra.mxu0 0.0
        %2867 = vmatprep.subr.mxu0 0.0
        %2868 = vmatpush2.msra.mxu0 0.0
        %2869 = vmatprep.subr.mxu0 0.0
        %2870 = vmatpush2.msra.mxu0 0.0
        %2871 = vmatprep.subr.mxu0 0.0
        %2872 = vmatpush2.msra.mxu0 0.0
        %2873 = vmatprep.subr.mxu0 0.0
        %2874 = vmatpush2.msra.mxu0 0.0
        %2875 = vmatprep.subr.mxu0 0.0
        %2876 = vmatpush2.msra.mxu0 0.0
        %2877 = vmatprep.mubr.f32.mxu0 0.0
        %v2878 = vand.u32 %v2555, 4294901760
        %v2879 = vsub.f32 %v2555, %v2878
        %v2880 = vand.u32 %v2879, 4294901760
        %2881 = vmatmul.mubr.f32.gmra.mxu0 %v2880
        %v2882 = vpop.f32.mrf.mxu0
        %v2883 = vadd.f32 %v2802, %v2882
        %v2884 = vpop.f32.mrf.mxu0
        %2885 = vmatprep.mubr.f32.mxu0 0.0
        %v2886 = vand.u32 %v2558, 4294901760
        %v2887 = vsub.f32 %v2558, %v2886
        %v2888 = vand.u32 %v2887, 4294901760
        %2889 = vmatmul.mubr.f32.gmra.mxu0 %v2888
        %v2890 = vpop.f32.mrf.mxu0
        %v2891 = vadd.f32 %v2809, %v2890
        %v2892 = vpop.f32.mrf.mxu0
        %2893 = vdwg.mxu0
        %2894 = vmatprep.subr.mxu0 0.0
        %2895 = vmatpush1.msra.mxu0 0.0
        %2896 = vmatprep.subr.mxu0 0.0
        %2897 = vmatpush1.msra.mxu0 0.0
        %2898 = vmatprep.subr.mxu0 0.0
        %2899 = vmatpush1.msra.mxu0 0.0
        %2900 = vmatprep.subr.mxu0 0.0
        %2901 = vmatpush1.msra.mxu0 0.0
        %2902 = vmatprep.subr.mxu0 0.0
        %2903 = vmatpush1.msra.mxu0 0.0
        %2904 = vmatprep.subr.mxu0 0.0
        %2905 = vmatpush1.msra.mxu0 0.0
        %2906 = vmatprep.subr.mxu0 0.0
        %2907 = vmatpush1.msra.mxu0 0.0
        %2908 = vmatprep.subr.mxu0 0.0
        %2909 = vmatpush1.msra.mxu0 0.0
        %2910 = vmatprep.subr.mxu0 0.0
        %2911 = vmatpush1.msra.mxu0 0.0
        %2912 = vmatprep.subr.mxu0 0.0
        %2913 = vmatpush1.msra.mxu0 0.0
        %2914 = vmatprep.subr.mxu0 0.0
        %2915 = vmatpush1.msra.mxu0 0.0
        %2916 = vmatprep.subr.mxu0 0.0
        %2917 = vmatpush1.msra.mxu0 0.0
        %2918 = vmatprep.subr.mxu0 0.0
        %2919 = vmatpush1.msra.mxu0 0.0
        %2920 = vmatprep.subr.mxu0 0.0
        %2921 = vmatpush1.msra.mxu0 0.0
        %2922 = vmatprep.subr.mxu0 0.0
        %2923 = vmatpush1.msra.mxu0 0.0
        %2924 = vmatprep.subr.mxu0 0.0
        %v2925 = vand.u32 %v2561, 4294901760
        %v2926 = vsub.f32 %v2561, %v2925
        %v2927 = vand.u32 %v2926, 4294901760
        %2928 = vmatpush1.msra.mxu0 %v2927
        %2929 = vmatprep.subr.mxu0 0.0
        %2930 = vmatpush2.msra.mxu0 0.0
        %2931 = vmatprep.subr.mxu0 0.0
        %2932 = vmatpush2.msra.mxu0 0.0
        %2933 = vmatprep.subr.mxu0 0.0
        %2934 = vmatpush2.msra.mxu0 0.0
        %2935 = vmatprep.subr.mxu0 0.0
        %2936 = vmatpush2.msra.mxu0 0.0
        %2937 = vmatprep.subr.mxu0 0.0
        %2938 = vmatpush2.msra.mxu0 0.0
        %2939 = vmatprep.subr.mxu0 0.0
        %2940 = vmatpush2.msra.mxu0 0.0
        %2941 = vmatprep.subr.mxu0 0.0
        %2942 = vmatpush2.msra.mxu0 0.0
        %2943 = vmatprep.subr.mxu0 0.0
        %2944 = vmatpush2.msra.mxu0 0.0
        %2945 = vmatprep.subr.mxu0 0.0
        %2946 = vmatpush2.msra.mxu0 0.0
        %2947 = vmatprep.subr.mxu0 0.0
        %2948 = vmatpush2.msra.mxu0 0.0
        %2949 = vmatprep.subr.mxu0 0.0
        %2950 = vmatpush2.msra.mxu0 0.0
        %2951 = vmatprep.subr.mxu0 0.0
        %2952 = vmatpush2.msra.mxu0 0.0
        %2953 = vmatprep.subr.mxu0 0.0
        %2954 = vmatpush2.msra.mxu0 0.0
        %2955 = vmatprep.subr.mxu0 0.0
        %2956 = vmatpush2.msra.mxu0 0.0
        %2957 = vmatprep.subr.mxu0 0.0
        %2958 = vmatpush2.msra.mxu0 0.0
        %2959 = vmatprep.subr.mxu0 0.0
        %2960 = vmatpush2.msra.mxu0 0.0
        %2961 = vmatprep.mubr.f32.mxu0 0.0
        %v2962 = vand.u32 %v2555, 4294901760
        %2963 = vmatmul.mubr.f32.gmra.mxu0 %v2962
        %v2964 = vpop.f32.mrf.mxu0
        %v2965 = vadd.f32 %v2883, %v2964
        %v2966 = vpop.f32.mrf.mxu0
        %2967 = vmatprep.mubr.f32.mxu0 0.0
        %v2968 = vand.u32 %v2558, 4294901760
        %2969 = vmatmul.mubr.f32.gmra.mxu0 %v2968
        %v2970 = vpop.f32.mrf.mxu0
        %v2971 = vadd.f32 %v2891, %v2970
        %v2972 = vpop.f32.mrf.mxu0
        %2973 = vdwg.mxu0
        %2974 = vmatprep.subr.mxu0 0.0
        %2975 = vmatpush1.msra.mxu0 0.0
        %2976 = vmatprep.subr.mxu0 0.0
        %2977 = vmatpush1.msra.mxu0 0.0
        %2978 = vmatprep.subr.mxu0 0.0
        %2979 = vmatpush1.msra.mxu0 0.0
        %2980 = vmatprep.subr.mxu0 0.0
        %2981 = vmatpush1.msra.mxu0 0.0
        %2982 = vmatprep.subr.mxu0 0.0
        %2983 = vmatpush1.msra.mxu0 0.0
        %2984 = vmatprep.subr.mxu0 0.0
        %2985 = vmatpush1.msra.mxu0 0.0
        %2986 = vmatprep.subr.mxu0 0.0
        %2987 = vmatpush1.msra.mxu0 0.0
        %2988 = vmatprep.subr.mxu0 0.0
        %2989 = vmatpush1.msra.mxu0 0.0
        %2990 = vmatprep.subr.mxu0 0.0
        %2991 = vmatpush1.msra.mxu0 0.0
        %2992 = vmatprep.subr.mxu0 0.0
        %2993 = vmatpush1.msra.mxu0 0.0
        %2994 = vmatprep.subr.mxu0 0.0
        %2995 = vmatpush1.msra.mxu0 0.0
        %2996 = vmatprep.subr.mxu0 0.0
        %2997 = vmatpush1.msra.mxu0 0.0
        %2998 = vmatprep.subr.mxu0 0.0
        %2999 = vmatpush1.msra.mxu0 0.0
        %3000 = vmatprep.subr.mxu0 0.0
        %3001 = vmatpush1.msra.mxu0 0.0
        %3002 = vmatprep.subr.mxu0 0.0
        %3003 = vmatpush1.msra.mxu0 0.0
        %3004 = vmatprep.subr.mxu0 0.0
        %v3005 = vand.u32 %v2561, 4294901760
        %3006 = vmatpush1.msra.mxu0 %v3005
        %3007 = vmatprep.subr.mxu0 0.0
        %3008 = vmatpush2.msra.mxu0 0.0
        %3009 = vmatprep.subr.mxu0 0.0
        %3010 = vmatpush2.msra.mxu0 0.0
        %3011 = vmatprep.subr.mxu0 0.0
        %3012 = vmatpush2.msra.mxu0 0.0
        %3013 = vmatprep.subr.mxu0 0.0
        %3014 = vmatpush2.msra.mxu0 0.0
        %3015 = vmatprep.subr.mxu0 0.0
        %3016 = vmatpush2.msra.mxu0 0.0
        %3017 = vmatprep.subr.mxu0 0.0
        %3018 = vmatpush2.msra.mxu0 0.0
        %3019 = vmatprep.subr.mxu0 0.0
        %3020 = vmatpush2.msra.mxu0 0.0
        %3021 = vmatprep.subr.mxu0 0.0
        %3022 = vmatpush2.msra.mxu0 0.0
        %3023 = vmatprep.subr.mxu0 0.0
        %3024 = vmatpush2.msra.mxu0 0.0
        %3025 = vmatprep.subr.mxu0 0.0
        %3026 = vmatpush2.msra.mxu0 0.0
        %3027 = vmatprep.subr.mxu0 0.0
        %3028 = vmatpush2.msra.mxu0 0.0
        %3029 = vmatprep.subr.mxu0 0.0
        %3030 = vmatpush2.msra.mxu0 0.0
        %3031 = vmatprep.subr.mxu0 0.0
        %3032 = vmatpush2.msra.mxu0 0.0
        %3033 = vmatprep.subr.mxu0 0.0
        %3034 = vmatpush2.msra.mxu0 0.0
        %3035 = vmatprep.subr.mxu0 0.0
        %3036 = vmatpush2.msra.mxu0 0.0
        %3037 = vmatprep.subr.mxu0 0.0
        %3038 = vmatpush2.msra.mxu0 0.0
        %3039 = vmatprep.mubr.f32.mxu0 0.0
        %v3040 = vand.u32 %v2555, 4294901760
        %3041 = vmatmul.mubr.f32.gmra.mxu0 %v3040
        %v3042 = vpop.f32.mrf.mxu0
        %v3043 = vadd.f32 %v2965, %v3042
        %v3044 = vpop.f32.mrf.mxu0
        %3045 = vmatprep.mubr.f32.mxu0 0.0
        %v3046 = vand.u32 %v2558, 4294901760
        %3047 = vmatmul.mubr.f32.gmra.mxu0 %v3046
        %v3048 = vpop.f32.mrf.mxu0
        %v3049 = vadd.f32 %v2971, %v3048
        %v3050 = vpop.f32.mrf.mxu0
        %3051 = vdwg.mxu0
        %v3052 = vld [vmem:[#allocation3] sm:$0xf]
        %v3054 = vsel %vm560, %v3052, 0
        %3056 = vmatprep.subr.mxu0 0.0
        %3057 = vmatpush1.msra.mxu0 0.0
        %3058 = vmatprep.subr.mxu0 0.0
        %3059 = vmatpush1.msra.mxu0 0.0
        %3060 = vmatprep.subr.mxu0 0.0
        %3061 = vmatpush1.msra.mxu0 0.0
        %3062 = vmatprep.subr.mxu0 0.0
        %3063 = vmatpush1.msra.mxu0 0.0
        %3064 = vmatprep.subr.mxu0 0.0
        %3065 = vmatpush1.msra.mxu0 0.0
        %3066 = vmatprep.subr.mxu0 0.0
        %3067 = vmatpush1.msra.mxu0 0.0
        %3068 = vmatprep.subr.mxu0 0.0
        %3069 = vmatpush1.msra.mxu0 0.0
        %3070 = vmatprep.subr.mxu0 0.0
        %3071 = vmatpush1.msra.mxu0 0.0
        %3072 = vmatprep.subr.mxu0 0.0
        %3073 = vmatpush1.msra.mxu0 0.0
        %3074 = vmatprep.subr.mxu0 0.0
        %3075 = vmatpush1.msra.mxu0 0.0
        %3076 = vmatprep.subr.mxu0 0.0
        %3077 = vmatpush1.msra.mxu0 0.0
        %3078 = vmatprep.subr.mxu0 0.0
        %3079 = vmatpush1.msra.mxu0 0.0
        %3080 = vmatprep.subr.mxu0 0.0
        %3081 = vmatpush1.msra.mxu0 0.0
        %3082 = vmatprep.subr.mxu0 0.0
        %3083 = vmatpush1.msra.mxu0 0.0
        %3084 = vmatprep.subr.mxu0 0.0
        %3085 = vmatpush1.msra.mxu0 0.0
        %3086 = vmatprep.subr.mxu0 0.0
        %v3087 = vand.u32 %v3054, 4294901760
        %3088 = vmatpush1.msra.mxu0 %v3087
        %3089 = vmatprep.subr.mxu0 0.0
        %3090 = vmatpush2.msra.mxu0 0.0
        %3091 = vmatprep.subr.mxu0 0.0
        %3092 = vmatpush2.msra.mxu0 0.0
        %3093 = vmatprep.subr.mxu0 0.0
        %3094 = vmatpush2.msra.mxu0 0.0
        %3095 = vmatprep.subr.mxu0 0.0
        %3096 = vmatpush2.msra.mxu0 0.0
        %3097 = vmatprep.subr.mxu0 0.0
        %3098 = vmatpush2.msra.mxu0 0.0
        %3099 = vmatprep.subr.mxu0 0.0
        %3100 = vmatpush2.msra.mxu0 0.0
        %3101 = vmatprep.subr.mxu0 0.0
        %3102 = vmatpush2.msra.mxu0 0.0
        %3103 = vmatprep.subr.mxu0 0.0
        %3104 = vmatpush2.msra.mxu0 0.0
        %3105 = vmatprep.subr.mxu0 0.0
        %3106 = vmatpush2.msra.mxu0 0.0
        %3107 = vmatprep.subr.mxu0 0.0
        %3108 = vmatpush2.msra.mxu0 0.0
        %3109 = vmatprep.subr.mxu0 0.0
        %3110 = vmatpush2.msra.mxu0 0.0
        %3111 = vmatprep.subr.mxu0 0.0
        %3112 = vmatpush2.msra.mxu0 0.0
        %3113 = vmatprep.subr.mxu0 0.0
        %3114 = vmatpush2.msra.mxu0 0.0
        %3115 = vmatprep.subr.mxu0 0.0
        %3116 = vmatpush2.msra.mxu0 0.0
        %3117 = vmatprep.subr.mxu0 0.0
        %3118 = vmatpush2.msra.mxu0 0.0
        %3119 = vmatprep.subr.mxu0 0.0
        %3120 = vmatpush2.msra.mxu0 0.0
        %3121 = vmatprep.mubr.f32.mxu0 0.0
        %v3122 = vand.u32 %v2555, 4294901760
        %v3123 = vsub.f32 %v2555, %v3122
        %v3124 = vand.u32 %v3123, 4294901760
        %v3125 = vsub.f32 %v3123, %v3124
        %v3126 = vand.u32 %v3125, 4294901760
        %3127 = vmatmul.mubr.f32.gmra.mxu0 %v3126
        %v3128 = vpop.f32.mrf.mxu0
        %v3129 = vadd.f32 0.0, %v3128
        %v3130 = vpop.f32.mrf.mxu0
        %3131 = vmatprep.mubr.f32.mxu0 0.0
        %v3132 = vand.u32 %v2558, 4294901760
        %v3133 = vsub.f32 %v2558, %v3132
        %v3134 = vand.u32 %v3133, 4294901760
        %v3135 = vsub.f32 %v3133, %v3134
        %v3136 = vand.u32 %v3135, 4294901760
        %3137 = vmatmul.mubr.f32.gmra.mxu0 %v3136
        %v3138 = vpop.f32.mrf.mxu0
        %v3139 = vadd.f32 0.0, %v3138
        %v3140 = vpop.f32.mrf.mxu0
        %3141 = vdwg.mxu0
        %3142 = vmatprep.subr.mxu0 0.0
        %3143 = vmatpush1.msra.mxu0 0.0
        %3144 = vmatprep.subr.mxu0 0.0
        %3145 = vmatpush1.msra.mxu0 0.0
        %3146 = vmatprep.subr.mxu0 0.0
        %3147 = vmatpush1.msra.mxu0 0.0
        %3148 = vmatprep.subr.mxu0 0.0
        %3149 = vmatpush1.msra.mxu0 0.0
        %3150 = vmatprep.subr.mxu0 0.0
        %3151 = vmatpush1.msra.mxu0 0.0
        %3152 = vmatprep.subr.mxu0 0.0
        %3153 = vmatpush1.msra.mxu0 0.0
        %3154 = vmatprep.subr.mxu0 0.0
        %3155 = vmatpush1.msra.mxu0 0.0
        %3156 = vmatprep.subr.mxu0 0.0
        %3157 = vmatpush1.msra.mxu0 0.0
        %3158 = vmatprep.subr.mxu0 0.0
        %3159 = vmatpush1.msra.mxu0 0.0
        %3160 = vmatprep.subr.mxu0 0.0
        %3161 = vmatpush1.msra.mxu0 0.0
        %3162 = vmatprep.subr.mxu0 0.0
        %3163 = vmatpush1.msra.mxu0 0.0
        %3164 = vmatprep.subr.mxu0 0.0
        %3165 = vmatpush1.msra.mxu0 0.0
        %3166 = vmatprep.subr.mxu0 0.0
        %3167 = vmatpush1.msra.mxu0 0.0
        %3168 = vmatprep.subr.mxu0 0.0
        %3169 = vmatpush1.msra.mxu0 0.0
        %3170 = vmatprep.subr.mxu0 0.0
        %3171 = vmatpush1.msra.mxu0 0.0
        %3172 = vmatprep.subr.mxu0 0.0
        %v3173 = vand.u32 %v3054, 4294901760
        %v3174 = vsub.f32 %v3054, %v3173
        %v3175 = vand.u32 %v3174, 4294901760
        %v3176 = vsub.f32 %v3174, %v3175
        %v3177 = vand.u32 %v3176, 4294901760
        %3178 = vmatpush1.msra.mxu0 %v3177
        %3179 = vmatprep.subr.mxu0 0.0
        %3180 = vmatpush2.msra.mxu0 0.0
        %3181 = vmatprep.subr.mxu0 0.0
        %3182 = vmatpush2.msra.mxu0 0.0
        %3183 = vmatprep.subr.mxu0 0.0
        %3184 = vmatpush2.msra.mxu0 0.0
        %3185 = vmatprep.subr.mxu0 0.0
        %3186 = vmatpush2.msra.mxu0 0.0
        %3187 = vmatprep.subr.mxu0 0.0
        %3188 = vmatpush2.msra.mxu0 0.0
        %3189 = vmatprep.subr.mxu0 0.0
        %3190 = vmatpush2.msra.mxu0 0.0
        %3191 = vmatprep.subr.mxu0 0.0
        %3192 = vmatpush2.msra.mxu0 0.0
        %3193 = vmatprep.subr.mxu0 0.0
        %3194 = vmatpush2.msra.mxu0 0.0
        %3195 = vmatprep.subr.mxu0 0.0
        %3196 = vmatpush2.msra.mxu0 0.0
        %3197 = vmatprep.subr.mxu0 0.0
        %3198 = vmatpush2.msra.mxu0 0.0
        %3199 = vmatprep.subr.mxu0 0.0
        %3200 = vmatpush2.msra.mxu0 0.0
        %3201 = vmatprep.subr.mxu0 0.0
        %3202 = vmatpush2.msra.mxu0 0.0
        %3203 = vmatprep.subr.mxu0 0.0
        %3204 = vmatpush2.msra.mxu0 0.0
        %3205 = vmatprep.subr.mxu0 0.0
        %3206 = vmatpush2.msra.mxu0 0.0
        %3207 = vmatprep.subr.mxu0 0.0
        %3208 = vmatpush2.msra.mxu0 0.0
        %3209 = vmatprep.subr.mxu0 0.0
        %3210 = vmatpush2.msra.mxu0 0.0
        %3211 = vmatprep.mubr.f32.mxu0 0.0
        %v3212 = vand.u32 %v2555, 4294901760
        %3213 = vmatmul.mubr.f32.gmra.mxu0 %v3212
        %v3214 = vpop.f32.mrf.mxu0
        %v3215 = vadd.f32 %v3129, %v3214
        %v3216 = vpop.f32.mrf.mxu0
        %3217 = vmatprep.mubr.f32.mxu0 0.0
        %v3218 = vand.u32 %v2558, 4294901760
        %3219 = vmatmul.mubr.f32.gmra.mxu0 %v3218
        %v3220 = vpop.f32.mrf.mxu0
        %v3221 = vadd.f32 %v3139, %v3220
        %v3222 = vpop.f32.mrf.mxu0
        %3223 = vdwg.mxu0
        %3224 = vmatprep.subr.mxu0 0.0
        %3225 = vmatpush1.msra.mxu0 0.0
        %3226 = vmatprep.subr.mxu0 0.0
        %3227 = vmatpush1.msra.mxu0 0.0
        %3228 = vmatprep.subr.mxu0 0.0
        %3229 = vmatpush1.msra.mxu0 0.0
        %3230 = vmatprep.subr.mxu0 0.0
        %3231 = vmatpush1.msra.mxu0 0.0
        %3232 = vmatprep.subr.mxu0 0.0
        %3233 = vmatpush1.msra.mxu0 0.0
        %3234 = vmatprep.subr.mxu0 0.0
        %3235 = vmatpush1.msra.mxu0 0.0
        %3236 = vmatprep.subr.mxu0 0.0
        %3237 = vmatpush1.msra.mxu0 0.0
        %3238 = vmatprep.subr.mxu0 0.0
        %3239 = vmatpush1.msra.mxu0 0.0
        %3240 = vmatprep.subr.mxu0 0.0
        %3241 = vmatpush1.msra.mxu0 0.0
        %3242 = vmatprep.subr.mxu0 0.0
        %3243 = vmatpush1.msra.mxu0 0.0
        %3244 = vmatprep.subr.mxu0 0.0
        %3245 = vmatpush1.msra.mxu0 0.0
        %3246 = vmatprep.subr.mxu0 0.0
        %3247 = vmatpush1.msra.mxu0 0.0
        %3248 = vmatprep.subr.mxu0 0.0
        %3249 = vmatpush1.msra.mxu0 0.0
        %3250 = vmatprep.subr.mxu0 0.0
        %3251 = vmatpush1.msra.mxu0 0.0
        %3252 = vmatprep.subr.mxu0 0.0
        %3253 = vmatpush1.msra.mxu0 0.0
        %3254 = vmatprep.subr.mxu0 0.0
        %v3255 = vand.u32 %v3054, 4294901760
        %v3256 = vsub.f32 %v3054, %v3255
        %3257 = vmatpush1.msra.mxu0 %v3256
        %3258 = vmatprep.subr.mxu0 0.0
        %3259 = vmatpush2.msra.mxu0 0.0
        %3260 = vmatprep.subr.mxu0 0.0
        %3261 = vmatpush2.msra.mxu0 0.0
        %3262 = vmatprep.subr.mxu0 0.0
        %3263 = vmatpush2.msra.mxu0 0.0
        %3264 = vmatprep.subr.mxu0 0.0
        %3265 = vmatpush2.msra.mxu0 0.0
        %3266 = vmatprep.subr.mxu0 0.0
        %3267 = vmatpush2.msra.mxu0 0.0
        %3268 = vmatprep.subr.mxu0 0.0
        %3269 = vmatpush2.msra.mxu0 0.0
        %3270 = vmatprep.subr.mxu0 0.0
        %3271 = vmatpush2.msra.mxu0 0.0
        %3272 = vmatprep.subr.mxu0 0.0
        %3273 = vmatpush2.msra.mxu0 0.0
        %3274 = vmatprep.subr.mxu0 0.0
        %3275 = vmatpush2.msra.mxu0 0.0
        %3276 = vmatprep.subr.mxu0 0.0
        %3277 = vmatpush2.msra.mxu0 0.0
        %3278 = vmatprep.subr.mxu0 0.0
        %3279 = vmatpush2.msra.mxu0 0.0
        %3280 = vmatprep.subr.mxu0 0.0
        %3281 = vmatpush2.msra.mxu0 0.0
        %3282 = vmatprep.subr.mxu0 0.0
        %3283 = vmatpush2.msra.mxu0 0.0
        %3284 = vmatprep.subr.mxu0 0.0
        %3285 = vmatpush2.msra.mxu0 0.0
        %3286 = vmatprep.subr.mxu0 0.0
        %3287 = vmatpush2.msra.mxu0 0.0
        %3288 = vmatprep.subr.mxu0 0.0
        %3289 = vmatpush2.msra.mxu0 0.0
        %3290 = vmatprep.mubr.f32.mxu0 0.0
        %v3291 = vand.u32 %v2555, 4294901760
        %v3292 = vsub.f32 %v2555, %v3291
        %3293 = vmatmul.mubr.f32.gmra.mxu0 %v3292
        %v3294 = vpop.f32.mrf.mxu0
        %v3295 = vadd.f32 %v3215, %v3294
        %v3296 = vpop.f32.mrf.mxu0
        %3297 = vmatprep.mubr.f32.mxu0 0.0
        %v3298 = vand.u32 %v2558, 4294901760
        %v3299 = vsub.f32 %v2558, %v3298
        %3300 = vmatmul.mubr.f32.gmra.mxu0 %v3299
        %v3301 = vpop.f32.mrf.mxu0
        %v3302 = vadd.f32 %v3221, %v3301
        %v3303 = vpop.f32.mrf.mxu0
        %3304 = vdwg.mxu0
        %3305 = vmatprep.subr.mxu0 0.0
        %3306 = vmatpush1.msra.mxu0 0.0
        %3307 = vmatprep.subr.mxu0 0.0
        %3308 = vmatpush1.msra.mxu0 0.0
        %3309 = vmatprep.subr.mxu0 0.0
        %3310 = vmatpush1.msra.mxu0 0.0
        %3311 = vmatprep.subr.mxu0 0.0
        %3312 = vmatpush1.msra.mxu0 0.0
        %3313 = vmatprep.subr.mxu0 0.0
        %3314 = vmatpush1.msra.mxu0 0.0
        %3315 = vmatprep.subr.mxu0 0.0
        %3316 = vmatpush1.msra.mxu0 0.0
        %3317 = vmatprep.subr.mxu0 0.0
        %3318 = vmatpush1.msra.mxu0 0.0
        %3319 = vmatprep.subr.mxu0 0.0
        %3320 = vmatpush1.msra.mxu0 0.0
        %3321 = vmatprep.subr.mxu0 0.0
        %3322 = vmatpush1.msra.mxu0 0.0
        %3323 = vmatprep.subr.mxu0 0.0
        %3324 = vmatpush1.msra.mxu0 0.0
        %3325 = vmatprep.subr.mxu0 0.0
        %3326 = vmatpush1.msra.mxu0 0.0
        %3327 = vmatprep.subr.mxu0 0.0
        %3328 = vmatpush1.msra.mxu0 0.0
        %3329 = vmatprep.subr.mxu0 0.0
        %3330 = vmatpush1.msra.mxu0 0.0
        %3331 = vmatprep.subr.mxu0 0.0
        %3332 = vmatpush1.msra.mxu0 0.0
        %3333 = vmatprep.subr.mxu0 0.0
        %3334 = vmatpush1.msra.mxu0 0.0
        %3335 = vmatprep.subr.mxu0 0.0
        %v3336 = vand.u32 %v3054, 4294901760
        %3337 = vmatpush1.msra.mxu0 %v3336
        %3338 = vmatprep.subr.mxu0 0.0
        %3339 = vmatpush2.msra.mxu0 0.0
        %3340 = vmatprep.subr.mxu0 0.0
        %3341 = vmatpush2.msra.mxu0 0.0
        %3342 = vmatprep.subr.mxu0 0.0
        %3343 = vmatpush2.msra.mxu0 0.0
        %3344 = vmatprep.subr.mxu0 0.0
        %3345 = vmatpush2.msra.mxu0 0.0
        %3346 = vmatprep.subr.mxu0 0.0
        %3347 = vmatpush2.msra.mxu0 0.0
        %3348 = vmatprep.subr.mxu0 0.0
        %3349 = vmatpush2.msra.mxu0 0.0
        %3350 = vmatprep.subr.mxu0 0.0
        %3351 = vmatpush2.msra.mxu0 0.0
        %3352 = vmatprep.subr.mxu0 0.0
        %3353 = vmatpush2.msra.mxu0 0.0
        %3354 = vmatprep.subr.mxu0 0.0
        %3355 = vmatpush2.msra.mxu0 0.0
        %3356 = vmatprep.subr.mxu0 0.0
        %3357 = vmatpush2.msra.mxu0 0.0
        %3358 = vmatprep.subr.mxu0 0.0
        %3359 = vmatpush2.msra.mxu0 0.0
        %3360 = vmatprep.subr.mxu0 0.0
        %3361 = vmatpush2.msra.mxu0 0.0
        %3362 = vmatprep.subr.mxu0 0.0
        %3363 = vmatpush2.msra.mxu0 0.0
        %3364 = vmatprep.subr.mxu0 0.0
        %3365 = vmatpush2.msra.mxu0 0.0
        %3366 = vmatprep.subr.mxu0 0.0
        %3367 = vmatpush2.msra.mxu0 0.0
        %3368 = vmatprep.subr.mxu0 0.0
        %3369 = vmatpush2.msra.mxu0 0.0
        %3370 = vmatprep.mubr.f32.mxu0 0.0
        %v3371 = vand.u32 %v2555, 4294901760
        %v3372 = vsub.f32 %v2555, %v3371
        %v3373 = vand.u32 %v3372, 4294901760
        %3374 = vmatmul.mubr.f32.gmra.mxu0 %v3373
        %v3375 = vpop.f32.mrf.mxu0
        %v3376 = vadd.f32 %v3295, %v3375
        %v3377 = vpop.f32.mrf.mxu0
        %3378 = vmatprep.mubr.f32.mxu0 0.0
        %v3379 = vand.u32 %v2558, 4294901760
        %v3380 = vsub.f32 %v2558, %v3379
        %v3381 = vand.u32 %v3380, 4294901760
        %3382 = vmatmul.mubr.f32.gmra.mxu0 %v3381
        %v3383 = vpop.f32.mrf.mxu0
        %v3384 = vadd.f32 %v3302, %v3383
        %v3385 = vpop.f32.mrf.mxu0
        %3386 = vdwg.mxu0
        %3387 = vmatprep.subr.mxu0 0.0
        %3388 = vmatpush1.msra.mxu0 0.0
        %3389 = vmatprep.subr.mxu0 0.0
        %3390 = vmatpush1.msra.mxu0 0.0
        %3391 = vmatprep.subr.mxu0 0.0
        %3392 = vmatpush1.msra.mxu0 0.0
        %3393 = vmatprep.subr.mxu0 0.0
        %3394 = vmatpush1.msra.mxu0 0.0
        %3395 = vmatprep.subr.mxu0 0.0
        %3396 = vmatpush1.msra.mxu0 0.0
        %3397 = vmatprep.subr.mxu0 0.0
        %3398 = vmatpush1.msra.mxu0 0.0
        %3399 = vmatprep.subr.mxu0 0.0
        %3400 = vmatpush1.msra.mxu0 0.0
        %3401 = vmatprep.subr.mxu0 0.0
        %3402 = vmatpush1.msra.mxu0 0.0
        %3403 = vmatprep.subr.mxu0 0.0
        %3404 = vmatpush1.msra.mxu0 0.0
        %3405 = vmatprep.subr.mxu0 0.0
        %3406 = vmatpush1.msra.mxu0 0.0
        %3407 = vmatprep.subr.mxu0 0.0
        %3408 = vmatpush1.msra.mxu0 0.0
        %3409 = vmatprep.subr.mxu0 0.0
        %3410 = vmatpush1.msra.mxu0 0.0
        %3411 = vmatprep.subr.mxu0 0.0
        %3412 = vmatpush1.msra.mxu0 0.0
        %3413 = vmatprep.subr.mxu0 0.0
        %3414 = vmatpush1.msra.mxu0 0.0
        %3415 = vmatprep.subr.mxu0 0.0
        %3416 = vmatpush1.msra.mxu0 0.0
        %3417 = vmatprep.subr.mxu0 0.0
        %v3418 = vand.u32 %v3054, 4294901760
        %v3419 = vsub.f32 %v3054, %v3418
        %v3420 = vand.u32 %v3419, 4294901760
        %3421 = vmatpush1.msra.mxu0 %v3420
        %3422 = vmatprep.subr.mxu0 0.0
        %3423 = vmatpush2.msra.mxu0 0.0
        %3424 = vmatprep.subr.mxu0 0.0
        %3425 = vmatpush2.msra.mxu0 0.0
        %3426 = vmatprep.subr.mxu0 0.0
        %3427 = vmatpush2.msra.mxu0 0.0
        %3428 = vmatprep.subr.mxu0 0.0
        %3429 = vmatpush2.msra.mxu0 0.0
        %3430 = vmatprep.subr.mxu0 0.0
        %3431 = vmatpush2.msra.mxu0 0.0
        %3432 = vmatprep.subr.mxu0 0.0
        %3433 = vmatpush2.msra.mxu0 0.0
        %3434 = vmatprep.subr.mxu0 0.0
        %3435 = vmatpush2.msra.mxu0 0.0
        %3436 = vmatprep.subr.mxu0 0.0
        %3437 = vmatpush2.msra.mxu0 0.0
        %3438 = vmatprep.subr.mxu0 0.0
        %3439 = vmatpush2.msra.mxu0 0.0
        %3440 = vmatprep.subr.mxu0 0.0
        %3441 = vmatpush2.msra.mxu0 0.0
        %3442 = vmatprep.subr.mxu0 0.0
        %3443 = vmatpush2.msra.mxu0 0.0
        %3444 = vmatprep.subr.mxu0 0.0
        %3445 = vmatpush2.msra.mxu0 0.0
        %3446 = vmatprep.subr.mxu0 0.0
        %3447 = vmatpush2.msra.mxu0 0.0
        %3448 = vmatprep.subr.mxu0 0.0
        %3449 = vmatpush2.msra.mxu0 0.0
        %3450 = vmatprep.subr.mxu0 0.0
        %3451 = vmatpush2.msra.mxu0 0.0
        %3452 = vmatprep.subr.mxu0 0.0
        %3453 = vmatpush2.msra.mxu0 0.0
        %3454 = vmatprep.mubr.f32.mxu0 0.0
        %v3455 = vand.u32 %v2555, 4294901760
        %3456 = vmatmul.mubr.f32.gmra.mxu0 %v3455
        %v3457 = vpop.f32.mrf.mxu0
        %v3458 = vadd.f32 %v3376, %v3457
        %v3459 = vpop.f32.mrf.mxu0
        %3460 = vmatprep.mubr.f32.mxu0 0.0
        %v3461 = vand.u32 %v2558, 4294901760
        %3462 = vmatmul.mubr.f32.gmra.mxu0 %v3461
        %v3463 = vpop.f32.mrf.mxu0
        %v3464 = vadd.f32 %v3384, %v3463
        %v3465 = vpop.f32.mrf.mxu0
        %3466 = vdwg.mxu0
        %3467 = vmatprep.subr.mxu0 0.0
        %3468 = vmatpush1.msra.mxu0 0.0
        %3469 = vmatprep.subr.mxu0 0.0
        %3470 = vmatpush1.msra.mxu0 0.0
        %3471 = vmatprep.subr.mxu0 0.0
        %3472 = vmatpush1.msra.mxu0 0.0
        %3473 = vmatprep.subr.mxu0 0.0
        %3474 = vmatpush1.msra.mxu0 0.0
        %3475 = vmatprep.subr.mxu0 0.0
        %3476 = vmatpush1.msra.mxu0 0.0
        %3477 = vmatprep.subr.mxu0 0.0
        %3478 = vmatpush1.msra.mxu0 0.0
        %3479 = vmatprep.subr.mxu0 0.0
        %3480 = vmatpush1.msra.mxu0 0.0
        %3481 = vmatprep.subr.mxu0 0.0
        %3482 = vmatpush1.msra.mxu0 0.0
        %3483 = vmatprep.subr.mxu0 0.0
        %3484 = vmatpush1.msra.mxu0 0.0
        %3485 = vmatprep.subr.mxu0 0.0
        %3486 = vmatpush1.msra.mxu0 0.0
        %3487 = vmatprep.subr.mxu0 0.0
        %3488 = vmatpush1.msra.mxu0 0.0
        %3489 = vmatprep.subr.mxu0 0.0
        %3490 = vmatpush1.msra.mxu0 0.0
        %3491 = vmatprep.subr.mxu0 0.0
        %3492 = vmatpush1.msra.mxu0 0.0
        %3493 = vmatprep.subr.mxu0 0.0
        %3494 = vmatpush1.msra.mxu0 0.0
        %3495 = vmatprep.subr.mxu0 0.0
        %3496 = vmatpush1.msra.mxu0 0.0
        %3497 = vmatprep.subr.mxu0 0.0
        %v3498 = vand.u32 %v3054, 4294901760
        %3499 = vmatpush1.msra.mxu0 %v3498
        %3500 = vmatprep.subr.mxu0 0.0
        %3501 = vmatpush2.msra.mxu0 0.0
        %3502 = vmatprep.subr.mxu0 0.0
        %3503 = vmatpush2.msra.mxu0 0.0
        %3504 = vmatprep.subr.mxu0 0.0
        %3505 = vmatpush2.msra.mxu0 0.0
        %3506 = vmatprep.subr.mxu0 0.0
        %3507 = vmatpush2.msra.mxu0 0.0
        %3508 = vmatprep.subr.mxu0 0.0
        %3509 = vmatpush2.msra.mxu0 0.0
        %3510 = vmatprep.subr.mxu0 0.0
        %3511 = vmatpush2.msra.mxu0 0.0
        %3512 = vmatprep.subr.mxu0 0.0
        %3513 = vmatpush2.msra.mxu0 0.0
        %3514 = vmatprep.subr.mxu0 0.0
        %3515 = vmatpush2.msra.mxu0 0.0
        %3516 = vmatprep.subr.mxu0 0.0
        %3517 = vmatpush2.msra.mxu0 0.0
        %3518 = vmatprep.subr.mxu0 0.0
        %3519 = vmatpush2.msra.mxu0 0.0
        %3520 = vmatprep.subr.mxu0 0.0
        %3521 = vmatpush2.msra.mxu0 0.0
        %3522 = vmatprep.subr.mxu0 0.0
        %3523 = vmatpush2.msra.mxu0 0.0
        %3524 = vmatprep.subr.mxu0 0.0
        %3525 = vmatpush2.msra.mxu0 0.0
        %3526 = vmatprep.subr.mxu0 0.0
        %3527 = vmatpush2.msra.mxu0 0.0
        %3528 = vmatprep.subr.mxu0 0.0
        %3529 = vmatpush2.msra.mxu0 0.0
        %3530 = vmatprep.subr.mxu0 0.0
        %3531 = vmatpush2.msra.mxu0 0.0
        %3532 = vmatprep.mubr.f32.mxu0 0.0
        %v3533 = vand.u32 %v2555, 4294901760
        %3534 = vmatmul.mubr.f32.gmra.mxu0 %v3533
        %v3535 = vpop.f32.mrf.mxu0
        %v3536 = vadd.f32 %v3458, %v3535
        %v3537 = vpop.f32.mrf.mxu0
        %3538 = vmatprep.mubr.f32.mxu0 0.0
        %v3539 = vand.u32 %v2558, 4294901760
        %3540 = vmatmul.mubr.f32.gmra.mxu0 %v3539
        %v3541 = vpop.f32.mrf.mxu0
        %v3542 = vadd.f32 %v3464, %v3541
        %v3543 = vpop.f32.mrf.mxu0
        %3544 = vdwg.mxu0
        %v3545 = vld [vmem:[#allocation4] sm:$0xf]
        %v3547 = vsel %vm560, %v3545, 0
        %3549 = vmatprep.subr.mxu0 0.0
        %3550 = vmatpush1.msra.mxu0 0.0
        %3551 = vmatprep.subr.mxu0 0.0
        %3552 = vmatpush1.msra.mxu0 0.0
        %3553 = vmatprep.subr.mxu0 0.0
        %3554 = vmatpush1.msra.mxu0 0.0
        %3555 = vmatprep.subr.mxu0 0.0
        %3556 = vmatpush1.msra.mxu0 0.0
        %3557 = vmatprep.subr.mxu0 0.0
        %3558 = vmatpush1.msra.mxu0 0.0
        %3559 = vmatprep.subr.mxu0 0.0
        %3560 = vmatpush1.msra.mxu0 0.0
        %3561 = vmatprep.subr.mxu0 0.0
        %3562 = vmatpush1.msra.mxu0 0.0
        %3563 = vmatprep.subr.mxu0 0.0
        %3564 = vmatpush1.msra.mxu0 0.0
        %3565 = vmatprep.subr.mxu0 0.0
        %3566 = vmatpush1.msra.mxu0 0.0
        %3567 = vmatprep.subr.mxu0 0.0
        %3568 = vmatpush1.msra.mxu0 0.0
        %3569 = vmatprep.subr.mxu0 0.0
        %3570 = vmatpush1.msra.mxu0 0.0
        %3571 = vmatprep.subr.mxu0 0.0
        %3572 = vmatpush1.msra.mxu0 0.0
        %3573 = vmatprep.subr.mxu0 0.0
        %3574 = vmatpush1.msra.mxu0 0.0
        %3575 = vmatprep.subr.mxu0 0.0
        %3576 = vmatpush1.msra.mxu0 0.0
        %3577 = vmatprep.subr.mxu0 0.0
        %3578 = vmatpush1.msra.mxu0 0.0
        %3579 = vmatprep.subr.mxu0 0.0
        %v3580 = vand.u32 %v3547, 4294901760
        %3581 = vmatpush1.msra.mxu0 %v3580
        %3582 = vmatprep.subr.mxu0 0.0
        %3583 = vmatpush2.msra.mxu0 0.0
        %3584 = vmatprep.subr.mxu0 0.0
        %3585 = vmatpush2.msra.mxu0 0.0
        %3586 = vmatprep.subr.mxu0 0.0
        %3587 = vmatpush2.msra.mxu0 0.0
        %3588 = vmatprep.subr.mxu0 0.0
        %3589 = vmatpush2.msra.mxu0 0.0
        %3590 = vmatprep.subr.mxu0 0.0
        %3591 = vmatpush2.msra.mxu0 0.0
        %3592 = vmatprep.subr.mxu0 0.0
        %3593 = vmatpush2.msra.mxu0 0.0
        %3594 = vmatprep.subr.mxu0 0.0
        %3595 = vmatpush2.msra.mxu0 0.0
        %3596 = vmatprep.subr.mxu0 0.0
        %3597 = vmatpush2.msra.mxu0 0.0
        %3598 = vmatprep.subr.mxu0 0.0
        %3599 = vmatpush2.msra.mxu0 0.0
        %3600 = vmatprep.subr.mxu0 0.0
        %3601 = vmatpush2.msra.mxu0 0.0
        %3602 = vmatprep.subr.mxu0 0.0
        %3603 = vmatpush2.msra.mxu0 0.0
        %3604 = vmatprep.subr.mxu0 0.0
        %3605 = vmatpush2.msra.mxu0 0.0
        %3606 = vmatprep.subr.mxu0 0.0
        %3607 = vmatpush2.msra.mxu0 0.0
        %3608 = vmatprep.subr.mxu0 0.0
        %3609 = vmatpush2.msra.mxu0 0.0
        %3610 = vmatprep.subr.mxu0 0.0
        %3611 = vmatpush2.msra.mxu0 0.0
        %3612 = vmatprep.subr.mxu0 0.0
        %3613 = vmatpush2.msra.mxu0 0.0
        %3614 = vmatprep.mubr.f32.mxu0 0.0
        %v3615 = vand.u32 %v2555, 4294901760
        %v3616 = vsub.f32 %v2555, %v3615
        %v3617 = vand.u32 %v3616, 4294901760
        %v3618 = vsub.f32 %v3616, %v3617
        %v3619 = vand.u32 %v3618, 4294901760
        %3620 = vmatmul.mubr.f32.gmra.mxu0 %v3619
        %v3621 = vpop.f32.mrf.mxu0
        %v3622 = vadd.f32 0.0, %v3621
        %v3623 = vpop.f32.mrf.mxu0
        %3624 = vmatprep.mubr.f32.mxu0 0.0
        %v3625 = vand.u32 %v2558, 4294901760
        %v3626 = vsub.f32 %v2558, %v3625
        %v3627 = vand.u32 %v3626, 4294901760
        %v3628 = vsub.f32 %v3626, %v3627
        %v3629 = vand.u32 %v3628, 4294901760
        %3630 = vmatmul.mubr.f32.gmra.mxu0 %v3629
        %v3631 = vpop.f32.mrf.mxu0
        %v3632 = vadd.f32 0.0, %v3631
        %v3633 = vpop.f32.mrf.mxu0
        %3634 = vdwg.mxu0
        %3635 = vmatprep.subr.mxu0 0.0
        %3636 = vmatpush1.msra.mxu0 0.0
        %3637 = vmatprep.subr.mxu0 0.0
        %3638 = vmatpush1.msra.mxu0 0.0
        %3639 = vmatprep.subr.mxu0 0.0
        %3640 = vmatpush1.msra.mxu0 0.0
        %3641 = vmatprep.subr.mxu0 0.0
        %3642 = vmatpush1.msra.mxu0 0.0
        %3643 = vmatprep.subr.mxu0 0.0
        %3644 = vmatpush1.msra.mxu0 0.0
        %3645 = vmatprep.subr.mxu0 0.0
        %3646 = vmatpush1.msra.mxu0 0.0
        %3647 = vmatprep.subr.mxu0 0.0
        %3648 = vmatpush1.msra.mxu0 0.0
        %3649 = vmatprep.subr.mxu0 0.0
        %3650 = vmatpush1.msra.mxu0 0.0
        %3651 = vmatprep.subr.mxu0 0.0
        %3652 = vmatpush1.msra.mxu0 0.0
        %3653 = vmatprep.subr.mxu0 0.0
        %3654 = vmatpush1.msra.mxu0 0.0
        %3655 = vmatprep.subr.mxu0 0.0
        %3656 = vmatpush1.msra.mxu0 0.0
        %3657 = vmatprep.subr.mxu0 0.0
        %3658 = vmatpush1.msra.mxu0 0.0
        %3659 = vmatprep.subr.mxu0 0.0
        %3660 = vmatpush1.msra.mxu0 0.0
        %3661 = vmatprep.subr.mxu0 0.0
        %3662 = vmatpush1.msra.mxu0 0.0
        %3663 = vmatprep.subr.mxu0 0.0
        %3664 = vmatpush1.msra.mxu0 0.0
        %3665 = vmatprep.subr.mxu0 0.0
        %v3666 = vand.u32 %v3547, 4294901760
        %v3667 = vsub.f32 %v3547, %v3666
        %v3668 = vand.u32 %v3667, 4294901760
        %v3669 = vsub.f32 %v3667, %v3668
        %v3670 = vand.u32 %v3669, 4294901760
        %3671 = vmatpush1.msra.mxu0 %v3670
        %3672 = vmatprep.subr.mxu0 0.0
        %3673 = vmatpush2.msra.mxu0 0.0
        %3674 = vmatprep.subr.mxu0 0.0
        %3675 = vmatpush2.msra.mxu0 0.0
        %3676 = vmatprep.subr.mxu0 0.0
        %3677 = vmatpush2.msra.mxu0 0.0
        %3678 = vmatprep.subr.mxu0 0.0
        %3679 = vmatpush2.msra.mxu0 0.0
        %3680 = vmatprep.subr.mxu0 0.0
        %3681 = vmatpush2.msra.mxu0 0.0
        %3682 = vmatprep.subr.mxu0 0.0
        %3683 = vmatpush2.msra.mxu0 0.0
        %3684 = vmatprep.subr.mxu0 0.0
        %3685 = vmatpush2.msra.mxu0 0.0
        %3686 = vmatprep.subr.mxu0 0.0
        %3687 = vmatpush2.msra.mxu0 0.0
        %3688 = vmatprep.subr.mxu0 0.0
        %3689 = vmatpush2.msra.mxu0 0.0
        %3690 = vmatprep.subr.mxu0 0.0
        %3691 = vmatpush2.msra.mxu0 0.0
        %3692 = vmatprep.subr.mxu0 0.0
        %3693 = vmatpush2.msra.mxu0 0.0
        %3694 = vmatprep.subr.mxu0 0.0
        %3695 = vmatpush2.msra.mxu0 0.0
        %3696 = vmatprep.subr.mxu0 0.0
        %3697 = vmatpush2.msra.mxu0 0.0
        %3698 = vmatprep.subr.mxu0 0.0
        %3699 = vmatpush2.msra.mxu0 0.0
        %3700 = vmatprep.subr.mxu0 0.0
        %3701 = vmatpush2.msra.mxu0 0.0
        %3702 = vmatprep.subr.mxu0 0.0
        %3703 = vmatpush2.msra.mxu0 0.0
        %3704 = vmatprep.mubr.f32.mxu0 0.0
        %v3705 = vand.u32 %v2555, 4294901760
        %3706 = vmatmul.mubr.f32.gmra.mxu0 %v3705
        %v3707 = vpop.f32.mrf.mxu0
        %v3708 = vadd.f32 %v3622, %v3707
        %v3709 = vpop.f32.mrf.mxu0
        %3710 = vmatprep.mubr.f32.mxu0 0.0
        %v3711 = vand.u32 %v2558, 4294901760
        %3712 = vmatmul.mubr.f32.gmra.mxu0 %v3711
        %v3713 = vpop.f32.mrf.mxu0
        %v3714 = vadd.f32 %v3632, %v3713
        %v3715 = vpop.f32.mrf.mxu0
        %3716 = vdwg.mxu0
        %3717 = vmatprep.subr.mxu0 0.0
        %3718 = vmatpush1.msra.mxu0 0.0
        %3719 = vmatprep.subr.mxu0 0.0
        %3720 = vmatpush1.msra.mxu0 0.0
        %3721 = vmatprep.subr.mxu0 0.0
        %3722 = vmatpush1.msra.mxu0 0.0
        %3723 = vmatprep.subr.mxu0 0.0
        %3724 = vmatpush1.msra.mxu0 0.0
        %3725 = vmatprep.subr.mxu0 0.0
        %3726 = vmatpush1.msra.mxu0 0.0
        %3727 = vmatprep.subr.mxu0 0.0
        %3728 = vmatpush1.msra.mxu0 0.0
        %3729 = vmatprep.subr.mxu0 0.0
        %3730 = vmatpush1.msra.mxu0 0.0
        %3731 = vmatprep.subr.mxu0 0.0
        %3732 = vmatpush1.msra.mxu0 0.0
        %3733 = vmatprep.subr.mxu0 0.0
        %3734 = vmatpush1.msra.mxu0 0.0
        %3735 = vmatprep.subr.mxu0 0.0
        %3736 = vmatpush1.msra.mxu0 0.0
        %3737 = vmatprep.subr.mxu0 0.0
        %3738 = vmatpush1.msra.mxu0 0.0
        %3739 = vmatprep.subr.mxu0 0.0
        %3740 = vmatpush1.msra.mxu0 0.0
        %3741 = vmatprep.subr.mxu0 0.0
        %3742 = vmatpush1.msra.mxu0 0.0
        %3743 = vmatprep.subr.mxu0 0.0
        %3744 = vmatpush1.msra.mxu0 0.0
        %3745 = vmatprep.subr.mxu0 0.0
        %3746 = vmatpush1.msra.mxu0 0.0
        %3747 = vmatprep.subr.mxu0 0.0
        %v3748 = vand.u32 %v3547, 4294901760
        %v3749 = vsub.f32 %v3547, %v3748
        %3750 = vmatpush1.msra.mxu0 %v3749
        %3751 = vmatprep.subr.mxu0 0.0
        %3752 = vmatpush2.msra.mxu0 0.0
        %3753 = vmatprep.subr.mxu0 0.0
        %3754 = vmatpush2.msra.mxu0 0.0
        %3755 = vmatprep.subr.mxu0 0.0
        %3756 = vmatpush2.msra.mxu0 0.0
        %3757 = vmatprep.subr.mxu0 0.0
        %3758 = vmatpush2.msra.mxu0 0.0
        %3759 = vmatprep.subr.mxu0 0.0
        %3760 = vmatpush2.msra.mxu0 0.0
        %3761 = vmatprep.subr.mxu0 0.0
        %3762 = vmatpush2.msra.mxu0 0.0
        %3763 = vmatprep.subr.mxu0 0.0
        %3764 = vmatpush2.msra.mxu0 0.0
        %3765 = vmatprep.subr.mxu0 0.0
        %3766 = vmatpush2.msra.mxu0 0.0
        %3767 = vmatprep.subr.mxu0 0.0
        %3768 = vmatpush2.msra.mxu0 0.0
        %3769 = vmatprep.subr.mxu0 0.0
        %3770 = vmatpush2.msra.mxu0 0.0
        %3771 = vmatprep.subr.mxu0 0.0
        %3772 = vmatpush2.msra.mxu0 0.0
        %3773 = vmatprep.subr.mxu0 0.0
        %3774 = vmatpush2.msra.mxu0 0.0
        %3775 = vmatprep.subr.mxu0 0.0
        %3776 = vmatpush2.msra.mxu0 0.0
        %3777 = vmatprep.subr.mxu0 0.0
        %3778 = vmatpush2.msra.mxu0 0.0
        %3779 = vmatprep.subr.mxu0 0.0
        %3780 = vmatpush2.msra.mxu0 0.0
        %3781 = vmatprep.subr.mxu0 0.0
        %3782 = vmatpush2.msra.mxu0 0.0
        %3783 = vmatprep.mubr.f32.mxu0 0.0
        %v3784 = vand.u32 %v2555, 4294901760
        %v3785 = vsub.f32 %v2555, %v3784
        %3786 = vmatmul.mubr.f32.gmra.mxu0 %v3785
        %v3787 = vpop.f32.mrf.mxu0
        %v3788 = vadd.f32 %v3708, %v3787
        %v3789 = vpop.f32.mrf.mxu0
        %3790 = vmatprep.mubr.f32.mxu0 0.0
        %v3791 = vand.u32 %v2558, 4294901760
        %v3792 = vsub.f32 %v2558, %v3791
        %3793 = vmatmul.mubr.f32.gmra.mxu0 %v3792
        %v3794 = vpop.f32.mrf.mxu0
        %v3795 = vadd.f32 %v3714, %v3794
        %v3796 = vpop.f32.mrf.mxu0
        %3797 = vdwg.mxu0
        %3798 = vmatprep.subr.mxu0 0.0
        %3799 = vmatpush1.msra.mxu0 0.0
        %3800 = vmatprep.subr.mxu0 0.0
        %3801 = vmatpush1.msra.mxu0 0.0
        %3802 = vmatprep.subr.mxu0 0.0
        %3803 = vmatpush1.msra.mxu0 0.0
        %3804 = vmatprep.subr.mxu0 0.0
        %3805 = vmatpush1.msra.mxu0 0.0
        %3806 = vmatprep.subr.mxu0 0.0
        %3807 = vmatpush1.msra.mxu0 0.0
        %3808 = vmatprep.subr.mxu0 0.0
        %3809 = vmatpush1.msra.mxu0 0.0
        %3810 = vmatprep.subr.mxu0 0.0
        %3811 = vmatpush1.msra.mxu0 0.0
        %3812 = vmatprep.subr.mxu0 0.0
        %3813 = vmatpush1.msra.mxu0 0.0
        %3814 = vmatprep.subr.mxu0 0.0
        %3815 = vmatpush1.msra.mxu0 0.0
        %3816 = vmatprep.subr.mxu0 0.0
        %3817 = vmatpush1.msra.mxu0 0.0
        %3818 = vmatprep.subr.mxu0 0.0
        %3819 = vmatpush1.msra.mxu0 0.0
        %3820 = vmatprep.subr.mxu0 0.0
        %3821 = vmatpush1.msra.mxu0 0.0
        %3822 = vmatprep.subr.mxu0 0.0
        %3823 = vmatpush1.msra.mxu0 0.0
        %3824 = vmatprep.subr.mxu0 0.0
        %3825 = vmatpush1.msra.mxu0 0.0
        %3826 = vmatprep.subr.mxu0 0.0
        %3827 = vmatpush1.msra.mxu0 0.0
        %3828 = vmatprep.subr.mxu0 0.0
        %v3829 = vand.u32 %v3547, 4294901760
        %3830 = vmatpush1.msra.mxu0 %v3829
        %3831 = vmatprep.subr.mxu0 0.0
        %3832 = vmatpush2.msra.mxu0 0.0
        %3833 = vmatprep.subr.mxu0 0.0
        %3834 = vmatpush2.msra.mxu0 0.0
        %3835 = vmatprep.subr.mxu0 0.0
        %3836 = vmatpush2.msra.mxu0 0.0
        %3837 = vmatprep.subr.mxu0 0.0
        %3838 = vmatpush2.msra.mxu0 0.0
        %3839 = vmatprep.subr.mxu0 0.0
        %3840 = vmatpush2.msra.mxu0 0.0
        %3841 = vmatprep.subr.mxu0 0.0
        %3842 = vmatpush2.msra.mxu0 0.0
        %3843 = vmatprep.subr.mxu0 0.0
        %3844 = vmatpush2.msra.mxu0 0.0
        %3845 = vmatprep.subr.mxu0 0.0
        %3846 = vmatpush2.msra.mxu0 0.0
        %3847 = vmatprep.subr.mxu0 0.0
        %3848 = vmatpush2.msra.mxu0 0.0
        %3849 = vmatprep.subr.mxu0 0.0
        %3850 = vmatpush2.msra.mxu0 0.0
        %3851 = vmatprep.subr.mxu0 0.0
        %3852 = vmatpush2.msra.mxu0 0.0
        %3853 = vmatprep.subr.mxu0 0.0
        %3854 = vmatpush2.msra.mxu0 0.0
        %3855 = vmatprep.subr.mxu0 0.0
        %3856 = vmatpush2.msra.mxu0 0.0
        %3857 = vmatprep.subr.mxu0 0.0
        %3858 = vmatpush2.msra.mxu0 0.0
        %3859 = vmatprep.subr.mxu0 0.0
        %3860 = vmatpush2.msra.mxu0 0.0
        %3861 = vmatprep.subr.mxu0 0.0
        %3862 = vmatpush2.msra.mxu0 0.0
        %3863 = vmatprep.mubr.f32.mxu0 0.0
        %v3864 = vand.u32 %v2555, 4294901760
        %v3865 = vsub.f32 %v2555, %v3864
        %v3866 = vand.u32 %v3865, 4294901760
        %3867 = vmatmul.mubr.f32.gmra.mxu0 %v3866
        %v3868 = vpop.f32.mrf.mxu0
        %v3869 = vadd.f32 %v3788, %v3868
        %v3870 = vpop.f32.mrf.mxu0
        %3871 = vmatprep.mubr.f32.mxu0 0.0
        %v3872 = vand.u32 %v2558, 4294901760
        %v3873 = vsub.f32 %v2558, %v3872
        %v3874 = vand.u32 %v3873, 4294901760
        %3875 = vmatmul.mubr.f32.gmra.mxu0 %v3874
        %v3876 = vpop.f32.mrf.mxu0
        %v3877 = vadd.f32 %v3795, %v3876
        %v3878 = vpop.f32.mrf.mxu0
        %3879 = vdwg.mxu0
        %3880 = vmatprep.subr.mxu0 0.0
        %3881 = vmatpush1.msra.mxu0 0.0
        %3882 = vmatprep.subr.mxu0 0.0
        %3883 = vmatpush1.msra.mxu0 0.0
        %3884 = vmatprep.subr.mxu0 0.0
        %3885 = vmatpush1.msra.mxu0 0.0
        %3886 = vmatprep.subr.mxu0 0.0
        %3887 = vmatpush1.msra.mxu0 0.0
        %3888 = vmatprep.subr.mxu0 0.0
        %3889 = vmatpush1.msra.mxu0 0.0
        %3890 = vmatprep.subr.mxu0 0.0
        %3891 = vmatpush1.msra.mxu0 0.0
        %3892 = vmatprep.subr.mxu0 0.0
        %3893 = vmatpush1.msra.mxu0 0.0
        %3894 = vmatprep.subr.mxu0 0.0
        %3895 = vmatpush1.msra.mxu0 0.0
        %3896 = vmatprep.subr.mxu0 0.0
        %3897 = vmatpush1.msra.mxu0 0.0
        %3898 = vmatprep.subr.mxu0 0.0
        %3899 = vmatpush1.msra.mxu0 0.0
        %3900 = vmatprep.subr.mxu0 0.0
        %3901 = vmatpush1.msra.mxu0 0.0
        %3902 = vmatprep.subr.mxu0 0.0
        %3903 = vmatpush1.msra.mxu0 0.0
        %3904 = vmatprep.subr.mxu0 0.0
        %3905 = vmatpush1.msra.mxu0 0.0
        %3906 = vmatprep.subr.mxu0 0.0
        %3907 = vmatpush1.msra.mxu0 0.0
        %3908 = vmatprep.subr.mxu0 0.0
        %3909 = vmatpush1.msra.mxu0 0.0
        %3910 = vmatprep.subr.mxu0 0.0
        %v3911 = vand.u32 %v3547, 4294901760
        %v3912 = vsub.f32 %v3547, %v3911
        %v3913 = vand.u32 %v3912, 4294901760
        %3914 = vmatpush1.msra.mxu0 %v3913
        %3915 = vmatprep.subr.mxu0 0.0
        %3916 = vmatpush2.msra.mxu0 0.0
        %3917 = vmatprep.subr.mxu0 0.0
        %3918 = vmatpush2.msra.mxu0 0.0
        %3919 = vmatprep.subr.mxu0 0.0
        %3920 = vmatpush2.msra.mxu0 0.0
        %3921 = vmatprep.subr.mxu0 0.0
        %3922 = vmatpush2.msra.mxu0 0.0
        %3923 = vmatprep.subr.mxu0 0.0
        %3924 = vmatpush2.msra.mxu0 0.0
        %3925 = vmatprep.subr.mxu0 0.0
        %3926 = vmatpush2.msra.mxu0 0.0
        %3927 = vmatprep.subr.mxu0 0.0
        %3928 = vmatpush2.msra.mxu0 0.0
        %3929 = vmatprep.subr.mxu0 0.0
        %3930 = vmatpush2.msra.mxu0 0.0
        %3931 = vmatprep.subr.mxu0 0.0
        %3932 = vmatpush2.msra.mxu0 0.0
        %3933 = vmatprep.subr.mxu0 0.0
        %3934 = vmatpush2.msra.mxu0 0.0
        %3935 = vmatprep.subr.mxu0 0.0
        %3936 = vmatpush2.msra.mxu0 0.0
        %3937 = vmatprep.subr.mxu0 0.0
        %3938 = vmatpush2.msra.mxu0 0.0
        %3939 = vmatprep.subr.mxu0 0.0
        %3940 = vmatpush2.msra.mxu0 0.0
        %3941 = vmatprep.subr.mxu0 0.0
        %3942 = vmatpush2.msra.mxu0 0.0
        %3943 = vmatprep.subr.mxu0 0.0
        %3944 = vmatpush2.msra.mxu0 0.0
        %3945 = vmatprep.subr.mxu0 0.0
        %3946 = vmatpush2.msra.mxu0 0.0
        %3947 = vmatprep.mubr.f32.mxu0 0.0
        %v3948 = vand.u32 %v2555, 4294901760
        %3949 = vmatmul.mubr.f32.gmra.mxu0 %v3948
        %v3950 = vpop.f32.mrf.mxu0
        %v3951 = vadd.f32 %v3869, %v3950
        %v3952 = vpop.f32.mrf.mxu0
        %3953 = vmatprep.mubr.f32.mxu0 0.0
        %v3954 = vand.u32 %v2558, 4294901760
        %3955 = vmatmul.mubr.f32.gmra.mxu0 %v3954
        %v3956 = vpop.f32.mrf.mxu0
        %v3957 = vadd.f32 %v3877, %v3956
        %v3958 = vpop.f32.mrf.mxu0
        %3959 = vdwg.mxu0
        %3960 = vmatprep.subr.mxu0 0.0
        %3961 = vmatpush1.msra.mxu0 0.0
        %3962 = vmatprep.subr.mxu0 0.0
        %3963 = vmatpush1.msra.mxu0 0.0
        %3964 = vmatprep.subr.mxu0 0.0
        %3965 = vmatpush1.msra.mxu0 0.0
        %3966 = vmatprep.subr.mxu0 0.0
        %3967 = vmatpush1.msra.mxu0 0.0
        %3968 = vmatprep.subr.mxu0 0.0
        %3969 = vmatpush1.msra.mxu0 0.0
        %3970 = vmatprep.subr.mxu0 0.0
        %3971 = vmatpush1.msra.mxu0 0.0
        %3972 = vmatprep.subr.mxu0 0.0
        %3973 = vmatpush1.msra.mxu0 0.0
        %3974 = vmatprep.subr.mxu0 0.0
        %3975 = vmatpush1.msra.mxu0 0.0
        %3976 = vmatprep.subr.mxu0 0.0
        %3977 = vmatpush1.msra.mxu0 0.0
        %3978 = vmatprep.subr.mxu0 0.0
        %3979 = vmatpush1.msra.mxu0 0.0
        %3980 = vmatprep.subr.mxu0 0.0
        %3981 = vmatpush1.msra.mxu0 0.0
        %3982 = vmatprep.subr.mxu0 0.0
        %3983 = vmatpush1.msra.mxu0 0.0
        %3984 = vmatprep.subr.mxu0 0.0
        %3985 = vmatpush1.msra.mxu0 0.0
        %3986 = vmatprep.subr.mxu0 0.0
        %3987 = vmatpush1.msra.mxu0 0.0
        %3988 = vmatprep.subr.mxu0 0.0
        %3989 = vmatpush1.msra.mxu0 0.0
        %3990 = vmatprep.subr.mxu0 0.0
        %v3991 = vand.u32 %v3547, 4294901760
        %3992 = vmatpush1.msra.mxu0 %v3991
        %3993 = vmatprep.subr.mxu0 0.0
        %3994 = vmatpush2.msra.mxu0 0.0
        %3995 = vmatprep.subr.mxu0 0.0
        %3996 = vmatpush2.msra.mxu0 0.0
        %3997 = vmatprep.subr.mxu0 0.0
        %3998 = vmatpush2.msra.mxu0 0.0
        %3999 = vmatprep.subr.mxu0 0.0
        %4000 = vmatpush2.msra.mxu0 0.0
        %4001 = vmatprep.subr.mxu0 0.0
        %4002 = vmatpush2.msra.mxu0 0.0
        %4003 = vmatprep.subr.mxu0 0.0
        %4004 = vmatpush2.msra.mxu0 0.0
        %4005 = vmatprep.subr.mxu0 0.0
        %4006 = vmatpush2.msra.mxu0 0.0
        %4007 = vmatprep.subr.mxu0 0.0
        %4008 = vmatpush2.msra.mxu0 0.0
        %4009 = vmatprep.subr.mxu0 0.0
        %4010 = vmatpush2.msra.mxu0 0.0
        %4011 = vmatprep.subr.mxu0 0.0
        %4012 = vmatpush2.msra.mxu0 0.0
        %4013 = vmatprep.subr.mxu0 0.0
        %4014 = vmatpush2.msra.mxu0 0.0
        %4015 = vmatprep.subr.mxu0 0.0
        %4016 = vmatpush2.msra.mxu0 0.0
        %4017 = vmatprep.subr.mxu0 0.0
        %4018 = vmatpush2.msra.mxu0 0.0
        %4019 = vmatprep.subr.mxu0 0.0
        %4020 = vmatpush2.msra.mxu0 0.0
        %4021 = vmatprep.subr.mxu0 0.0
        %4022 = vmatpush2.msra.mxu0 0.0
        %4023 = vmatprep.subr.mxu0 0.0
        %4024 = vmatpush2.msra.mxu0 0.0
        %4025 = vmatprep.mubr.f32.mxu0 0.0
        %v4026 = vand.u32 %v2555, 4294901760
        %4027 = vmatmul.mubr.f32.gmra.mxu0 %v4026
        %v4028 = vpop.f32.mrf.mxu0
        %v4029 = vadd.f32 %v3951, %v4028
        %v4030 = vpop.f32.mrf.mxu0
        %4031 = vmatprep.mubr.f32.mxu0 0.0
        %v4032 = vand.u32 %v2558, 4294901760
        %4033 = vmatmul.mubr.f32.gmra.mxu0 %v4032
        %v4034 = vpop.f32.mrf.mxu0
        %v4035 = vadd.f32 %v3957, %v4034
        %v4036 = vpop.f32.mrf.mxu0
        %4037 = vdwg.mxu0
        %v4038 = vmul.f32 %v3043, %v3043
        %v4039 = vmul.f32 %v3049, %v3049
        %v4040 = vmul.f32 %v3536, %v3536
        %v4041 = vmul.f32 %v3542, %v3542
        %v4042 = vadd.f32 %v4038, %v4040
        %v4043 = vadd.f32 %v4039, %v4041
        %v4044 = vmul.f32 %v4029, %v4029
        %v4045 = vmul.f32 %v4035, %v4035
        %v4046 = vadd.f32 %v4042, %v4044
        %v4047 = vadd.f32 %v4043, %v4045
        %v4048 = vrsqrt.pop %v4046
        %v4049 = vmul.f32 %v4046, %v4048
        %vm4050 = vcmp.eq.f32.partialorder %v4046, inf
        %v4051 = vsel %vm4050, %v4046, %v4049
        %vm4052 = vcmp.eq.f32.partialorder %v4046, 0.0
        %v4053 = vand.u32 %v4046, 2147483648
        %v4054 = vsel %vm4052, %v4053, %v4051
        %v4055 = vrsqrt.pop %v4047
        %v4056 = vmul.f32 %v4047, %v4055
        %vm4057 = vcmp.eq.f32.partialorder %v4047, inf
        %v4058 = vsel %vm4057, %v4047, %v4056
        %vm4059 = vcmp.eq.f32.partialorder %v4047, 0.0
        %v4060 = vand.u32 %v4047, 2147483648
        %v4061 = vsel %vm4059, %v4060, %v4058
        %v4062 = vmul.f32 %v2064, %v4054
        %v4063 = vmul.f32 %v2064, %v4061
        %v4064 = vmul.f32 %v4062, 1.442695
        %v4065 = vpow.pop %v4064
        %v4066 = vmul.f32 %v4063, 1.442695
        %v4067 = vpow.pop %v4066
        %v4068 = vmul.f32 %v3043, %v2071
        %v4069 = vmul.f32 %v3049, %v2071
        %v4070 = vmul.f32 %v4068, %v4065
        %v4071 = vmul.f32 %v4069, %v4067
        %v4072 = vmul.f32 %v4070, %v4070
        %v4073 = vmul.f32 %v4071, %v4071
        %4074 = vmatprep.subr.mxu0 0.0
        %4075 = vmatpush1.msra.mxu0 0.0
        %4076 = vmatprep.subr.mxu0 0.0
        %4077 = vmatpush1.msra.mxu0 0.0
        %4078 = vmatprep.subr.mxu0 0.0
        %4079 = vmatpush1.msra.mxu0 0.0
        %4080 = vmatprep.subr.mxu0 0.0
        %4081 = vmatpush1.msra.mxu0 0.0
        %4082 = vmatprep.subr.mxu0 0.0
        %4083 = vmatpush1.msra.mxu0 0.0
        %4084 = vmatprep.subr.mxu0 0.0
        %4085 = vmatpush1.msra.mxu0 0.0
        %4086 = vmatprep.subr.mxu0 0.0
        %4087 = vmatpush1.msra.mxu0 0.0
        %4088 = vmatprep.subr.mxu0 0.0
        %4089 = vmatpush1.msra.mxu0 0.0
        %4090 = vmatprep.subr.mxu0 0.0
        %4091 = vmatpush1.msra.mxu0 0.0
        %4092 = vmatprep.subr.mxu0 0.0
        %4093 = vmatpush1.msra.mxu0 0.0
        %4094 = vmatprep.subr.mxu0 0.0
        %4095 = vmatpush1.msra.mxu0 0.0
        %4096 = vmatprep.subr.mxu0 0.0
        %4097 = vmatpush1.msra.mxu0 0.0
        %4098 = vmatprep.subr.mxu0 0.0
        %4099 = vmatpush1.msra.mxu0 0.0
        %4100 = vmatprep.subr.mxu0 0.0
        %4101 = vmatpush1.msra.mxu0 0.0
        %4102 = vmatprep.subr.mxu0 0.0
        %v4103 = vand.u32 %v4073, 4294901760
        %4104 = vmatpush1.msra.mxu0 %v4103
        %4105 = vmatprep.subr.mxu0 0.0
        %v4106 = vand.u32 %v4072, 4294901760
        %4107 = vmatpush1.msra.mxu0 %v4106
        %4108 = vmatprep.subr.mxu0 0.0
        %4109 = vmatpush2.msra.mxu0 0.0
        %4110 = vmatprep.subr.mxu0 0.0
        %4111 = vmatpush2.msra.mxu0 0.0
        %4112 = vmatprep.subr.mxu0 0.0
        %4113 = vmatpush2.msra.mxu0 0.0
        %4114 = vmatprep.subr.mxu0 0.0
        %4115 = vmatpush2.msra.mxu0 0.0
        %4116 = vmatprep.subr.mxu0 0.0
        %4117 = vmatpush2.msra.mxu0 0.0
        %4118 = vmatprep.subr.mxu0 0.0
        %4119 = vmatpush2.msra.mxu0 0.0
        %4120 = vmatprep.subr.mxu0 0.0
        %4121 = vmatpush2.msra.mxu0 0.0
        %4122 = vmatprep.subr.mxu0 0.0
        %4123 = vmatpush2.msra.mxu0 0.0
        %4124 = vmatprep.subr.mxu0 0.0
        %4125 = vmatpush2.msra.mxu0 0.0
        %4126 = vmatprep.subr.mxu0 0.0
        %4127 = vmatpush2.msra.mxu0 0.0
        %4128 = vmatprep.subr.mxu0 0.0
        %4129 = vmatpush2.msra.mxu0 0.0
        %4130 = vmatprep.subr.mxu0 0.0
        %4131 = vmatpush2.msra.mxu0 0.0
        %4132 = vmatprep.subr.mxu0 0.0
        %4133 = vmatpush2.msra.mxu0 0.0
        %4134 = vmatprep.subr.mxu0 0.0
        %4135 = vmatpush2.msra.mxu0 0.0
        %4136 = vmatprep.subr.mxu0 0.0
        %4137 = vmatpush2.msra.mxu0 0.0
        %4138 = vmatprep.subr.mxu0 0.0
        %4139 = vmatpush2.msra.mxu0 0.0
        %4140 = vmatprep.mubr.f32.mxu0 0.0
        %v4141 = vand.u32 %v2082, 4294901760
        %v4142 = vsub.f32 %v2082, %v4141
        %v4143 = vand.u32 %v4142, 4294901760
        %v4144 = vsub.f32 %v4142, %v4143
        %v4145 = vand.u32 %v4144, 4294901760
        %4146 = vmatmul.mubr.f32.gmra.mxu0 %v4145
        %v4147 = vpop.f32.mrf.mxu0
        %v4148 = vadd.f32 0.0, %v4147
        %v4149 = vpop.f32.mrf.mxu0
        %4150 = vdwg.mxu0
        %4151 = vmatprep.subr.mxu0 0.0
        %4152 = vmatpush1.msra.mxu0 0.0
        %4153 = vmatprep.subr.mxu0 0.0
        %4154 = vmatpush1.msra.mxu0 0.0
        %4155 = vmatprep.subr.mxu0 0.0
        %4156 = vmatpush1.msra.mxu0 0.0
        %4157 = vmatprep.subr.mxu0 0.0
        %4158 = vmatpush1.msra.mxu0 0.0
        %4159 = vmatprep.subr.mxu0 0.0
        %4160 = vmatpush1.msra.mxu0 0.0
        %4161 = vmatprep.subr.mxu0 0.0
        %4162 = vmatpush1.msra.mxu0 0.0
        %4163 = vmatprep.subr.mxu0 0.0
        %4164 = vmatpush1.msra.mxu0 0.0
        %4165 = vmatprep.subr.mxu0 0.0
        %4166 = vmatpush1.msra.mxu0 0.0
        %4167 = vmatprep.subr.mxu0 0.0
        %4168 = vmatpush1.msra.mxu0 0.0
        %4169 = vmatprep.subr.mxu0 0.0
        %4170 = vmatpush1.msra.mxu0 0.0
        %4171 = vmatprep.subr.mxu0 0.0
        %4172 = vmatpush1.msra.mxu0 0.0
        %4173 = vmatprep.subr.mxu0 0.0
        %4174 = vmatpush1.msra.mxu0 0.0
        %4175 = vmatprep.subr.mxu0 0.0
        %4176 = vmatpush1.msra.mxu0 0.0
        %4177 = vmatprep.subr.mxu0 0.0
        %4178 = vmatpush1.msra.mxu0 0.0
        %4179 = vmatprep.subr.mxu0 0.0
        %v4180 = vand.u32 %v4073, 4294901760
        %v4181 = vsub.f32 %v4073, %v4180
        %v4182 = vand.u32 %v4181, 4294901760
        %v4183 = vsub.f32 %v4181, %v4182
        %v4184 = vand.u32 %v4183, 4294901760
        %4185 = vmatpush1.msra.mxu0 %v4184
        %4186 = vmatprep.subr.mxu0 0.0
        %v4187 = vand.u32 %v4072, 4294901760
        %v4188 = vsub.f32 %v4072, %v4187
        %v4189 = vand.u32 %v4188, 4294901760
        %v4190 = vsub.f32 %v4188, %v4189
        %v4191 = vand.u32 %v4190, 4294901760
        %4192 = vmatpush1.msra.mxu0 %v4191
        %4193 = vmatprep.subr.mxu0 0.0
        %4194 = vmatpush2.msra.mxu0 0.0
        %4195 = vmatprep.subr.mxu0 0.0
        %4196 = vmatpush2.msra.mxu0 0.0
        %4197 = vmatprep.subr.mxu0 0.0
        %4198 = vmatpush2.msra.mxu0 0.0
        %4199 = vmatprep.subr.mxu0 0.0
        %4200 = vmatpush2.msra.mxu0 0.0
        %4201 = vmatprep.subr.mxu0 0.0
        %4202 = vmatpush2.msra.mxu0 0.0
        %4203 = vmatprep.subr.mxu0 0.0
        %4204 = vmatpush2.msra.mxu0 0.0
        %4205 = vmatprep.subr.mxu0 0.0
        %4206 = vmatpush2.msra.mxu0 0.0
        %4207 = vmatprep.subr.mxu0 0.0
        %4208 = vmatpush2.msra.mxu0 0.0
        %4209 = vmatprep.subr.mxu0 0.0
        %4210 = vmatpush2.msra.mxu0 0.0
        %4211 = vmatprep.subr.mxu0 0.0
        %4212 = vmatpush2.msra.mxu0 0.0
        %4213 = vmatprep.subr.mxu0 0.0
        %4214 = vmatpush2.msra.mxu0 0.0
        %4215 = vmatprep.subr.mxu0 0.0
        %4216 = vmatpush2.msra.mxu0 0.0
        %4217 = vmatprep.subr.mxu0 0.0
        %4218 = vmatpush2.msra.mxu0 0.0
        %4219 = vmatprep.subr.mxu0 0.0
        %4220 = vmatpush2.msra.mxu0 0.0
        %4221 = vmatprep.subr.mxu0 0.0
        %4222 = vmatpush2.msra.mxu0 0.0
        %4223 = vmatprep.subr.mxu0 0.0
        %4224 = vmatpush2.msra.mxu0 0.0
        %4225 = vmatprep.mubr.f32.mxu0 0.0
        %v4226 = vand.u32 %v2082, 4294901760
        %4227 = vmatmul.mubr.f32.gmra.mxu0 %v4226
        %v4228 = vpop.f32.mrf.mxu0
        %v4229 = vadd.f32 %v4148, %v4228
        %v4230 = vpop.f32.mrf.mxu0
        %4231 = vdwg.mxu0
        %4232 = vmatprep.subr.mxu0 0.0
        %4233 = vmatpush1.msra.mxu0 0.0
        %4234 = vmatprep.subr.mxu0 0.0
        %4235 = vmatpush1.msra.mxu0 0.0
        %4236 = vmatprep.subr.mxu0 0.0
        %4237 = vmatpush1.msra.mxu0 0.0
        %4238 = vmatprep.subr.mxu0 0.0
        %4239 = vmatpush1.msra.mxu0 0.0
        %4240 = vmatprep.subr.mxu0 0.0
        %4241 = vmatpush1.msra.mxu0 0.0
        %4242 = vmatprep.subr.mxu0 0.0
        %4243 = vmatpush1.msra.mxu0 0.0
        %4244 = vmatprep.subr.mxu0 0.0
        %4245 = vmatpush1.msra.mxu0 0.0
        %4246 = vmatprep.subr.mxu0 0.0
        %4247 = vmatpush1.msra.mxu0 0.0
        %4248 = vmatprep.subr.mxu0 0.0
        %4249 = vmatpush1.msra.mxu0 0.0
        %4250 = vmatprep.subr.mxu0 0.0
        %4251 = vmatpush1.msra.mxu0 0.0
        %4252 = vmatprep.subr.mxu0 0.0
        %4253 = vmatpush1.msra.mxu0 0.0
        %4254 = vmatprep.subr.mxu0 0.0
        %4255 = vmatpush1.msra.mxu0 0.0
        %4256 = vmatprep.subr.mxu0 0.0
        %4257 = vmatpush1.msra.mxu0 0.0
        %4258 = vmatprep.subr.mxu0 0.0
        %4259 = vmatpush1.msra.mxu0 0.0
        %4260 = vmatprep.subr.mxu0 0.0
        %v4261 = vand.u32 %v4073, 4294901760
        %v4262 = vsub.f32 %v4073, %v4261
        %4263 = vmatpush1.msra.mxu0 %v4262
        %4264 = vmatprep.subr.mxu0 0.0
        %v4265 = vand.u32 %v4072, 4294901760
        %v4266 = vsub.f32 %v4072, %v4265
        %4267 = vmatpush1.msra.mxu0 %v4266
        %4268 = vmatprep.subr.mxu0 0.0
        %4269 = vmatpush2.msra.mxu0 0.0
        %4270 = vmatprep.subr.mxu0 0.0
        %4271 = vmatpush2.msra.mxu0 0.0
        %4272 = vmatprep.subr.mxu0 0.0
        %4273 = vmatpush2.msra.mxu0 0.0
        %4274 = vmatprep.subr.mxu0 0.0
        %4275 = vmatpush2.msra.mxu0 0.0
        %4276 = vmatprep.subr.mxu0 0.0
        %4277 = vmatpush2.msra.mxu0 0.0
        %4278 = vmatprep.subr.mxu0 0.0
        %4279 = vmatpush2.msra.mxu0 0.0
        %4280 = vmatprep.subr.mxu0 0.0
        %4281 = vmatpush2.msra.mxu0 0.0
        %4282 = vmatprep.subr.mxu0 0.0
        %4283 = vmatpush2.msra.mxu0 0.0
        %4284 = vmatprep.subr.mxu0 0.0
        %4285 = vmatpush2.msra.mxu0 0.0
        %4286 = vmatprep.subr.mxu0 0.0
        %4287 = vmatpush2.msra.mxu0 0.0
        %4288 = vmatprep.subr.mxu0 0.0
        %4289 = vmatpush2.msra.mxu0 0.0
        %4290 = vmatprep.subr.mxu0 0.0
        %4291 = vmatpush2.msra.mxu0 0.0
        %4292 = vmatprep.subr.mxu0 0.0
        %4293 = vmatpush2.msra.mxu0 0.0
        %4294 = vmatprep.subr.mxu0 0.0
        %4295 = vmatpush2.msra.mxu0 0.0
        %4296 = vmatprep.subr.mxu0 0.0
        %4297 = vmatpush2.msra.mxu0 0.0
        %4298 = vmatprep.subr.mxu0 0.0
        %4299 = vmatpush2.msra.mxu0 0.0
        %4300 = vmatprep.mubr.f32.mxu0 0.0
        %v4301 = vand.u32 %v2082, 4294901760
        %v4302 = vsub.f32 %v2082, %v4301
        %4303 = vmatmul.mubr.f32.gmra.mxu0 %v4302
        %v4304 = vpop.f32.mrf.mxu0
        %v4305 = vadd.f32 %v4229, %v4304
        %v4306 = vpop.f32.mrf.mxu0
        %4307 = vdwg.mxu0
        %4308 = vmatprep.subr.mxu0 0.0
        %4309 = vmatpush1.msra.mxu0 0.0
        %4310 = vmatprep.subr.mxu0 0.0
        %4311 = vmatpush1.msra.mxu0 0.0
        %4312 = vmatprep.subr.mxu0 0.0
        %4313 = vmatpush1.msra.mxu0 0.0
        %4314 = vmatprep.subr.mxu0 0.0
        %4315 = vmatpush1.msra.mxu0 0.0
        %4316 = vmatprep.subr.mxu0 0.0
        %4317 = vmatpush1.msra.mxu0 0.0
        %4318 = vmatprep.subr.mxu0 0.0
        %4319 = vmatpush1.msra.mxu0 0.0
        %4320 = vmatprep.subr.mxu0 0.0
        %4321 = vmatpush1.msra.mxu0 0.0
        %4322 = vmatprep.subr.mxu0 0.0
        %4323 = vmatpush1.msra.mxu0 0.0
        %4324 = vmatprep.subr.mxu0 0.0
        %4325 = vmatpush1.msra.mxu0 0.0
        %4326 = vmatprep.subr.mxu0 0.0
        %4327 = vmatpush1.msra.mxu0 0.0
        %4328 = vmatprep.subr.mxu0 0.0
        %4329 = vmatpush1.msra.mxu0 0.0
        %4330 = vmatprep.subr.mxu0 0.0
        %4331 = vmatpush1.msra.mxu0 0.0
        %4332 = vmatprep.subr.mxu0 0.0
        %4333 = vmatpush1.msra.mxu0 0.0
        %4334 = vmatprep.subr.mxu0 0.0
        %4335 = vmatpush1.msra.mxu0 0.0
        %4336 = vmatprep.subr.mxu0 0.0
        %v4337 = vand.u32 %v4073, 4294901760
        %4338 = vmatpush1.msra.mxu0 %v4337
        %4339 = vmatprep.subr.mxu0 0.0
        %v4340 = vand.u32 %v4072, 4294901760
        %4341 = vmatpush1.msra.mxu0 %v4340
        %4342 = vmatprep.subr.mxu0 0.0
        %4343 = vmatpush2.msra.mxu0 0.0
        %4344 = vmatprep.subr.mxu0 0.0
        %4345 = vmatpush2.msra.mxu0 0.0
        %4346 = vmatprep.subr.mxu0 0.0
        %4347 = vmatpush2.msra.mxu0 0.0
        %4348 = vmatprep.subr.mxu0 0.0
        %4349 = vmatpush2.msra.mxu0 0.0
        %4350 = vmatprep.subr.mxu0 0.0
        %4351 = vmatpush2.msra.mxu0 0.0
        %4352 = vmatprep.subr.mxu0 0.0
        %4353 = vmatpush2.msra.mxu0 0.0
        %4354 = vmatprep.subr.mxu0 0.0
        %4355 = vmatpush2.msra.mxu0 0.0
        %4356 = vmatprep.subr.mxu0 0.0
        %4357 = vmatpush2.msra.mxu0 0.0
        %4358 = vmatprep.subr.mxu0 0.0
        %4359 = vmatpush2.msra.mxu0 0.0
        %4360 = vmatprep.subr.mxu0 0.0
        %4361 = vmatpush2.msra.mxu0 0.0
        %4362 = vmatprep.subr.mxu0 0.0
        %4363 = vmatpush2.msra.mxu0 0.0
        %4364 = vmatprep.subr.mxu0 0.0
        %4365 = vmatpush2.msra.mxu0 0.0
        %4366 = vmatprep.subr.mxu0 0.0
        %4367 = vmatpush2.msra.mxu0 0.0
        %4368 = vmatprep.subr.mxu0 0.0
        %4369 = vmatpush2.msra.mxu0 0.0
        %4370 = vmatprep.subr.mxu0 0.0
        %4371 = vmatpush2.msra.mxu0 0.0
        %4372 = vmatprep.subr.mxu0 0.0
        %4373 = vmatpush2.msra.mxu0 0.0
        %4374 = vmatprep.mubr.f32.mxu0 0.0
        %v4375 = vand.u32 %v2082, 4294901760
        %v4376 = vsub.f32 %v2082, %v4375
        %v4377 = vand.u32 %v4376, 4294901760
        %4378 = vmatmul.mubr.f32.gmra.mxu0 %v4377
        %v4379 = vpop.f32.mrf.mxu0
        %v4380 = vadd.f32 %v4305, %v4379
        %v4381 = vpop.f32.mrf.mxu0
        %4382 = vdwg.mxu0
        %4383 = vmatprep.subr.mxu0 0.0
        %4384 = vmatpush1.msra.mxu0 0.0
        %4385 = vmatprep.subr.mxu0 0.0
        %4386 = vmatpush1.msra.mxu0 0.0
        %4387 = vmatprep.subr.mxu0 0.0
        %4388 = vmatpush1.msra.mxu0 0.0
        %4389 = vmatprep.subr.mxu0 0.0
        %4390 = vmatpush1.msra.mxu0 0.0
        %4391 = vmatprep.subr.mxu0 0.0
        %4392 = vmatpush1.msra.mxu0 0.0
        %4393 = vmatprep.subr.mxu0 0.0
        %4394 = vmatpush1.msra.mxu0 0.0
        %4395 = vmatprep.subr.mxu0 0.0
        %4396 = vmatpush1.msra.mxu0 0.0
        %4397 = vmatprep.subr.mxu0 0.0
        %4398 = vmatpush1.msra.mxu0 0.0
        %4399 = vmatprep.subr.mxu0 0.0
        %4400 = vmatpush1.msra.mxu0 0.0
        %4401 = vmatprep.subr.mxu0 0.0
        %4402 = vmatpush1.msra.mxu0 0.0
        %4403 = vmatprep.subr.mxu0 0.0
        %4404 = vmatpush1.msra.mxu0 0.0
        %4405 = vmatprep.subr.mxu0 0.0
        %4406 = vmatpush1.msra.mxu0 0.0
        %4407 = vmatprep.subr.mxu0 0.0
        %4408 = vmatpush1.msra.mxu0 0.0
        %4409 = vmatprep.subr.mxu0 0.0
        %4410 = vmatpush1.msra.mxu0 0.0
        %4411 = vmatprep.subr.mxu0 0.0
        %v4412 = vand.u32 %v4073, 4294901760
        %v4413 = vsub.f32 %v4073, %v4412
        %v4414 = vand.u32 %v4413, 4294901760
        %4415 = vmatpush1.msra.mxu0 %v4414
        %4416 = vmatprep.subr.mxu0 0.0
        %v4417 = vand.u32 %v4072, 4294901760
        %v4418 = vsub.f32 %v4072, %v4417
        %v4419 = vand.u32 %v4418, 4294901760
        %4420 = vmatpush1.msra.mxu0 %v4419
        %4421 = vmatprep.subr.mxu0 0.0
        %4422 = vmatpush2.msra.mxu0 0.0
        %4423 = vmatprep.subr.mxu0 0.0
        %4424 = vmatpush2.msra.mxu0 0.0
        %4425 = vmatprep.subr.mxu0 0.0
        %4426 = vmatpush2.msra.mxu0 0.0
        %4427 = vmatprep.subr.mxu0 0.0
        %4428 = vmatpush2.msra.mxu0 0.0
        %4429 = vmatprep.subr.mxu0 0.0
        %4430 = vmatpush2.msra.mxu0 0.0
        %4431 = vmatprep.subr.mxu0 0.0
        %4432 = vmatpush2.msra.mxu0 0.0
        %4433 = vmatprep.subr.mxu0 0.0
        %4434 = vmatpush2.msra.mxu0 0.0
        %4435 = vmatprep.subr.mxu0 0.0
        %4436 = vmatpush2.msra.mxu0 0.0
        %4437 = vmatprep.subr.mxu0 0.0
        %4438 = vmatpush2.msra.mxu0 0.0
        %4439 = vmatprep.subr.mxu0 0.0
        %4440 = vmatpush2.msra.mxu0 0.0
        %4441 = vmatprep.subr.mxu0 0.0
        %4442 = vmatpush2.msra.mxu0 0.0
        %4443 = vmatprep.subr.mxu0 0.0
        %4444 = vmatpush2.msra.mxu0 0.0
        %4445 = vmatprep.subr.mxu0 0.0
        %4446 = vmatpush2.msra.mxu0 0.0
        %4447 = vmatprep.subr.mxu0 0.0
        %4448 = vmatpush2.msra.mxu0 0.0
        %4449 = vmatprep.subr.mxu0 0.0
        %4450 = vmatpush2.msra.mxu0 0.0
        %4451 = vmatprep.subr.mxu0 0.0
        %4452 = vmatpush2.msra.mxu0 0.0
        %4453 = vmatprep.mubr.f32.mxu0 0.0
        %v4454 = vand.u32 %v2082, 4294901760
        %4455 = vmatmul.mubr.f32.gmra.mxu0 %v4454
        %v4456 = vpop.f32.mrf.mxu0
        %v4457 = vadd.f32 %v4380, %v4456
        %v4458 = vpop.f32.mrf.mxu0
        %4459 = vdwg.mxu0
        %4460 = vmatprep.subr.mxu0 0.0
        %4461 = vmatpush1.msra.mxu0 0.0
        %4462 = vmatprep.subr.mxu0 0.0
        %4463 = vmatpush1.msra.mxu0 0.0
        %4464 = vmatprep.subr.mxu0 0.0
        %4465 = vmatpush1.msra.mxu0 0.0
        %4466 = vmatprep.subr.mxu0 0.0
        %4467 = vmatpush1.msra.mxu0 0.0
        %4468 = vmatprep.subr.mxu0 0.0
        %4469 = vmatpush1.msra.mxu0 0.0
        %4470 = vmatprep.subr.mxu0 0.0
        %4471 = vmatpush1.msra.mxu0 0.0
        %4472 = vmatprep.subr.mxu0 0.0
        %4473 = vmatpush1.msra.mxu0 0.0
        %4474 = vmatprep.subr.mxu0 0.0
        %4475 = vmatpush1.msra.mxu0 0.0
        %4476 = vmatprep.subr.mxu0 0.0
        %4477 = vmatpush1.msra.mxu0 0.0
        %4478 = vmatprep.subr.mxu0 0.0
        %4479 = vmatpush1.msra.mxu0 0.0
        %4480 = vmatprep.subr.mxu0 0.0
        %4481 = vmatpush1.msra.mxu0 0.0
        %4482 = vmatprep.subr.mxu0 0.0
        %4483 = vmatpush1.msra.mxu0 0.0
        %4484 = vmatprep.subr.mxu0 0.0
        %4485 = vmatpush1.msra.mxu0 0.0
        %4486 = vmatprep.subr.mxu0 0.0
        %4487 = vmatpush1.msra.mxu0 0.0
        %4488 = vmatprep.subr.mxu0 0.0
        %v4489 = vand.u32 %v4073, 4294901760
        %4490 = vmatpush1.msra.mxu0 %v4489
        %4491 = vmatprep.subr.mxu0 0.0
        %v4492 = vand.u32 %v4072, 4294901760
        %4493 = vmatpush1.msra.mxu0 %v4492
        %4494 = vmatprep.subr.mxu0 0.0
        %4495 = vmatpush2.msra.mxu0 0.0
        %4496 = vmatprep.subr.mxu0 0.0
        %4497 = vmatpush2.msra.mxu0 0.0
        %4498 = vmatprep.subr.mxu0 0.0
        %4499 = vmatpush2.msra.mxu0 0.0
        %4500 = vmatprep.subr.mxu0 0.0
        %4501 = vmatpush2.msra.mxu0 0.0
        %4502 = vmatprep.subr.mxu0 0.0
        %4503 = vmatpush2.msra.mxu0 0.0
        %4504 = vmatprep.subr.mxu0 0.0
        %4505 = vmatpush2.msra.mxu0 0.0
        %4506 = vmatprep.subr.mxu0 0.0
        %4507 = vmatpush2.msra.mxu0 0.0
        %4508 = vmatprep.subr.mxu0 0.0
        %4509 = vmatpush2.msra.mxu0 0.0
        %4510 = vmatprep.subr.mxu0 0.0
        %4511 = vmatpush2.msra.mxu0 0.0
        %4512 = vmatprep.subr.mxu0 0.0
        %4513 = vmatpush2.msra.mxu0 0.0
        %4514 = vmatprep.subr.mxu0 0.0
        %4515 = vmatpush2.msra.mxu0 0.0
        %4516 = vmatprep.subr.mxu0 0.0
        %4517 = vmatpush2.msra.mxu0 0.0
        %4518 = vmatprep.subr.mxu0 0.0
        %4519 = vmatpush2.msra.mxu0 0.0
        %4520 = vmatprep.subr.mxu0 0.0
        %4521 = vmatpush2.msra.mxu0 0.0
        %4522 = vmatprep.subr.mxu0 0.0
        %4523 = vmatpush2.msra.mxu0 0.0
        %4524 = vmatprep.subr.mxu0 0.0
        %4525 = vmatpush2.msra.mxu0 0.0
        %4526 = vmatprep.mubr.f32.mxu0 0.0
        %v4527 = vand.u32 %v2082, 4294901760
        %4528 = vmatmul.mubr.f32.gmra.mxu0 %v4527
        %v4529 = vpop.f32.mrf.mxu0
        %v4530 = vadd.f32 %v4457, %v4529
        %v4531 = vpop.f32.mrf.mxu0
        %4532 = vdwg.mxu0
        %v4533 = vmax.f32 %v4530, 1e-24
        %v4534 = vrsqrt.pop %v4533
        %v4535 = vlaneseq
        %v4536 = vshrl.u32 %v4535, 7
        %v4537 = vsub.s32 0, %v4536
        %v4538 = vrot.slane %v4534, %v4537
        %v4539 = vmul.f32 %v4070, %v4538
        %v4540 = vmul.f32 %v4071, %v4538
        %4541 = vst [vmem:[#allocation5 + $0x10] sm:$0xff] %v4539
        %4542 = vst [vmem:[#allocation5 + $0x18] sm:$0xff] %v4540
        %v4543 = vld [vmem:[%s4] sm:$0xff]
        %v4544 = vld [vmem:[%s4 + $0x8] sm:$0xff]
        %v4545 = vld [vmem:[%s4 + $0x10] sm:$0xf]
        %v4546 = vld [vmem:[#allocation5] sm:$0xff]
        %v4547 = vld [vmem:[#allocation5 + $0x8] sm:$0xff]
        %v4548 = vld [vmem:[#allocation5 + $0x10] sm:$0xff]
        %v4549 = vld [vmem:[#allocation5 + $0x18] sm:$0xff]
        %v4550 = vld [vmem:[%s5] sm:$0xff]
        %v4551 = vld [vmem:[%s5 + $0x8] sm:$0xff]
        %v4552 = vld [vmem:[%s5 + $0x10] sm:$0xf]
        %4554 = vset.pattern.permute.xlu0 0
        %4555 = vperm.xlu0 %4554, %v4550
        %v4556 = vpop.permute.xlu0 %4555
        %4559 = vset.pattern.permute.xlu0 0
        %4560 = vperm.xlu0 %4559, %v4551
        %v4561 = vpop.permute.xlu0 %4560
        %4564 = vset.pattern.permute.xlu0 0
        %4565 = vperm.xlu0 %4564, %v4552
        %v4566 = vpop.permute.xlu0 %4565
        %vm4568 = vcmask 261120
        %v4570 = vsel %vm4568, %v4543, 0
        %v4573 = vsel %vm4568, %v4544, 0
        %v4576 = vsel %vm4568, %v4545, 0
        %4578 = vmatprep.subr.mxu0 0.0
        %4579 = vmatpush1.msra.mxu0 0.0
        %4580 = vmatprep.subr.mxu0 0.0
        %4581 = vmatpush1.msra.mxu0 0.0
        %4582 = vmatprep.subr.mxu0 0.0
        %4583 = vmatpush1.msra.mxu0 0.0
        %4584 = vmatprep.subr.mxu0 0.0
        %4585 = vmatpush1.msra.mxu0 0.0
        %4586 = vmatprep.subr.mxu0 0.0
        %4587 = vmatpush1.msra.mxu0 0.0
        %4588 = vmatprep.subr.mxu0 0.0
        %4589 = vmatpush1.msra.mxu0 0.0
        %4590 = vmatprep.subr.mxu0 0.0
        %4591 = vmatpush1.msra.mxu0 0.0
        %4592 = vmatprep.subr.mxu0 0.0
        %4593 = vmatpush1.msra.mxu0 0.0
        %4594 = vmatprep.subr.mxu0 0.0
        %4595 = vmatpush1.msra.mxu0 0.0
        %4596 = vmatprep.subr.mxu0 0.0
        %4597 = vmatpush1.msra.mxu0 0.0
        %4598 = vmatprep.subr.mxu0 0.0
        %4599 = vmatpush1.msra.mxu0 0.0
        %4600 = vmatprep.subr.mxu0 0.0
        %4601 = vmatpush1.msra.mxu0 0.0
        %4602 = vmatprep.subr.mxu0 0.0
        %v4603 = vand.u32 %v4549, 4294901760
        %4604 = vmatpush1.msra.mxu0 %v4603
        %4605 = vmatprep.subr.mxu0 0.0
        %v4606 = vand.u32 %v4548, 4294901760
        %4607 = vmatpush1.msra.mxu0 %v4606
        %4608 = vmatprep.subr.mxu0 0.0
        %v4609 = vand.u32 %v4547, 4294901760
        %4610 = vmatpush1.msra.mxu0 %v4609
        %4611 = vmatprep.subr.mxu0 0.0
        %v4612 = vand.u32 %v4546, 4294901760
        %4613 = vmatpush1.msra.mxu0 %v4612
        %4614 = vmatprep.subr.mxu0 0.0
        %4615 = vmatpush2.msra.mxu0 0.0
        %4616 = vmatprep.subr.mxu0 0.0
        %4617 = vmatpush2.msra.mxu0 0.0
        %4618 = vmatprep.subr.mxu0 0.0
        %4619 = vmatpush2.msra.mxu0 0.0
        %4620 = vmatprep.subr.mxu0 0.0
        %4621 = vmatpush2.msra.mxu0 0.0
        %4622 = vmatprep.subr.mxu0 0.0
        %4623 = vmatpush2.msra.mxu0 0.0
        %4624 = vmatprep.subr.mxu0 0.0
        %4625 = vmatpush2.msra.mxu0 0.0
        %4626 = vmatprep.subr.mxu0 0.0
        %4627 = vmatpush2.msra.mxu0 0.0
        %4628 = vmatprep.subr.mxu0 0.0
        %4629 = vmatpush2.msra.mxu0 0.0
        %4630 = vmatprep.subr.mxu0 0.0
        %4631 = vmatpush2.msra.mxu0 0.0
        %4632 = vmatprep.subr.mxu0 0.0
        %4633 = vmatpush2.msra.mxu0 0.0
        %4634 = vmatprep.subr.mxu0 0.0
        %4635 = vmatpush2.msra.mxu0 0.0
        %4636 = vmatprep.subr.mxu0 0.0
        %4637 = vmatpush2.msra.mxu0 0.0
        %4638 = vmatprep.subr.mxu0 0.0
        %4639 = vmatpush2.msra.mxu0 0.0
        %4640 = vmatprep.subr.mxu0 0.0
        %4641 = vmatpush2.msra.mxu0 0.0
        %4642 = vmatprep.subr.mxu0 0.0
        %4643 = vmatpush2.msra.mxu0 0.0
        %4644 = vmatprep.subr.mxu0 0.0
        %4645 = vmatpush2.msra.mxu0 0.0
        %4646 = vmatprep.mubr.f32.mxu0 0.0
        %v4647 = vand.u32 %v4570, 4294901760
        %v4648 = vsub.f32 %v4570, %v4647
        %v4649 = vand.u32 %v4648, 4294901760
        %v4650 = vsub.f32 %v4648, %v4649
        %v4651 = vand.u32 %v4650, 4294901760
        %4652 = vmatmul.mubr.f32.gmra.mxu0 %v4651
        %v4653 = vpop.f32.mrf.mxu0
        %v4654 = vadd.f32 %v4556, %v4653
        %v4655 = vpop.f32.mrf.mxu0
        %4656 = vmatprep.mubr.f32.mxu0 0.0
        %v4657 = vand.u32 %v4573, 4294901760
        %v4658 = vsub.f32 %v4573, %v4657
        %v4659 = vand.u32 %v4658, 4294901760
        %v4660 = vsub.f32 %v4658, %v4659
        %v4661 = vand.u32 %v4660, 4294901760
        %4662 = vmatmul.mubr.f32.gmra.mxu0 %v4661
        %v4663 = vpop.f32.mrf.mxu0
        %v4664 = vadd.f32 %v4561, %v4663
        %v4665 = vpop.f32.mrf.mxu0
        %4666 = vmatprep.mubr.f32.mxu0 0.0
        %v4667 = vand.u32 %v4576, 4294901760
        %v4668 = vsub.f32 %v4576, %v4667
        %v4669 = vand.u32 %v4668, 4294901760
        %v4670 = vsub.f32 %v4668, %v4669
        %v4671 = vand.u32 %v4670, 4294901760
        %4672 = vmatmul.mubr.f32.gmra.mxu0 %v4671
        %v4673 = vpop.f32.mrf.mxu0
        %v4674 = vadd.f32 %v4566, %v4673
        %v4675 = vpop.f32.mrf.mxu0
        %4676 = vdwg.mxu0
        %4677 = vmatprep.subr.mxu0 0.0
        %4678 = vmatpush1.msra.mxu0 0.0
        %4679 = vmatprep.subr.mxu0 0.0
        %4680 = vmatpush1.msra.mxu0 0.0
        %4681 = vmatprep.subr.mxu0 0.0
        %4682 = vmatpush1.msra.mxu0 0.0
        %4683 = vmatprep.subr.mxu0 0.0
        %4684 = vmatpush1.msra.mxu0 0.0
        %4685 = vmatprep.subr.mxu0 0.0
        %4686 = vmatpush1.msra.mxu0 0.0
        %4687 = vmatprep.subr.mxu0 0.0
        %4688 = vmatpush1.msra.mxu0 0.0
        %4689 = vmatprep.subr.mxu0 0.0
        %4690 = vmatpush1.msra.mxu0 0.0
        %4691 = vmatprep.subr.mxu0 0.0
        %4692 = vmatpush1.msra.mxu0 0.0
        %4693 = vmatprep.subr.mxu0 0.0
        %4694 = vmatpush1.msra.mxu0 0.0
        %4695 = vmatprep.subr.mxu0 0.0
        %4696 = vmatpush1.msra.mxu0 0.0
        %4697 = vmatprep.subr.mxu0 0.0
        %4698 = vmatpush1.msra.mxu0 0.0
        %4699 = vmatprep.subr.mxu0 0.0
        %4700 = vmatpush1.msra.mxu0 0.0
        %4701 = vmatprep.subr.mxu0 0.0
        %v4702 = vand.u32 %v4549, 4294901760
        %v4703 = vsub.f32 %v4549, %v4702
        %v4704 = vand.u32 %v4703, 4294901760
        %v4705 = vsub.f32 %v4703, %v4704
        %v4706 = vand.u32 %v4705, 4294901760
        %4707 = vmatpush1.msra.mxu0 %v4706
        %4708 = vmatprep.subr.mxu0 0.0
        %v4709 = vand.u32 %v4548, 4294901760
        %v4710 = vsub.f32 %v4548, %v4709
        %v4711 = vand.u32 %v4710, 4294901760
        %v4712 = vsub.f32 %v4710, %v4711
        %v4713 = vand.u32 %v4712, 4294901760
        %4714 = vmatpush1.msra.mxu0 %v4713
        %4715 = vmatprep.subr.mxu0 0.0
        %v4716 = vand.u32 %v4547, 4294901760
        %v4717 = vsub.f32 %v4547, %v4716
        %v4718 = vand.u32 %v4717, 4294901760
        %v4719 = vsub.f32 %v4717, %v4718
        %v4720 = vand.u32 %v4719, 4294901760
        %4721 = vmatpush1.msra.mxu0 %v4720
        %4722 = vmatprep.subr.mxu0 0.0
        %v4723 = vand.u32 %v4546, 4294901760
        %v4724 = vsub.f32 %v4546, %v4723
        %v4725 = vand.u32 %v4724, 4294901760
        %v4726 = vsub.f32 %v4724, %v4725
        %v4727 = vand.u32 %v4726, 4294901760
        %4728 = vmatpush1.msra.mxu0 %v4727
        %4729 = vmatprep.subr.mxu0 0.0
        %4730 = vmatpush2.msra.mxu0 0.0
        %4731 = vmatprep.subr.mxu0 0.0
        %4732 = vmatpush2.msra.mxu0 0.0
        %4733 = vmatprep.subr.mxu0 0.0
        %4734 = vmatpush2.msra.mxu0 0.0
        %4735 = vmatprep.subr.mxu0 0.0
        %4736 = vmatpush2.msra.mxu0 0.0
        %4737 = vmatprep.subr.mxu0 0.0
        %4738 = vmatpush2.msra.mxu0 0.0
        %4739 = vmatprep.subr.mxu0 0.0
        %4740 = vmatpush2.msra.mxu0 0.0
        %4741 = vmatprep.subr.mxu0 0.0
        %4742 = vmatpush2.msra.mxu0 0.0
        %4743 = vmatprep.subr.mxu0 0.0
        %4744 = vmatpush2.msra.mxu0 0.0
        %4745 = vmatprep.subr.mxu0 0.0
        %4746 = vmatpush2.msra.mxu0 0.0
        %4747 = vmatprep.subr.mxu0 0.0
        %4748 = vmatpush2.msra.mxu0 0.0
        %4749 = vmatprep.subr.mxu0 0.0
        %4750 = vmatpush2.msra.mxu0 0.0
        %4751 = vmatprep.subr.mxu0 0.0
        %4752 = vmatpush2.msra.mxu0 0.0
        %4753 = vmatprep.subr.mxu0 0.0
        %4754 = vmatpush2.msra.mxu0 0.0
        %4755 = vmatprep.subr.mxu0 0.0
        %4756 = vmatpush2.msra.mxu0 0.0
        %4757 = vmatprep.subr.mxu0 0.0
        %4758 = vmatpush2.msra.mxu0 0.0
        %4759 = vmatprep.subr.mxu0 0.0
        %4760 = vmatpush2.msra.mxu0 0.0
        %4761 = vmatprep.mubr.f32.mxu0 0.0
        %v4762 = vand.u32 %v4570, 4294901760
        %4763 = vmatmul.mubr.f32.gmra.mxu0 %v4762
        %v4764 = vpop.f32.mrf.mxu0
        %v4765 = vadd.f32 %v4654, %v4764
        %v4766 = vpop.f32.mrf.mxu0
        %4767 = vmatprep.mubr.f32.mxu0 0.0
        %v4768 = vand.u32 %v4573, 4294901760
        %4769 = vmatmul.mubr.f32.gmra.mxu0 %v4768
        %v4770 = vpop.f32.mrf.mxu0
        %v4771 = vadd.f32 %v4664, %v4770
        %v4772 = vpop.f32.mrf.mxu0
        %4773 = vmatprep.mubr.f32.mxu0 0.0
        %v4774 = vand.u32 %v4576, 4294901760
        %4775 = vmatmul.mubr.f32.gmra.mxu0 %v4774
        %v4776 = vpop.f32.mrf.mxu0
        %v4777 = vadd.f32 %v4674, %v4776
        %v4778 = vpop.f32.mrf.mxu0
        %4779 = vdwg.mxu0
        %4780 = vmatprep.subr.mxu0 0.0
        %4781 = vmatpush1.msra.mxu0 0.0
        %4782 = vmatprep.subr.mxu0 0.0
        %4783 = vmatpush1.msra.mxu0 0.0
        %4784 = vmatprep.subr.mxu0 0.0
        %4785 = vmatpush1.msra.mxu0 0.0
        %4786 = vmatprep.subr.mxu0 0.0
        %4787 = vmatpush1.msra.mxu0 0.0
        %4788 = vmatprep.subr.mxu0 0.0
        %4789 = vmatpush1.msra.mxu0 0.0
        %4790 = vmatprep.subr.mxu0 0.0
        %4791 = vmatpush1.msra.mxu0 0.0
        %4792 = vmatprep.subr.mxu0 0.0
        %4793 = vmatpush1.msra.mxu0 0.0
        %4794 = vmatprep.subr.mxu0 0.0
        %4795 = vmatpush1.msra.mxu0 0.0
        %4796 = vmatprep.subr.mxu0 0.0
        %4797 = vmatpush1.msra.mxu0 0.0
        %4798 = vmatprep.subr.mxu0 0.0
        %4799 = vmatpush1.msra.mxu0 0.0
        %4800 = vmatprep.subr.mxu0 0.0
        %4801 = vmatpush1.msra.mxu0 0.0
        %4802 = vmatprep.subr.mxu0 0.0
        %4803 = vmatpush1.msra.mxu0 0.0
        %4804 = vmatprep.subr.mxu0 0.0
        %v4805 = vand.u32 %v4549, 4294901760
        %v4806 = vsub.f32 %v4549, %v4805
        %4807 = vmatpush1.msra.mxu0 %v4806
        %4808 = vmatprep.subr.mxu0 0.0
        %v4809 = vand.u32 %v4548, 4294901760
        %v4810 = vsub.f32 %v4548, %v4809
        %4811 = vmatpush1.msra.mxu0 %v4810
        %4812 = vmatprep.subr.mxu0 0.0
        %v4813 = vand.u32 %v4547, 4294901760
        %v4814 = vsub.f32 %v4547, %v4813
        %4815 = vmatpush1.msra.mxu0 %v4814
        %4816 = vmatprep.subr.mxu0 0.0
        %v4817 = vand.u32 %v4546, 4294901760
        %v4818 = vsub.f32 %v4546, %v4817
        %4819 = vmatpush1.msra.mxu0 %v4818
        %4820 = vmatprep.subr.mxu0 0.0
        %4821 = vmatpush2.msra.mxu0 0.0
        %4822 = vmatprep.subr.mxu0 0.0
        %4823 = vmatpush2.msra.mxu0 0.0
        %4824 = vmatprep.subr.mxu0 0.0
        %4825 = vmatpush2.msra.mxu0 0.0
        %4826 = vmatprep.subr.mxu0 0.0
        %4827 = vmatpush2.msra.mxu0 0.0
        %4828 = vmatprep.subr.mxu0 0.0
        %4829 = vmatpush2.msra.mxu0 0.0
        %4830 = vmatprep.subr.mxu0 0.0
        %4831 = vmatpush2.msra.mxu0 0.0
        %4832 = vmatprep.subr.mxu0 0.0
        %4833 = vmatpush2.msra.mxu0 0.0
        %4834 = vmatprep.subr.mxu0 0.0
        %4835 = vmatpush2.msra.mxu0 0.0
        %4836 = vmatprep.subr.mxu0 0.0
        %4837 = vmatpush2.msra.mxu0 0.0
        %4838 = vmatprep.subr.mxu0 0.0
        %4839 = vmatpush2.msra.mxu0 0.0
        %4840 = vmatprep.subr.mxu0 0.0
        %4841 = vmatpush2.msra.mxu0 0.0
        %4842 = vmatprep.subr.mxu0 0.0
        %4843 = vmatpush2.msra.mxu0 0.0
        %4844 = vmatprep.subr.mxu0 0.0
        %4845 = vmatpush2.msra.mxu0 0.0
        %4846 = vmatprep.subr.mxu0 0.0
        %4847 = vmatpush2.msra.mxu0 0.0
        %4848 = vmatprep.subr.mxu0 0.0
        %4849 = vmatpush2.msra.mxu0 0.0
        %4850 = vmatprep.subr.mxu0 0.0
        %4851 = vmatpush2.msra.mxu0 0.0
        %4852 = vmatprep.mubr.f32.mxu0 0.0
        %v4853 = vand.u32 %v4570, 4294901760
        %v4854 = vsub.f32 %v4570, %v4853
        %4855 = vmatmul.mubr.f32.gmra.mxu0 %v4854
        %v4856 = vpop.f32.mrf.mxu0
        %v4857 = vadd.f32 %v4765, %v4856
        %v4858 = vpop.f32.mrf.mxu0
        %4859 = vmatprep.mubr.f32.mxu0 0.0
        %v4860 = vand.u32 %v4573, 4294901760
        %v4861 = vsub.f32 %v4573, %v4860
        %4862 = vmatmul.mubr.f32.gmra.mxu0 %v4861
        %v4863 = vpop.f32.mrf.mxu0
        %v4864 = vadd.f32 %v4771, %v4863
        %v4865 = vpop.f32.mrf.mxu0
        %4866 = vmatprep.mubr.f32.mxu0 0.0
        %v4867 = vand.u32 %v4576, 4294901760
        %v4868 = vsub.f32 %v4576, %v4867
        %4869 = vmatmul.mubr.f32.gmra.mxu0 %v4868
        %v4870 = vpop.f32.mrf.mxu0
        %v4871 = vadd.f32 %v4777, %v4870
        %v4872 = vpop.f32.mrf.mxu0
        %4873 = vdwg.mxu0
        %4874 = vmatprep.subr.mxu0 0.0
        %4875 = vmatpush1.msra.mxu0 0.0
        %4876 = vmatprep.subr.mxu0 0.0
        %4877 = vmatpush1.msra.mxu0 0.0
        %4878 = vmatprep.subr.mxu0 0.0
        %4879 = vmatpush1.msra.mxu0 0.0
        %4880 = vmatprep.subr.mxu0 0.0
        %4881 = vmatpush1.msra.mxu0 0.0
        %4882 = vmatprep.subr.mxu0 0.0
        %4883 = vmatpush1.msra.mxu0 0.0
        %4884 = vmatprep.subr.mxu0 0.0
        %4885 = vmatpush1.msra.mxu0 0.0
        %4886 = vmatprep.subr.mxu0 0.0
        %4887 = vmatpush1.msra.mxu0 0.0
        %4888 = vmatprep.subr.mxu0 0.0
        %4889 = vmatpush1.msra.mxu0 0.0
        %4890 = vmatprep.subr.mxu0 0.0
        %4891 = vmatpush1.msra.mxu0 0.0
        %4892 = vmatprep.subr.mxu0 0.0
        %4893 = vmatpush1.msra.mxu0 0.0
        %4894 = vmatprep.subr.mxu0 0.0
        %4895 = vmatpush1.msra.mxu0 0.0
        %4896 = vmatprep.subr.mxu0 0.0
        %4897 = vmatpush1.msra.mxu0 0.0
        %4898 = vmatprep.subr.mxu0 0.0
        %v4899 = vand.u32 %v4549, 4294901760
        %4900 = vmatpush1.msra.mxu0 %v4899
        %4901 = vmatprep.subr.mxu0 0.0
        %v4902 = vand.u32 %v4548, 4294901760
        %4903 = vmatpush1.msra.mxu0 %v4902
        %4904 = vmatprep.subr.mxu0 0.0
        %v4905 = vand.u32 %v4547, 4294901760
        %4906 = vmatpush1.msra.mxu0 %v4905
        %4907 = vmatprep.subr.mxu0 0.0
        %v4908 = vand.u32 %v4546, 4294901760
        %4909 = vmatpush1.msra.mxu0 %v4908
        %4910 = vmatprep.subr.mxu0 0.0
        %4911 = vmatpush2.msra.mxu0 0.0
        %4912 = vmatprep.subr.mxu0 0.0
        %4913 = vmatpush2.msra.mxu0 0.0
        %4914 = vmatprep.subr.mxu0 0.0
        %4915 = vmatpush2.msra.mxu0 0.0
        %4916 = vmatprep.subr.mxu0 0.0
        %4917 = vmatpush2.msra.mxu0 0.0
        %4918 = vmatprep.subr.mxu0 0.0
        %4919 = vmatpush2.msra.mxu0 0.0
        %4920 = vmatprep.subr.mxu0 0.0
        %4921 = vmatpush2.msra.mxu0 0.0
        %4922 = vmatprep.subr.mxu0 0.0
        %4923 = vmatpush2.msra.mxu0 0.0
        %4924 = vmatprep.subr.mxu0 0.0
        %4925 = vmatpush2.msra.mxu0 0.0
        %4926 = vmatprep.subr.mxu0 0.0
        %4927 = vmatpush2.msra.mxu0 0.0
        %4928 = vmatprep.subr.mxu0 0.0
        %4929 = vmatpush2.msra.mxu0 0.0
        %4930 = vmatprep.subr.mxu0 0.0
        %4931 = vmatpush2.msra.mxu0 0.0
        %4932 = vmatprep.subr.mxu0 0.0
        %4933 = vmatpush2.msra.mxu0 0.0
        %4934 = vmatprep.subr.mxu0 0.0
        %4935 = vmatpush2.msra.mxu0 0.0
        %4936 = vmatprep.subr.mxu0 0.0
        %4937 = vmatpush2.msra.mxu0 0.0
        %4938 = vmatprep.subr.mxu0 0.0
        %4939 = vmatpush2.msra.mxu0 0.0
        %4940 = vmatprep.subr.mxu0 0.0
        %4941 = vmatpush2.msra.mxu0 0.0
        %4942 = vmatprep.mubr.f32.mxu0 0.0
        %v4943 = vand.u32 %v4570, 4294901760
        %v4944 = vsub.f32 %v4570, %v4943
        %v4945 = vand.u32 %v4944, 4294901760
        %4946 = vmatmul.mubr.f32.gmra.mxu0 %v4945
        %v4947 = vpop.f32.mrf.mxu0
        %v4948 = vadd.f32 %v4857, %v4947
        %v4949 = vpop.f32.mrf.mxu0
        %4950 = vmatprep.mubr.f32.mxu0 0.0
        %v4951 = vand.u32 %v4573, 4294901760
        %v4952 = vsub.f32 %v4573, %v4951
        %v4953 = vand.u32 %v4952, 4294901760
        %4954 = vmatmul.mubr.f32.gmra.mxu0 %v4953
        %v4955 = vpop.f32.mrf.mxu0
        %v4956 = vadd.f32 %v4864, %v4955
        %v4957 = vpop.f32.mrf.mxu0
        %4958 = vmatprep.mubr.f32.mxu0 0.0
        %v4959 = vand.u32 %v4576, 4294901760
        %v4960 = vsub.f32 %v4576, %v4959
        %v4961 = vand.u32 %v4960, 4294901760
        %4962 = vmatmul.mubr.f32.gmra.mxu0 %v4961
        %v4963 = vpop.f32.mrf.mxu0
        %v4964 = vadd.f32 %v4871, %v4963
        %v4965 = vpop.f32.mrf.mxu0
        %4966 = vdwg.mxu0
        %4967 = vmatprep.subr.mxu0 0.0
        %4968 = vmatpush1.msra.mxu0 0.0
        %4969 = vmatprep.subr.mxu0 0.0
        %4970 = vmatpush1.msra.mxu0 0.0
        %4971 = vmatprep.subr.mxu0 0.0
        %4972 = vmatpush1.msra.mxu0 0.0
        %4973 = vmatprep.subr.mxu0 0.0
        %4974 = vmatpush1.msra.mxu0 0.0
        %4975 = vmatprep.subr.mxu0 0.0
        %4976 = vmatpush1.msra.mxu0 0.0
        %4977 = vmatprep.subr.mxu0 0.0
        %4978 = vmatpush1.msra.mxu0 0.0
        %4979 = vmatprep.subr.mxu0 0.0
        %4980 = vmatpush1.msra.mxu0 0.0
        %4981 = vmatprep.subr.mxu0 0.0
        %4982 = vmatpush1.msra.mxu0 0.0
        %4983 = vmatprep.subr.mxu0 0.0
        %4984 = vmatpush1.msra.mxu0 0.0
        %4985 = vmatprep.subr.mxu0 0.0
        %4986 = vmatpush1.msra.mxu0 0.0
        %4987 = vmatprep.subr.mxu0 0.0
        %4988 = vmatpush1.msra.mxu0 0.0
        %4989 = vmatprep.subr.mxu0 0.0
        %4990 = vmatpush1.msra.mxu0 0.0
        %4991 = vmatprep.subr.mxu0 0.0
        %v4992 = vand.u32 %v4549, 4294901760
        %v4993 = vsub.f32 %v4549, %v4992
        %v4994 = vand.u32 %v4993, 4294901760
        %4995 = vmatpush1.msra.mxu0 %v4994
        %4996 = vmatprep.subr.mxu0 0.0
        %v4997 = vand.u32 %v4548, 4294901760
        %v4998 = vsub.f32 %v4548, %v4997
        %v4999 = vand.u32 %v4998, 4294901760
        %5000 = vmatpush1.msra.mxu0 %v4999
        %5001 = vmatprep.subr.mxu0 0.0
        %v5002 = vand.u32 %v4547, 4294901760
        %v5003 = vsub.f32 %v4547, %v5002
        %v5004 = vand.u32 %v5003, 4294901760
        %5005 = vmatpush1.msra.mxu0 %v5004
        %5006 = vmatprep.subr.mxu0 0.0
        %v5007 = vand.u32 %v4546, 4294901760
        %v5008 = vsub.f32 %v4546, %v5007
        %v5009 = vand.u32 %v5008, 4294901760
        %5010 = vmatpush1.msra.mxu0 %v5009
        %5011 = vmatprep.subr.mxu0 0.0
        %5012 = vmatpush2.msra.mxu0 0.0
        %5013 = vmatprep.subr.mxu0 0.0
        %5014 = vmatpush2.msra.mxu0 0.0
        %5015 = vmatprep.subr.mxu0 0.0
        %5016 = vmatpush2.msra.mxu0 0.0
        %5017 = vmatprep.subr.mxu0 0.0
        %5018 = vmatpush2.msra.mxu0 0.0
        %5019 = vmatprep.subr.mxu0 0.0
        %5020 = vmatpush2.msra.mxu0 0.0
        %5021 = vmatprep.subr.mxu0 0.0
        %5022 = vmatpush2.msra.mxu0 0.0
        %5023 = vmatprep.subr.mxu0 0.0
        %5024 = vmatpush2.msra.mxu0 0.0
        %5025 = vmatprep.subr.mxu0 0.0
        %5026 = vmatpush2.msra.mxu0 0.0
        %5027 = vmatprep.subr.mxu0 0.0
        %5028 = vmatpush2.msra.mxu0 0.0
        %5029 = vmatprep.subr.mxu0 0.0
        %5030 = vmatpush2.msra.mxu0 0.0
        %5031 = vmatprep.subr.mxu0 0.0
        %5032 = vmatpush2.msra.mxu0 0.0
        %5033 = vmatprep.subr.mxu0 0.0
        %5034 = vmatpush2.msra.mxu0 0.0
        %5035 = vmatprep.subr.mxu0 0.0
        %5036 = vmatpush2.msra.mxu0 0.0
        %5037 = vmatprep.subr.mxu0 0.0
        %5038 = vmatpush2.msra.mxu0 0.0
        %5039 = vmatprep.subr.mxu0 0.0
        %5040 = vmatpush2.msra.mxu0 0.0
        %5041 = vmatprep.subr.mxu0 0.0
        %5042 = vmatpush2.msra.mxu0 0.0
        %5043 = vmatprep.mubr.f32.mxu0 0.0
        %v5044 = vand.u32 %v4570, 4294901760
        %5045 = vmatmul.mubr.f32.gmra.mxu0 %v5044
        %v5046 = vpop.f32.mrf.mxu0
        %v5047 = vadd.f32 %v4948, %v5046
        %v5048 = vpop.f32.mrf.mxu0
        %5049 = vmatprep.mubr.f32.mxu0 0.0
        %v5050 = vand.u32 %v4573, 4294901760
        %5051 = vmatmul.mubr.f32.gmra.mxu0 %v5050
        %v5052 = vpop.f32.mrf.mxu0
        %v5053 = vadd.f32 %v4956, %v5052
        %v5054 = vpop.f32.mrf.mxu0
        %5055 = vmatprep.mubr.f32.mxu0 0.0
        %v5056 = vand.u32 %v4576, 4294901760
        %5057 = vmatmul.mubr.f32.gmra.mxu0 %v5056
        %v5058 = vpop.f32.mrf.mxu0
        %v5059 = vadd.f32 %v4964, %v5058
        %v5060 = vpop.f32.mrf.mxu0
        %5061 = vdwg.mxu0
        %5062 = vmatprep.subr.mxu0 0.0
        %5063 = vmatpush1.msra.mxu0 0.0
        %5064 = vmatprep.subr.mxu0 0.0
        %5065 = vmatpush1.msra.mxu0 0.0
        %5066 = vmatprep.subr.mxu0 0.0
        %5067 = vmatpush1.msra.mxu0 0.0
        %5068 = vmatprep.subr.mxu0 0.0
        %5069 = vmatpush1.msra.mxu0 0.0
        %5070 = vmatprep.subr.mxu0 0.0
        %5071 = vmatpush1.msra.mxu0 0.0
        %5072 = vmatprep.subr.mxu0 0.0
        %5073 = vmatpush1.msra.mxu0 0.0
        %5074 = vmatprep.subr.mxu0 0.0
        %5075 = vmatpush1.msra.mxu0 0.0
        %5076 = vmatprep.subr.mxu0 0.0
        %5077 = vmatpush1.msra.mxu0 0.0
        %5078 = vmatprep.subr.mxu0 0.0
        %5079 = vmatpush1.msra.mxu0 0.0
        %5080 = vmatprep.subr.mxu0 0.0
        %5081 = vmatpush1.msra.mxu0 0.0
        %5082 = vmatprep.subr.mxu0 0.0
        %5083 = vmatpush1.msra.mxu0 0.0
        %5084 = vmatprep.subr.mxu0 0.0
        %5085 = vmatpush1.msra.mxu0 0.0
        %5086 = vmatprep.subr.mxu0 0.0
        %v5087 = vand.u32 %v4549, 4294901760
        %5088 = vmatpush1.msra.mxu0 %v5087
        %5089 = vmatprep.subr.mxu0 0.0
        %v5090 = vand.u32 %v4548, 4294901760
        %5091 = vmatpush1.msra.mxu0 %v5090
        %5092 = vmatprep.subr.mxu0 0.0
        %v5093 = vand.u32 %v4547, 4294901760
        %5094 = vmatpush1.msra.mxu0 %v5093
        %5095 = vmatprep.subr.mxu0 0.0
        %v5096 = vand.u32 %v4546, 4294901760
        %5097 = vmatpush1.msra.mxu0 %v5096
        %5098 = vmatprep.subr.mxu0 0.0
        %5099 = vmatpush2.msra.mxu0 0.0
        %5100 = vmatprep.subr.mxu0 0.0
        %5101 = vmatpush2.msra.mxu0 0.0
        %5102 = vmatprep.subr.mxu0 0.0
        %5103 = vmatpush2.msra.mxu0 0.0
        %5104 = vmatprep.subr.mxu0 0.0
        %5105 = vmatpush2.msra.mxu0 0.0
        %5106 = vmatprep.subr.mxu0 0.0
        %5107 = vmatpush2.msra.mxu0 0.0
        %5108 = vmatprep.subr.mxu0 0.0
        %5109 = vmatpush2.msra.mxu0 0.0
        %5110 = vmatprep.subr.mxu0 0.0
        %5111 = vmatpush2.msra.mxu0 0.0
        %5112 = vmatprep.subr.mxu0 0.0
        %5113 = vmatpush2.msra.mxu0 0.0
        %5114 = vmatprep.subr.mxu0 0.0
        %5115 = vmatpush2.msra.mxu0 0.0
        %5116 = vmatprep.subr.mxu0 0.0
        %5117 = vmatpush2.msra.mxu0 0.0
        %5118 = vmatprep.subr.mxu0 0.0
        %5119 = vmatpush2.msra.mxu0 0.0
        %5120 = vmatprep.subr.mxu0 0.0
        %5121 = vmatpush2.msra.mxu0 0.0
        %5122 = vmatprep.subr.mxu0 0.0
        %5123 = vmatpush2.msra.mxu0 0.0
        %5124 = vmatprep.subr.mxu0 0.0
        %5125 = vmatpush2.msra.mxu0 0.0
        %5126 = vmatprep.subr.mxu0 0.0
        %5127 = vmatpush2.msra.mxu0 0.0
        %5128 = vmatprep.subr.mxu0 0.0
        %5129 = vmatpush2.msra.mxu0 0.0
        %5130 = vmatprep.mubr.f32.mxu0 0.0
        %v5131 = vand.u32 %v4570, 4294901760
        %5132 = vmatmul.mubr.f32.gmra.mxu0 %v5131
        %v5133 = vpop.f32.mrf.mxu0
        %v5134 = vadd.f32 %v5047, %v5133
        %v5135 = vpop.f32.mrf.mxu0
        %5136 = vmatprep.mubr.f32.mxu0 0.0
        %v5137 = vand.u32 %v4573, 4294901760
        %5138 = vmatmul.mubr.f32.gmra.mxu0 %v5137
        %v5139 = vpop.f32.mrf.mxu0
        %v5140 = vadd.f32 %v5053, %v5139
        %v5141 = vpop.f32.mrf.mxu0
        %5142 = vmatprep.mubr.f32.mxu0 0.0
        %v5143 = vand.u32 %v4576, 4294901760
        %5144 = vmatmul.mubr.f32.gmra.mxu0 %v5143
        %v5145 = vpop.f32.mrf.mxu0
        %v5146 = vadd.f32 %v5059, %v5145
        %v5147 = vpop.f32.mrf.mxu0
        %5148 = vdwg.mxu0
        %v5149 = vmax.f32 %v5134, 0.0
        %v5150 = vmax.f32 %v5140, 0.0
        %v5151 = vmax.f32 %v5146, 0.0
        %v5152 = vld [vmem:[%s6] sm:$0x1]
        %v5153 = vld [vmem:[#allocation8] sm:$0x1]
        %5155 = vset.pattern.permute.xlu0 0
        %5156 = vperm.xlu0 %5155, %v5153
        %v5157 = vpop.permute.xlu0 %5156
        %v5159 = vlaneseq
        %v5160 = vshrl.u32 %v5159, 7
        %v5161 = vsub.s32 0, %v5160
        %v5162 = vrot.slane %v5157, %v5161
        %vm5163 = vcmask 162816
        %v5165 = vsel %vm5163, %v5152, 0
        %v5168 = vsel %vm560, %v5151, 0
        %5170 = vmatprep.subr.mxu0 0.0
        %5171 = vmatpush1.msra.mxu0 0.0
        %5172 = vmatprep.subr.mxu0 0.0
        %5173 = vmatpush1.msra.mxu0 0.0
        %5174 = vmatprep.subr.mxu0 0.0
        %5175 = vmatpush1.msra.mxu0 0.0
        %5176 = vmatprep.subr.mxu0 0.0
        %5177 = vmatpush1.msra.mxu0 0.0
        %5178 = vmatprep.subr.mxu0 0.0
        %5179 = vmatpush1.msra.mxu0 0.0
        %5180 = vmatprep.subr.mxu0 0.0
        %5181 = vmatpush1.msra.mxu0 0.0
        %5182 = vmatprep.subr.mxu0 0.0
        %5183 = vmatpush1.msra.mxu0 0.0
        %5184 = vmatprep.subr.mxu0 0.0
        %5185 = vmatpush1.msra.mxu0 0.0
        %5186 = vmatprep.subr.mxu0 0.0
        %5187 = vmatpush1.msra.mxu0 0.0
        %5188 = vmatprep.subr.mxu0 0.0
        %5189 = vmatpush1.msra.mxu0 0.0
        %5190 = vmatprep.subr.mxu0 0.0
        %5191 = vmatpush1.msra.mxu0 0.0
        %5192 = vmatprep.subr.mxu0 0.0
        %5193 = vmatpush1.msra.mxu0 0.0
        %5194 = vmatprep.subr.mxu0 0.0
        %5195 = vmatpush1.msra.mxu0 0.0
        %5196 = vmatprep.subr.mxu0 0.0
        %v5197 = vand.u32 %v5168, 4294901760
        %5198 = vmatpush1.msra.mxu0 %v5197
        %5199 = vmatprep.subr.mxu0 0.0
        %v5200 = vand.u32 %v5150, 4294901760
        %5201 = vmatpush1.msra.mxu0 %v5200
        %5202 = vmatprep.subr.mxu0 0.0
        %v5203 = vand.u32 %v5149, 4294901760
        %5204 = vmatpush1.msra.mxu0 %v5203
        %5205 = vmatprep.subr.mxu0 0.0
        %5206 = vmatpush2.msra.mxu0 0.0
        %5207 = vmatprep.subr.mxu0 0.0
        %5208 = vmatpush2.msra.mxu0 0.0
        %5209 = vmatprep.subr.mxu0 0.0
        %5210 = vmatpush2.msra.mxu0 0.0
        %5211 = vmatprep.subr.mxu0 0.0
        %5212 = vmatpush2.msra.mxu0 0.0
        %5213 = vmatprep.subr.mxu0 0.0
        %5214 = vmatpush2.msra.mxu0 0.0
        %5215 = vmatprep.subr.mxu0 0.0
        %5216 = vmatpush2.msra.mxu0 0.0
        %5217 = vmatprep.subr.mxu0 0.0
        %5218 = vmatpush2.msra.mxu0 0.0
        %5219 = vmatprep.subr.mxu0 0.0
        %5220 = vmatpush2.msra.mxu0 0.0
        %5221 = vmatprep.subr.mxu0 0.0
        %5222 = vmatpush2.msra.mxu0 0.0
        %5223 = vmatprep.subr.mxu0 0.0
        %5224 = vmatpush2.msra.mxu0 0.0
        %5225 = vmatprep.subr.mxu0 0.0
        %5226 = vmatpush2.msra.mxu0 0.0
        %5227 = vmatprep.subr.mxu0 0.0
        %5228 = vmatpush2.msra.mxu0 0.0
        %5229 = vmatprep.subr.mxu0 0.0
        %5230 = vmatpush2.msra.mxu0 0.0
        %5231 = vmatprep.subr.mxu0 0.0
        %5232 = vmatpush2.msra.mxu0 0.0
        %5233 = vmatprep.subr.mxu0 0.0
        %5234 = vmatpush2.msra.mxu0 0.0
        %5235 = vmatprep.subr.mxu0 0.0
        %5236 = vmatpush2.msra.mxu0 0.0
        %5237 = vmatprep.mubr.f32.mxu0 0.0
        %v5238 = vand.u32 %v5165, 4294901760
        %v5239 = vsub.f32 %v5165, %v5238
        %v5240 = vand.u32 %v5239, 4294901760
        %v5241 = vsub.f32 %v5239, %v5240
        %v5242 = vand.u32 %v5241, 4294901760
        %5243 = vmatmul.mubr.f32.gmra.mxu0 %v5242
        %v5244 = vpop.f32.mrf.mxu0
        %v5245 = vadd.f32 %v5162, %v5244
        %v5246 = vpop.f32.mrf.mxu0
        %5247 = vdwg.mxu0
        %5248 = vmatprep.subr.mxu0 0.0
        %5249 = vmatpush1.msra.mxu0 0.0
        %5250 = vmatprep.subr.mxu0 0.0
        %5251 = vmatpush1.msra.mxu0 0.0
        %5252 = vmatprep.subr.mxu0 0.0
        %5253 = vmatpush1.msra.mxu0 0.0
        %5254 = vmatprep.subr.mxu0 0.0
        %5255 = vmatpush1.msra.mxu0 0.0
        %5256 = vmatprep.subr.mxu0 0.0
        %5257 = vmatpush1.msra.mxu0 0.0
        %5258 = vmatprep.subr.mxu0 0.0
        %5259 = vmatpush1.msra.mxu0 0.0
        %5260 = vmatprep.subr.mxu0 0.0
        %5261 = vmatpush1.msra.mxu0 0.0
        %5262 = vmatprep.subr.mxu0 0.0
        %5263 = vmatpush1.msra.mxu0 0.0
        %5264 = vmatprep.subr.mxu0 0.0
        %5265 = vmatpush1.msra.mxu0 0.0
        %5266 = vmatprep.subr.mxu0 0.0
        %5267 = vmatpush1.msra.mxu0 0.0
        %5268 = vmatprep.subr.mxu0 0.0
        %5269 = vmatpush1.msra.mxu0 0.0
        %5270 = vmatprep.subr.mxu0 0.0
        %5271 = vmatpush1.msra.mxu0 0.0
        %5272 = vmatprep.subr.mxu0 0.0
        %5273 = vmatpush1.msra.mxu0 0.0
        %5274 = vmatprep.subr.mxu0 0.0
        %v5275 = vand.u32 %v5168, 4294901760
        %v5276 = vsub.f32 %v5168, %v5275
        %v5277 = vand.u32 %v5276, 4294901760
        %v5278 = vsub.f32 %v5276, %v5277
        %v5279 = vand.u32 %v5278, 4294901760
        %5280 = vmatpush1.msra.mxu0 %v5279
        %5281 = vmatprep.subr.mxu0 0.0
        %v5282 = vand.u32 %v5150, 4294901760
        %v5283 = vsub.f32 %v5150, %v5282
        %v5284 = vand.u32 %v5283, 4294901760
        %v5285 = vsub.f32 %v5283, %v5284
        %v5286 = vand.u32 %v5285, 4294901760
        %5287 = vmatpush1.msra.mxu0 %v5286
        %5288 = vmatprep.subr.mxu0 0.0
        %v5289 = vand.u32 %v5149, 4294901760
        %v5290 = vsub.f32 %v5149, %v5289
        %v5291 = vand.u32 %v5290, 4294901760
        %v5292 = vsub.f32 %v5290, %v5291
        %v5293 = vand.u32 %v5292, 4294901760
        %5294 = vmatpush1.msra.mxu0 %v5293
        %5295 = vmatprep.subr.mxu0 0.0
        %5296 = vmatpush2.msra.mxu0 0.0
        %5297 = vmatprep.subr.mxu0 0.0
        %5298 = vmatpush2.msra.mxu0 0.0
        %5299 = vmatprep.subr.mxu0 0.0
        %5300 = vmatpush2.msra.mxu0 0.0
        %5301 = vmatprep.subr.mxu0 0.0
        %5302 = vmatpush2.msra.mxu0 0.0
        %5303 = vmatprep.subr.mxu0 0.0
        %5304 = vmatpush2.msra.mxu0 0.0
        %5305 = vmatprep.subr.mxu0 0.0
        %5306 = vmatpush2.msra.mxu0 0.0
        %5307 = vmatprep.subr.mxu0 0.0
        %5308 = vmatpush2.msra.mxu0 0.0
        %5309 = vmatprep.subr.mxu0 0.0
        %5310 = vmatpush2.msra.mxu0 0.0
        %5311 = vmatprep.subr.mxu0 0.0
        %5312 = vmatpush2.msra.mxu0 0.0
        %5313 = vmatprep.subr.mxu0 0.0
        %5314 = vmatpush2.msra.mxu0 0.0
        %5315 = vmatprep.subr.mxu0 0.0
        %5316 = vmatpush2.msra.mxu0 0.0
        %5317 = vmatprep.subr.mxu0 0.0
        %5318 = vmatpush2.msra.mxu0 0.0
        %5319 = vmatprep.subr.mxu0 0.0
        %5320 = vmatpush2.msra.mxu0 0.0
        %5321 = vmatprep.subr.mxu0 0.0
        %5322 = vmatpush2.msra.mxu0 0.0
        %5323 = vmatprep.subr.mxu0 0.0
        %5324 = vmatpush2.msra.mxu0 0.0
        %5325 = vmatprep.subr.mxu0 0.0
        %5326 = vmatpush2.msra.mxu0 0.0
        %5327 = vmatprep.mubr.f32.mxu0 0.0
        %v5328 = vand.u32 %v5165, 4294901760
        %5329 = vmatmul.mubr.f32.gmra.mxu0 %v5328
        %v5330 = vpop.f32.mrf.mxu0
        %v5331 = vadd.f32 %v5245, %v5330
        %v5332 = vpop.f32.mrf.mxu0
        %5333 = vdwg.mxu0
        %5334 = vmatprep.subr.mxu0 0.0
        %5335 = vmatpush1.msra.mxu0 0.0
        %5336 = vmatprep.subr.mxu0 0.0
        %5337 = vmatpush1.msra.mxu0 0.0
        %5338 = vmatprep.subr.mxu0 0.0
        %5339 = vmatpush1.msra.mxu0 0.0
        %5340 = vmatprep.subr.mxu0 0.0
        %5341 = vmatpush1.msra.mxu0 0.0
        %5342 = vmatprep.subr.mxu0 0.0
        %5343 = vmatpush1.msra.mxu0 0.0
        %5344 = vmatprep.subr.mxu0 0.0
        %5345 = vmatpush1.msra.mxu0 0.0
        %5346 = vmatprep.subr.mxu0 0.0
        %5347 = vmatpush1.msra.mxu0 0.0
        %5348 = vmatprep.subr.mxu0 0.0
        %5349 = vmatpush1.msra.mxu0 0.0
        %5350 = vmatprep.subr.mxu0 0.0
        %5351 = vmatpush1.msra.mxu0 0.0
        %5352 = vmatprep.subr.mxu0 0.0
        %5353 = vmatpush1.msra.mxu0 0.0
        %5354 = vmatprep.subr.mxu0 0.0
        %5355 = vmatpush1.msra.mxu0 0.0
        %5356 = vmatprep.subr.mxu0 0.0
        %5357 = vmatpush1.msra.mxu0 0.0
        %5358 = vmatprep.subr.mxu0 0.0
        %5359 = vmatpush1.msra.mxu0 0.0
        %5360 = vmatprep.subr.mxu0 0.0
        %v5361 = vand.u32 %v5168, 4294901760
        %v5362 = vsub.f32 %v5168, %v5361
        %5363 = vmatpush1.msra.mxu0 %v5362
        %5364 = vmatprep.subr.mxu0 0.0
        %v5365 = vand.u32 %v5150, 4294901760
        %v5366 = vsub.f32 %v5150, %v5365
        %5367 = vmatpush1.msra.mxu0 %v5366
        %5368 = vmatprep.subr.mxu0 0.0
        %v5369 = vand.u32 %v5149, 4294901760
        %v5370 = vsub.f32 %v5149, %v5369
        %5371 = vmatpush1.msra.mxu0 %v5370
        %5372 = vmatprep.subr.mxu0 0.0
        %5373 = vmatpush2.msra.mxu0 0.0
        %5374 = vmatprep.subr.mxu0 0.0
        %5375 = vmatpush2.msra.mxu0 0.0
        %5376 = vmatprep.subr.mxu0 0.0
        %5377 = vmatpush2.msra.mxu0 0.0
        %5378 = vmatprep.subr.mxu0 0.0
        %5379 = vmatpush2.msra.mxu0 0.0
        %5380 = vmatprep.subr.mxu0 0.0
        %5381 = vmatpush2.msra.mxu0 0.0
        %5382 = vmatprep.subr.mxu0 0.0
        %5383 = vmatpush2.msra.mxu0 0.0
        %5384 = vmatprep.subr.mxu0 0.0
        %5385 = vmatpush2.msra.mxu0 0.0
        %5386 = vmatprep.subr.mxu0 0.0
        %5387 = vmatpush2.msra.mxu0 0.0
        %5388 = vmatprep.subr.mxu0 0.0
        %5389 = vmatpush2.msra.mxu0 0.0
        %5390 = vmatprep.subr.mxu0 0.0
        %5391 = vmatpush2.msra.mxu0 0.0
        %5392 = vmatprep.subr.mxu0 0.0
        %5393 = vmatpush2.msra.mxu0 0.0
        %5394 = vmatprep.subr.mxu0 0.0
        %5395 = vmatpush2.msra.mxu0 0.0
        %5396 = vmatprep.subr.mxu0 0.0
        %5397 = vmatpush2.msra.mxu0 0.0
        %5398 = vmatprep.subr.mxu0 0.0
        %5399 = vmatpush2.msra.mxu0 0.0
        %5400 = vmatprep.subr.mxu0 0.0
        %5401 = vmatpush2.msra.mxu0 0.0
        %5402 = vmatprep.subr.mxu0 0.0
        %5403 = vmatpush2.msra.mxu0 0.0
        %5404 = vmatprep.mubr.f32.mxu0 0.0
        %v5405 = vand.u32 %v5165, 4294901760
        %v5406 = vsub.f32 %v5165, %v5405
        %5407 = vmatmul.mubr.f32.gmra.mxu0 %v5406
        %v5408 = vpop.f32.mrf.mxu0
        %v5409 = vadd.f32 %v5331, %v5408
        %v5410 = vpop.f32.mrf.mxu0
        %5411 = vdwg.mxu0
        %5412 = vmatprep.subr.mxu0 0.0
        %5413 = vmatpush1.msra.mxu0 0.0
        %5414 = vmatprep.subr.mxu0 0.0
        %5415 = vmatpush1.msra.mxu0 0.0
        %5416 = vmatprep.subr.mxu0 0.0
        %5417 = vmatpush1.msra.mxu0 0.0
        %5418 = vmatprep.subr.mxu0 0.0
        %5419 = vmatpush1.msra.mxu0 0.0
        %5420 = vmatprep.subr.mxu0 0.0
        %5421 = vmatpush1.msra.mxu0 0.0
        %5422 = vmatprep.subr.mxu0 0.0
        %5423 = vmatpush1.msra.mxu0 0.0
        %5424 = vmatprep.subr.mxu0 0.0
        %5425 = vmatpush1.msra.mxu0 0.0
        %5426 = vmatprep.subr.mxu0 0.0
        %5427 = vmatpush1.msra.mxu0 0.0
        %5428 = vmatprep.subr.mxu0 0.0
        %5429 = vmatpush1.msra.mxu0 0.0
        %5430 = vmatprep.subr.mxu0 0.0
        %5431 = vmatpush1.msra.mxu0 0.0
        %5432 = vmatprep.subr.mxu0 0.0
        %5433 = vmatpush1.msra.mxu0 0.0
        %5434 = vmatprep.subr.mxu0 0.0
        %5435 = vmatpush1.msra.mxu0 0.0
        %5436 = vmatprep.subr.mxu0 0.0
        %5437 = vmatpush1.msra.mxu0 0.0
        %5438 = vmatprep.subr.mxu0 0.0
        %v5439 = vand.u32 %v5168, 4294901760
        %5440 = vmatpush1.msra.mxu0 %v5439
        %5441 = vmatprep.subr.mxu0 0.0
        %v5442 = vand.u32 %v5150, 4294901760
        %5443 = vmatpush1.msra.mxu0 %v5442
        %5444 = vmatprep.subr.mxu0 0.0
        %v5445 = vand.u32 %v5149, 4294901760
        %5446 = vmatpush1.msra.mxu0 %v5445
        %5447 = vmatprep.subr.mxu0 0.0
        %5448 = vmatpush2.msra.mxu0 0.0
        %5449 = vmatprep.subr.mxu0 0.0
        %5450 = vmatpush2.msra.mxu0 0.0
        %5451 = vmatprep.subr.mxu0 0.0
        %5452 = vmatpush2.msra.mxu0 0.0
        %5453 = vmatprep.subr.mxu0 0.0
        %5454 = vmatpush2.msra.mxu0 0.0
        %5455 = vmatprep.subr.mxu0 0.0
        %5456 = vmatpush2.msra.mxu0 0.0
        %5457 = vmatprep.subr.mxu0 0.0
        %5458 = vmatpush2.msra.mxu0 0.0
        %5459 = vmatprep.subr.mxu0 0.0
        %5460 = vmatpush2.msra.mxu0 0.0
        %5461 = vmatprep.subr.mxu0 0.0
        %5462 = vmatpush2.msra.mxu0 0.0
        %5463 = vmatprep.subr.mxu0 0.0
        %5464 = vmatpush2.msra.mxu0 0.0
        %5465 = vmatprep.subr.mxu0 0.0
        %5466 = vmatpush2.msra.mxu0 0.0
        %5467 = vmatprep.subr.mxu0 0.0
        %5468 = vmatpush2.msra.mxu0 0.0
        %5469 = vmatprep.subr.mxu0 0.0
        %5470 = vmatpush2.msra.mxu0 0.0
        %5471 = vmatprep.subr.mxu0 0.0
        %5472 = vmatpush2.msra.mxu0 0.0
        %5473 = vmatprep.subr.mxu0 0.0
        %5474 = vmatpush2.msra.mxu0 0.0
        %5475 = vmatprep.subr.mxu0 0.0
        %5476 = vmatpush2.msra.mxu0 0.0
        %5477 = vmatprep.subr.mxu0 0.0
        %5478 = vmatpush2.msra.mxu0 0.0
        %5479 = vmatprep.mubr.f32.mxu0 0.0
        %v5480 = vand.u32 %v5165, 4294901760
        %v5481 = vsub.f32 %v5165, %v5480
        %v5482 = vand.u32 %v5481, 4294901760
        %5483 = vmatmul.mubr.f32.gmra.mxu0 %v5482
        %v5484 = vpop.f32.mrf.mxu0
        %v5485 = vadd.f32 %v5409, %v5484
        %v5486 = vpop.f32.mrf.mxu0
        %5487 = vdwg.mxu0
        %5488 = vmatprep.subr.mxu0 0.0
        %5489 = vmatpush1.msra.mxu0 0.0
        %5490 = vmatprep.subr.mxu0 0.0
        %5491 = vmatpush1.msra.mxu0 0.0
        %5492 = vmatprep.subr.mxu0 0.0
        %5493 = vmatpush1.msra.mxu0 0.0
        %5494 = vmatprep.subr.mxu0 0.0
        %5495 = vmatpush1.msra.mxu0 0.0
        %5496 = vmatprep.subr.mxu0 0.0
        %5497 = vmatpush1.msra.mxu0 0.0
        %5498 = vmatprep.subr.mxu0 0.0
        %5499 = vmatpush1.msra.mxu0 0.0
        %5500 = vmatprep.subr.mxu0 0.0
        %5501 = vmatpush1.msra.mxu0 0.0
        %5502 = vmatprep.subr.mxu0 0.0
        %5503 = vmatpush1.msra.mxu0 0.0
        %5504 = vmatprep.subr.mxu0 0.0
        %5505 = vmatpush1.msra.mxu0 0.0
        %5506 = vmatprep.subr.mxu0 0.0
        %5507 = vmatpush1.msra.mxu0 0.0
        %5508 = vmatprep.subr.mxu0 0.0
        %5509 = vmatpush1.msra.mxu0 0.0
        %5510 = vmatprep.subr.mxu0 0.0
        %5511 = vmatpush1.msra.mxu0 0.0
        %5512 = vmatprep.subr.mxu0 0.0
        %5513 = vmatpush1.msra.mxu0 0.0
        %5514 = vmatprep.subr.mxu0 0.0
        %v5515 = vand.u32 %v5168, 4294901760
        %v5516 = vsub.f32 %v5168, %v5515
        %v5517 = vand.u32 %v5516, 4294901760
        %5518 = vmatpush1.msra.mxu0 %v5517
        %5519 = vmatprep.subr.mxu0 0.0
        %v5520 = vand.u32 %v5150, 4294901760
        %v5521 = vsub.f32 %v5150, %v5520
        %v5522 = vand.u32 %v5521, 4294901760
        %5523 = vmatpush1.msra.mxu0 %v5522
        %5524 = vmatprep.subr.mxu0 0.0
        %v5525 = vand.u32 %v5149, 4294901760
        %v5526 = vsub.f32 %v5149, %v5525
        %v5527 = vand.u32 %v5526, 4294901760
        %5528 = vmatpush1.msra.mxu0 %v5527
        %5529 = vmatprep.subr.mxu0 0.0
        %5530 = vmatpush2.msra.mxu0 0.0
        %5531 = vmatprep.subr.mxu0 0.0
        %5532 = vmatpush2.msra.mxu0 0.0
        %5533 = vmatprep.subr.mxu0 0.0
        %5534 = vmatpush2.msra.mxu0 0.0
        %5535 = vmatprep.subr.mxu0 0.0
        %5536 = vmatpush2.msra.mxu0 0.0
        %5537 = vmatprep.subr.mxu0 0.0
        %5538 = vmatpush2.msra.mxu0 0.0
        %5539 = vmatprep.subr.mxu0 0.0
        %5540 = vmatpush2.msra.mxu0 0.0
        %5541 = vmatprep.subr.mxu0 0.0
        %5542 = vmatpush2.msra.mxu0 0.0
        %5543 = vmatprep.subr.mxu0 0.0
        %5544 = vmatpush2.msra.mxu0 0.0
        %5545 = vmatprep.subr.mxu0 0.0
        %5546 = vmatpush2.msra.mxu0 0.0
        %5547 = vmatprep.subr.mxu0 0.0
        %5548 = vmatpush2.msra.mxu0 0.0
        %5549 = vmatprep.subr.mxu0 0.0
        %5550 = vmatpush2.msra.mxu0 0.0
        %5551 = vmatprep.subr.mxu0 0.0
        %5552 = vmatpush2.msra.mxu0 0.0
        %5553 = vmatprep.subr.mxu0 0.0
        %5554 = vmatpush2.msra.mxu0 0.0
        %5555 = vmatprep.subr.mxu0 0.0
        %5556 = vmatpush2.msra.mxu0 0.0
        %5557 = vmatprep.subr.mxu0 0.0
        %5558 = vmatpush2.msra.mxu0 0.0
        %5559 = vmatprep.subr.mxu0 0.0
        %5560 = vmatpush2.msra.mxu0 0.0
        %5561 = vmatprep.mubr.f32.mxu0 0.0
        %v5562 = vand.u32 %v5165, 4294901760
        %5563 = vmatmul.mubr.f32.gmra.mxu0 %v5562
        %v5564 = vpop.f32.mrf.mxu0
        %v5565 = vadd.f32 %v5485, %v5564
        %v5566 = vpop.f32.mrf.mxu0
        %5567 = vdwg.mxu0
        %5568 = vmatprep.subr.mxu0 0.0
        %5569 = vmatpush1.msra.mxu0 0.0
        %5570 = vmatprep.subr.mxu0 0.0
        %5571 = vmatpush1.msra.mxu0 0.0
        %5572 = vmatprep.subr.mxu0 0.0
        %5573 = vmatpush1.msra.mxu0 0.0
        %5574 = vmatprep.subr.mxu0 0.0
        %5575 = vmatpush1.msra.mxu0 0.0
        %5576 = vmatprep.subr.mxu0 0.0
        %5577 = vmatpush1.msra.mxu0 0.0
        %5578 = vmatprep.subr.mxu0 0.0
        %5579 = vmatpush1.msra.mxu0 0.0
        %5580 = vmatprep.subr.mxu0 0.0
        %5581 = vmatpush1.msra.mxu0 0.0
        %5582 = vmatprep.subr.mxu0 0.0
        %5583 = vmatpush1.msra.mxu0 0.0
        %5584 = vmatprep.subr.mxu0 0.0
        %5585 = vmatpush1.msra.mxu0 0.0
        %5586 = vmatprep.subr.mxu0 0.0
        %5587 = vmatpush1.msra.mxu0 0.0
        %5588 = vmatprep.subr.mxu0 0.0
        %5589 = vmatpush1.msra.mxu0 0.0
        %5590 = vmatprep.subr.mxu0 0.0
        %5591 = vmatpush1.msra.mxu0 0.0
        %5592 = vmatprep.subr.mxu0 0.0
        %5593 = vmatpush1.msra.mxu0 0.0
        %5594 = vmatprep.subr.mxu0 0.0
        %v5595 = vand.u32 %v5168, 4294901760
        %5596 = vmatpush1.msra.mxu0 %v5595
        %5597 = vmatprep.subr.mxu0 0.0
        %v5598 = vand.u32 %v5150, 4294901760
        %5599 = vmatpush1.msra.mxu0 %v5598
        %5600 = vmatprep.subr.mxu0 0.0
        %v5601 = vand.u32 %v5149, 4294901760
        %5602 = vmatpush1.msra.mxu0 %v5601
        %5603 = vmatprep.subr.mxu0 0.0
        %5604 = vmatpush2.msra.mxu0 0.0
        %5605 = vmatprep.subr.mxu0 0.0
        %5606 = vmatpush2.msra.mxu0 0.0
        %5607 = vmatprep.subr.mxu0 0.0
        %5608 = vmatpush2.msra.mxu0 0.0
        %5609 = vmatprep.subr.mxu0 0.0
        %5610 = vmatpush2.msra.mxu0 0.0
        %5611 = vmatprep.subr.mxu0 0.0
        %5612 = vmatpush2.msra.mxu0 0.0
        %5613 = vmatprep.subr.mxu0 0.0
        %5614 = vmatpush2.msra.mxu0 0.0
        %5615 = vmatprep.subr.mxu0 0.0
        %5616 = vmatpush2.msra.mxu0 0.0
        %5617 = vmatprep.subr.mxu0 0.0
        %5618 = vmatpush2.msra.mxu0 0.0
        %5619 = vmatprep.subr.mxu0 0.0
        %5620 = vmatpush2.msra.mxu0 0.0
        %5621 = vmatprep.subr.mxu0 0.0
        %5622 = vmatpush2.msra.mxu0 0.0
        %5623 = vmatprep.subr.mxu0 0.0
        %5624 = vmatpush2.msra.mxu0 0.0
        %5625 = vmatprep.subr.mxu0 0.0
        %5626 = vmatpush2.msra.mxu0 0.0
        %5627 = vmatprep.subr.mxu0 0.0
        %5628 = vmatpush2.msra.mxu0 0.0
        %5629 = vmatprep.subr.mxu0 0.0
        %5630 = vmatpush2.msra.mxu0 0.0
        %5631 = vmatprep.subr.mxu0 0.0
        %5632 = vmatpush2.msra.mxu0 0.0
        %5633 = vmatprep.subr.mxu0 0.0
        %5634 = vmatpush2.msra.mxu0 0.0
        %5635 = vmatprep.mubr.f32.mxu0 0.0
        %v5636 = vand.u32 %v5165, 4294901760
        %5637 = vmatmul.mubr.f32.gmra.mxu0 %v5636
        %v5638 = vpop.f32.mrf.mxu0
        %v5639 = vadd.f32 %v5565, %v5638
        %v5640 = vpop.f32.mrf.mxu0
        %5641 = vdwg.mxu0
        %5642 = vst [vmem:[%s272] sm:$0x1] %v5639
        %s5643 = sand.u32 %s185, 1
        %s5644 = scalar_lea.sflag [#allocation10], %s5643
        %s5645 = sand.u32 %s185, 1
        %s5646 = scalar_lea.vmem [#allocation9], %s5645
        // Predicated region
        $region49: #{tpu_custom_call.1} parent=47 // pred_check
          %p5647 = pneg %p195
        $region50: #{tpu_custom_call.1} parent=47 // pred_check_branch
          %5649 = sbr.rel (%p5647) target = $region52
        $region51: #{tpu_custom_call.1} parent=47 // pred_region
          %s5651 = ssub.s32 16, 16
          %5652 = vsyncadd %s5644, %s5651
          %s5653 = smul.addr %s25, 16
          %s5654 = scalar_lea.hbm %s8, %s5653
          %s5656 = sshll.u32 %s5646, 4
          %s5657 = int_to_ptr.vmem [resolvable:$true] %s5656
          %5659 = dma.vmem_to_hbm [thread:$0]  %s5657, 16, %s5654, %s5644
        $region52: #{tpu_custom_call.1} parent=47 // pred_fallthru
          _
      $region48: #{tpu_custom_call.1} parent=5 // pred_fallthru
        _
      %p5660 = scmp.le.s32.totalorder 2, %s20
      // Predicated region
      $region53: #{tpu_custom_call.1} parent=5 // pred_check
        %p5661 = pneg %p5660
      $region54: #{tpu_custom_call.1} parent=5 // pred_check_branch
        %5663 = sbr.rel (%p5661) target = $region56
      $region55: #{tpu_custom_call.1} parent=5 // pred_region
        %s5664 = ssub.s32 %s20, 2
        // Predicated region
        $region57: #{tpu_custom_call.1} parent=55 // pred_check
          %p5665 = pneg %p201
        $region58: #{tpu_custom_call.1} parent=55 // pred_check_branch
          %5667 = sbr.rel (%p5665) target = $region60
        $region59: #{tpu_custom_call.1} parent=55 // pred_region
          %s5668 = sand.u32 %s186, 1
          %s5669 = scalar_lea.sflag [#allocation10], %s5668
          %s5670 = sand.u32 %s186, 1
          %s5671 = scalar_lea.vmem [#allocation9], %s5670
          %5672 = dma.done %s5669, 16
        $region60: #{tpu_custom_call.1} parent=55 // pred_fallthru
          _
      $region56: #{tpu_custom_call.1} parent=5 // pred_fallthru
        _
    $region6: #{tpu_custom_call.1} parent=1 // loop_footer
      %s24 = sadd.s32 1, %s20
    $region7: #{tpu_custom_call.1} parent=1 // loop_footer_branch
      %19 = sbr.rel target = $region3
    $region8: #{tpu_custom_call.1} parent=1 // loop_exit
      _
    %5673 = vsyncpa [#allocation10], 1
    %s5674 = scalar_lea.sflag [#allocation10], 1
    %5675 = vsyncpa %s5674, 1

</llo_original>
